<compile_context>
chip_gen: v5e
topology: v5e:2x2
jax: 0.10.0
libtpu: 0.0.40
codegen_flags: <defaults>
</compile_context>

<pallas_src>
import functools

import jax
import jax.numpy as jnp
from jax.experimental import pallas as pl
from jax.experimental.pallas import tpu as pltpu


_EXP_CLAMP = 60.0     # exp(60) is still finite in f32; guards exp overflow
_ROWSUM_EPS = 1e-16   # guards 0/0 for isolated nodes (no edges / no self loop)


def _pick_tile(n, cap, align):
    """Largest multiple of `align` that divides n and is <= cap; else full n."""
    t = (min(cap, n) // align) * align
    while t >= align:
        if n % t == 0:
            return t
        t -= align
    return n


# ---------------------------------------------------------------------------
# Kernel 1: fused projection + per-node attention scores (all heads at once)
# ---------------------------------------------------------------------------
def _project_scores_kernel(x_ref, w_ref, a1_ref, a2_ref, h_ref, f1_ref, f2_ref,
                           *, nheads, f_out):
    h = jnp.dot(x_ref[...], w_ref[...], preferred_element_type=jnp.float32)
    h_ref[...] = h
    for hd in range(nheads):                       # static unroll (nheads small)
        hh = h[:, hd * f_out:(hd + 1) * f_out]                      # (TI, Fout)
        f1_ref[:, hd:hd + 1] = jnp.sum(hh * a1_ref[hd:hd + 1, :], axis=1, keepdims=True)
        f2_ref[:, hd:hd + 1] = jnp.sum(hh * a2_ref[hd:hd + 1, :], axis=1, keepdims=True)


def project_and_scores(x, w_all, a1, a2, *, nheads, f_out, row_tile=256):
    n, f_in = x.shape
    hdim = nheads * f_out
    ti = _pick_tile(n, row_tile, 8)
    kernel = functools.partial(_project_scores_kernel, nheads=nheads, f_out=f_out)
    return pl.pallas_call(
        kernel,
        out_shape=(
            jax.ShapeDtypeStruct((n, hdim), jnp.float32),    # h_all
            jax.ShapeDtypeStruct((n, nheads), jnp.float32),  # f1
            jax.ShapeDtypeStruct((n, nheads), jnp.float32),  # f2
        ),
        grid=(n // ti,),
        in_specs=[
            pl.BlockSpec((ti, f_in), lambda i: (i, 0)),
            pl.BlockSpec((f_in, hdim), lambda i: (0, 0)),
            pl.BlockSpec((nheads, f_out), lambda i: (0, 0)),
            pl.BlockSpec((nheads, f_out), lambda i: (0, 0)),
        ],
        out_specs=(
            pl.BlockSpec((ti, hdim), lambda i: (i, 0)),
            pl.BlockSpec((ti, nheads), lambda i: (i, 0)),
            pl.BlockSpec((ti, nheads), lambda i: (i, 0)),
        ),
        compiler_params=pltpu.CompilerParams(dimension_semantics=("parallel",)),
    )(x, w_all, a1, a2)


# ---------------------------------------------------------------------------
# Kernel 2: tiled multi-head masked-softmax aggregation over the N x N graph
# ---------------------------------------------------------------------------
def _attention_kernel(f1_ref, f2t_ref, adj_ref, h_ref, out_ref, num_acc, den_acc,
                      *, nheads, f_out, alpha, concat, log_softmax):
    j = pl.program_id(1)

    @pl.when(j == 0)
    def _init():
        num_acc[...] = jnp.zeros_like(num_acc)
        den_acc[...] = jnp.zeros_like(den_acc)

    # adj tile is loaded once (int8 in HBM -> 4x less DMA) and reused per head.
    mask = adj_ref[...].astype(jnp.float32) > 0.0

    for hd in range(nheads):                       # static unroll over heads
        s = f1_ref[:, hd:hd + 1] + f2t_ref[hd:hd + 1, :]            # (TI, TJ)
        neg = jnp.where(s > 0, -s, (-alpha) * s)                    # -LeakyReLU(s)
        # Clamp: only deviates from the reference where it would overflow to inf.
        e = jnp.where(mask, jnp.exp(jnp.minimum(neg, _EXP_CLAMP)), 0.0)
        den_acc[:, hd:hd + 1] += jnp.sum(e, axis=1, keepdims=True)
        num_acc[:, hd * f_out:(hd + 1) * f_out] += jnp.dot(
            e, h_ref[:, hd * f_out:(hd + 1) * f_out],
            preferred_element_type=jnp.float32)

    @pl.when(j == pl.num_programs(1) - 1)
    def _finalize():
        if log_softmax:
            # Output layer (nheads == 1): normalize, then fused ELU + log_softmax.
            inv = pl.reciprocal(den_acc[...] + _ROWSUM_EPS, approx=True)
            hp = num_acc[...] * inv
            hp = jnp.where(hp > 0, hp, jnp.exp(hp) - 1.0)           # ELU
            m = jnp.max(hp, axis=1, keepdims=True)
            z = hp - m
            lse = jnp.log(jnp.sum(jnp.exp(z), axis=1, keepdims=True))
            out_ref[...] = z - lse
        else:
            for hd in range(nheads):
                inv = pl.reciprocal(den_acc[:, hd:hd + 1] + _ROWSUM_EPS, approx=True)
                hp = num_acc[:, hd * f_out:(hd + 1) * f_out] * inv
                if concat:
                    hp = jnp.where(hp > 0, hp, jnp.exp(hp) - 1.0)   # ELU per head
                out_ref[:, hd * f_out:(hd + 1) * f_out] = hp


def sp_gat_attention(f1, f2t, adj_i8, h_all, *, nheads, f_out, alpha, concat,
                     log_softmax=False, row_tile=256, col_tile=512):
    n = adj_i8.shape[0]
    hdim = nheads * f_out
    ti = _pick_tile(n, row_tile, 32)    # 32: friendly to int8 sublane packing
    tj = _pick_tile(n, col_tile, 128)   # lane-aligned adj / f2^T tiles
    grid = (n // ti, n // tj)

    ce = pl.CostEstimate(
        flops=2 * n * n * hdim + 8 * n * n * nheads,
        transcendentals=n * n * nheads,
        bytes_accessed=(n * n                          # adj (int8)
                        + (n // ti) * n * hdim * 4     # h re-streamed per row block
                        + n * (2 * hdim + 4 * nheads) * 4),
    )

    kernel = functools.partial(
        _attention_kernel, nheads=nheads, f_out=f_out, alpha=alpha,
        concat=concat, log_softmax=log_softmax)

    return pl.pallas_call(
        kernel,
        out_shape=jax.ShapeDtypeStruct((n, hdim), jnp.float32),
        grid=grid,
        in_specs=[
            pl.BlockSpec((ti, nheads), lambda i, j: (i, 0)),   # f1 rows
            pl.BlockSpec((nheads, tj), lambda i, j: (0, j)),   # f2^T cols
            pl.BlockSpec((ti, tj), lambda i, j: (i, j)),       # adj tile (int8)
            pl.BlockSpec((tj, hdim), lambda i, j: (j, 0)),     # h_j tile (all heads)
        ],
        out_specs=pl.BlockSpec((ti, hdim), lambda i, j: (i, 0)),
        scratch_shapes=[
            pltpu.VMEM((ti, hdim), jnp.float32),     # numerator accumulator
            pltpu.VMEM((ti, nheads), jnp.float32),   # rowsum accumulator
        ],
        compiler_params=pltpu.CompilerParams(
            dimension_semantics=("parallel", "arbitrary"),
            vmem_limit_bytes=32 * 1024 * 1024,       # safe on v5e/v6e/v7x
        ),
        cost_estimate=ce,
    )(f1, f2t, adj_i8, h_all)


# ---------------------------------------------------------------------------
# Model wrapper
# ---------------------------------------------------------------------------
def init_spgat_params(key, nfeat, nhid, nclass, nheads):
    """Deterministic xavier-normal-style init (synthetic, no checkpoint)."""
    def xavier(k, shape):
        fan_in, fan_out = shape[0], shape[1]
        std = 1.414 * (2.0 / (fan_in + fan_out)) ** 0.5
        return std * jax.random.normal(k, shape, jnp.float32)

    heads = []
    for _ in range(nheads):
        key, kw, ka = jax.random.split(key, 3)
        heads.append((xavier(kw, (nfeat, nhid)), xavier(ka, (1, 2 * nhid))))
    key, kw, ka = jax.random.split(key, 3)
    out = (xavier(kw, (nhid * nheads, nclass)), xavier(ka, (1, 2 * nclass)))
    return {"heads": heads, "out": out}


def spgat_forward(params, x, adj_i8, *, alpha, row_tile=256, col_tile=512):
    """SpGAT forward, eval mode.  adj_i8: (N, N) int8 0/1 adjacency mask."""
    nheads = len(params["heads"])
    nhid = params["heads"][0][0].shape[1]
    w_out, a_out = params["out"]
    nclass = w_out.shape[1]

    # --- all hidden heads fused into one pass over adj ----------------------
    # dropout(x) -> identity (eval mode)
    w_all = jnp.concatenate([w for (w, _) in params["heads"]], axis=1)          # (Fin, H*nhid)
    a1 = jnp.concatenate([a[:, :nhid] for (_, a) in params["heads"]], axis=0)   # (H, nhid)
    a2 = jnp.concatenate([a[:, nhid:] for (_, a) in params["heads"]], axis=0)   # (H, nhid)
    h_all, f1, f2 = project_and_scores(x, w_all, a1, a2,
                                       nheads=nheads, f_out=nhid, row_tile=row_tile)
    hidden = sp_gat_attention(f1, f2.T, adj_i8, h_all, nheads=nheads, f_out=nhid,
                              alpha=alpha, concat=True,
                              row_tile=row_tile, col_tile=col_tile)             # (N, H*nhid)

    # --- output layer (+ fused ELU / log_softmax in the finalize phase) -----
    # dropout(hidden) -> identity (eval mode)
    h2, g1, g2 = project_and_scores(hidden, w_out,
                                    a_out[:, :nclass], a_out[:, nclass:],
                                    nheads=1, f_out=nclass, row_tile=row_tile)
    return sp_gat_attention(g1, g2.T, adj_i8, h2, nheads=1, f_out=nclass,
                            alpha=alpha, concat=False, log_softmax=True,
                            row_tile=row_tile, col_tile=col_tile)               # (N, nclass)


def _spgat_reference(params, x, adj, *, alpha):
    """Pure-JAX reference (same math, no Pallas) for a sanity check."""
    adj_f = adj.astype(jnp.float32)

    def layer(xx, w, a, concat):
        f_out = w.shape[1]
        h = xx @ w
        f1 = h @ a[0, :f_out]
        f2 = h @ a[0, f_out:]
        s = f1[:, None] + f2[None, :]
        lrelu = jnp.where(s > 0, s, alpha * s)
        e = jnp.where(adj_f > 0, jnp.exp(-lrelu), 0.0)
        hp = (e @ h) / jnp.sum(e, axis=1, keepdims=True)
        return jax.nn.elu(hp) if concat else hp

    hcat = jnp.concatenate([layer(x, w, a, True) for (w, a) in params["heads"]], axis=1)
    w_out, a_out = params["out"]
    logits = jax.nn.elu(layer(hcat, w_out, a_out, False))
    return jax.nn.log_softmax(logits, axis=1)


if __name__ == "__main__":
    key = jax.random.PRNGKey(0)
    N, nfeat, nhid, nclass, nheads = 256, 64, 16, 8, 2
    alpha = 0.2

    k_x, k_adj, k_p = jax.random.split(key, 3)
    x = jax.random.normal(k_x, (N, nfeat), jnp.float32)
    adj = (jax.random.uniform(k_adj, (N, N)) < 0.05).astype(jnp.int8)
    adj = jnp.maximum(adj, jnp.eye(N, dtype=jnp.int8))   # self-loops: no empty rows

    params = init_spgat_params(k_p, nfeat, nhid, nclass, nheads)

    # Small tiles so this 256-node demo exercises a real 2x2 attention grid.
    # For production graphs use the defaults (row_tile=256, col_tile=512):
    # <= ~1 MiB per double-buffered tile, which fits v5e/v6e (128 MiB VMEM) and
    # v7x (64 MiB) alike; sweep upward on v5e/v6e if DMA is exposed.
    fwd = jax.jit(functools.partial(spgat_forward, alpha=alpha,
                                    row_tile=128, col_tile=128))
    out = fwd(params, x, adj)
    jax.block_until_ready(out)

    assert out.shape == (N, nclass)
    assert bool(jnp.all(jnp.isfinite(out)))
    # rows of log_softmax should exp-sum to 1
    assert bool(jnp.allclose(jnp.sum(jnp.exp(out), axis=1), 1.0, atol=1e-4))
    # compare class probabilities against the pure-JAX reference
    ref = _spgat_reference(params, x, adj, alpha=alpha)
    assert bool(jnp.allclose(jnp.exp(out), jnp.exp(ref), atol=2e-2)), (
        float(jnp.max(jnp.abs(jnp.exp(out) - jnp.exp(ref)))))
    print("KERNEL_OK")
</pallas_src>

<mosaic_0001>
module attributes {stable_mosaic.version = 11 : i64} {
  func.func @_project_scores_kernel(%arg0: i32, %arg1: memref<128x64xf32, #tpu.memory_space<vmem>>, %arg2: memref<64x32xf32, #tpu.memory_space<vmem>>, %arg3: memref<2x16xf32, #tpu.memory_space<vmem>>, %arg4: memref<2x16xf32, #tpu.memory_space<vmem>>, %arg5: memref<128x32xf32, #tpu.memory_space<vmem>>, %arg6: memref<128x2xf32, #tpu.memory_space<vmem>>, %arg7: memref<128x2xf32, #tpu.memory_space<vmem>>) attributes {dimension_semantics = [#tpu.dimension_semantics<parallel>], iteration_bounds = array<i64: 2>, scalar_prefetch = 0 : i64, scratch_operands = 0 : i64, tpu.core_type = #tpu.core_type<tc>, window_params = [{transform_indices = @transform_0, window_bounds = array<i64: 128, 64>}, {pipeline_mode = #tpu.pipeline_mode<synchronous>, transform_indices = @transform_1, window_bounds = array<i64: 64, 32>}, {pipeline_mode = #tpu.pipeline_mode<synchronous>, transform_indices = @transform_2, window_bounds = array<i64: 2, 16>}, {pipeline_mode = #tpu.pipeline_mode<synchronous>, transform_indices = @transform_3, window_bounds = array<i64: 2, 16>}, {transform_indices = @transform_4, window_bounds = array<i64: 128, 32>}, {transform_indices = @transform_5, window_bounds = array<i64: 128, 2>}, {transform_indices = @transform_6, window_bounds = array<i64: 128, 2>}]} {
    %c0 = arith.constant 0 : index
    %c0_0 = arith.constant 0 : index
    %0 = vector.load %arg1[%c0, %c0_0] : memref<128x64xf32, #tpu.memory_space<vmem>>, vector<128x64xf32>
    %c0_1 = arith.constant 0 : index
    %c0_2 = arith.constant 0 : index
    %1 = vector.load %arg2[%c0_1, %c0_2] : memref<64x32xf32, #tpu.memory_space<vmem>>, vector<64x32xf32>
    %cst = arith.constant dense<0.000000e+00> : vector<128x32xf32>
    %2 = tpu.matmul %0, %1, %cst {dimension_numbers = #tpu.dot_dimension_numbers<[1], [0], [0], [1], [0, 0, 1, 1], [], []>} : vector<128x64xf32>, vector<64x32xf32>, vector<128x32xf32> -> vector<128x32xf32>
    %c0_3 = arith.constant 0 : index
    %c0_4 = arith.constant 0 : index
    %3 = vector.load %arg5[%c0_3, %c0_4] : memref<128x32xf32, #tpu.memory_space<vmem>>, vector<128x32xf32>
    tpu.vector_store %arg5[%c0_3, %c0_4], %2 {strides = array<i32>} : memref<128x32xf32, #tpu.memory_space<vmem>>, vector<128x32xf32>,
    %4 = vector.extract_strided_slice %2 {offsets = [0, 0], sizes = [128, 16], strides = [1, 1]} : vector<128x32xf32> to vector<128x16xf32>
    %c0_5 = arith.constant 0 : index
    %c0_6 = arith.constant 0 : index
    %5 = vector.load %arg3[%c0_5, %c0_6] : memref<2x16xf32, #tpu.memory_space<vmem>>, vector<1x16xf32>
    %6 = vector.broadcast %5 : vector<1x16xf32> to vector<128x16xf32>
    %7 = arith.mulf %4, %6 : vector<128x16xf32>
    %cst_7 = arith.constant dense<0.000000e+00> : vector<128xf32>
    %8 = vector.multi_reduction <add>, %7, %cst_7 [1] : vector<128x16xf32> to vector<128xf32>
    %9 = vector.shape_cast %8 : vector<128xf32> to vector<128x1xf32>
    %c0_8 = arith.constant 0 : index
    %c0_9 = arith.constant 0 : index
    %10 = vector.load %arg6[%c0_8, %c0_9] : memref<128x2xf32, #tpu.memory_space<vmem>>, vector<128x1xf32>
    tpu.vector_store %arg6[%c0_8, %c0_9], %9 {strides = array<i32>} : memref<128x2xf32, #tpu.memory_space<vmem>>, vector<128x1xf32>,
    %c0_10 = arith.constant 0 : index
    %c0_11 = arith.constant 0 : index
    %11 = vector.load %arg4[%c0_10, %c0_11] : memref<2x16xf32, #tpu.memory_space<vmem>>, vector<1x16xf32>
    %12 = vector.broadcast %11 : vector<1x16xf32> to vector<128x16xf32>
    %13 = arith.mulf %4, %12 : vector<128x16xf32>
    %cst_12 = arith.constant dense<0.000000e+00> : vector<128xf32>
    %14 = vector.multi_reduction <add>, %13, %cst_12 [1] : vector<128x16xf32> to vector<128xf32>
    %15 = vector.shape_cast %14 : vector<128xf32> to vector<128x1xf32>
    %c0_13 = arith.constant 0 : index
    %c0_14 = arith.constant 0 : index
    %16 = vector.load %arg7[%c0_13, %c0_14] : memref<128x2xf32, #tpu.memory_space<vmem>>, vector<128x1xf32>
    tpu.vector_store %arg7[%c0_13, %c0_14], %15 {strides = array<i32>} : memref<128x2xf32, #tpu.memory_space<vmem>>, vector<128x1xf32>,
    %17 = vector.extract_strided_slice %2 {offsets = [0, 16], sizes = [128, 16], strides = [1, 1]} : vector<128x32xf32> to vector<128x16xf32>
    %c1 = arith.constant 1 : index
    %c0_15 = arith.constant 0 : index
    %18 = vector.load %arg3[%c1, %c0_15] : memref<2x16xf32, #tpu.memory_space<vmem>>, vector<1x16xf32>
    %19 = vector.broadcast %18 : vector<1x16xf32> to vector<128x16xf32>
    %20 = arith.mulf %17, %19 : vector<128x16xf32>
    %cst_16 = arith.constant dense<0.000000e+00> : vector<128xf32>
    %21 = vector.multi_reduction <add>, %20, %cst_16 [1] : vector<128x16xf32> to vector<128xf32>
    %22 = vector.shape_cast %21 : vector<128xf32> to vector<128x1xf32>
    %c0_17 = arith.constant 0 : index
    %c1_18 = arith.constant 1 : index
    %23 = vector.load %arg6[%c0_17, %c1_18] : memref<128x2xf32, #tpu.memory_space<vmem>>, vector<128x1xf32>
    tpu.vector_store %arg6[%c0_17, %c1_18], %22 {strides = array<i32>} : memref<128x2xf32, #tpu.memory_space<vmem>>, vector<128x1xf32>,
    %c1_19 = arith.constant 1 : index
    %c0_20 = arith.constant 0 : index
    %24 = vector.load %arg4[%c1_19, %c0_20] : memref<2x16xf32, #tpu.memory_space<vmem>>, vector<1x16xf32>
    %25 = vector.broadcast %24 : vector<1x16xf32> to vector<128x16xf32>
    %26 = arith.mulf %17, %25 : vector<128x16xf32>
    %cst_21 = arith.constant dense<0.000000e+00> : vector<128xf32>
    %27 = vector.multi_reduction <add>, %26, %cst_21 [1] : vector<128x16xf32> to vector<128xf32>
    %28 = vector.shape_cast %27 : vector<128xf32> to vector<128x1xf32>
    %c0_22 = arith.constant 0 : index
    %c1_23 = arith.constant 1 : index
    %29 = vector.load %arg7[%c0_22, %c1_23] : memref<128x2xf32, #tpu.memory_space<vmem>>, vector<128x1xf32>
    tpu.vector_store %arg7[%c0_22, %c1_23], %28 {strides = array<i32>} : memref<128x2xf32, #tpu.memory_space<vmem>>, vector<128x1xf32>,
    return
  }
  func.func @transform_0(%arg0: i32) -> (i32, i32) {
    %c0_i32 = arith.constant 0 : i32
    %c0_i32_0 = arith.constant 0 : i32
    return %arg0, %c0_i32 : i32, i32
  }
  func.func @transform_1(%arg0: i32) -> (i32, i32) {
    %c0_i32 = arith.constant 0 : i32
    %c0_i32_0 = arith.constant 0 : i32
    %c0_i32_1 = arith.constant 0 : i32
    return %c0_i32, %c0_i32_0 : i32, i32
  }
  func.func @transform_2(%arg0: i32) -> (i32, i32) {
    %c0_i32 = arith.constant 0 : i32
    %c0_i32_0 = arith.constant 0 : i32
    %c0_i32_1 = arith.constant 0 : i32
    return %c0_i32, %c0_i32_0 : i32, i32
  }
  func.func @transform_3(%arg0: i32) -> (i32, i32) {
    %c0_i32 = arith.constant 0 : i32
    %c0_i32_0 = arith.constant 0 : i32
    %c0_i32_1 = arith.constant 0 : i32
    return %c0_i32, %c0_i32_0 : i32, i32
  }
  func.func @transform_4(%arg0: i32) -> (i32, i32) {
    %c0_i32 = arith.constant 0 : i32
    %c0_i32_0 = arith.constant 0 : i32
    return %arg0, %c0_i32 : i32, i32
  }
  func.func @transform_5(%arg0: i32) -> (i32, i32) {
    %c0_i32 = arith.constant 0 : i32
    %c0_i32_0 = arith.constant 0 : i32
    return %arg0, %c0_i32 : i32, i32
  }
  func.func @transform_6(%arg0: i32) -> (i32, i32) {
    %c0_i32 = arith.constant 0 : i32
    %c0_i32_0 = arith.constant 0 : i32
    return %arg0, %c0_i32 : i32, i32
  }
}

module attributes {stable_mosaic.version = 11 : i64} {
  func.func @_attention_kernel(%arg0: i32, %arg1: i32, %arg2: memref<128x2xf32, #tpu.memory_space<vmem>>, %arg3: memref<2x128xf32, #tpu.memory_space<vmem>>, %arg4: memref<128x128xi8, #tpu.memory_space<vmem>>, %arg5: memref<128x32xf32, #tpu.memory_space<vmem>>, %arg6: memref<128x32xf32, #tpu.memory_space<vmem>>, %arg7: memref<128x32xf32, #tpu.memory_space<vmem>>, %arg8: memref<128x2xf32, #tpu.memory_space<vmem>>) attributes {dimension_semantics = [#tpu.dimension_semantics<parallel>, #tpu.dimension_semantics<arbitrary>], iteration_bounds = array<i64: 2, 2>, scalar_prefetch = 0 : i64, scratch_operands = 2 : i64, tpu.core_type = #tpu.core_type<tc>, window_params = [{transform_indices = @transform_0, window_bounds = array<i64: 128, 2>}, {transform_indices = @transform_1, window_bounds = array<i64: 2, 128>}, {transform_indices = @transform_2, window_bounds = array<i64: 128, 128>}, {transform_indices = @transform_3, window_bounds = array<i64: 128, 32>}, {transform_indices = @transform_4, window_bounds = array<i64: 128, 32>}]} {
    %c0_i32 = arith.constant 0 : i32
    %0 = arith.cmpi eq, %arg1, %c0_i32 : i32
    %1 = arith.extui %0 : i1 to i32
    %c0_i32_0 = arith.constant 0 : i32
    %2 = arith.cmpi ne, %1, %c0_i32_0 : i32
    scf.if %2 {
      %cst_43 = arith.constant 0.000000e+00 : f32
      %64 = vector.broadcast %cst_43 : f32 to vector<128x32xf32>
      %c0_44 = arith.constant 0 : index
      %c0_45 = arith.constant 0 : index
      %65 = vector.load %arg7[%c0_44, %c0_45] : memref<128x32xf32, #tpu.memory_space<vmem>>, vector<128x32xf32>
      tpu.vector_store %arg7[%c0_44, %c0_45], %64 {strides = array<i32>} : memref<128x32xf32, #tpu.memory_space<vmem>>, vector<128x32xf32>,
      %cst_46 = arith.constant 0.000000e+00 : f32
      %66 = vector.broadcast %cst_46 : f32 to vector<128x2xf32>
      %c0_47 = arith.constant 0 : index
      %c0_48 = arith.constant 0 : index
      %67 = vector.load %arg8[%c0_47, %c0_48] : memref<128x2xf32, #tpu.memory_space<vmem>>, vector<128x2xf32>
      tpu.vector_store %arg8[%c0_47, %c0_48], %66 {strides = array<i32>} : memref<128x2xf32, #tpu.memory_space<vmem>>, vector<128x2xf32>,
    } else {
    }
    %c0 = arith.constant 0 : index
    %c0_1 = arith.constant 0 : index
    %3 = vector.load %arg4[%c0, %c0_1] : memref<128x128xi8, #tpu.memory_space<vmem>>, vector<128x128xi8>
    %4 = arith.sitofp %3 : vector<128x128xi8> to vector<128x128xf32>
    %cst = arith.constant 0.000000e+00 : f32
    %5 = vector.broadcast %cst : f32 to vector<128x128xf32>
    %6 = arith.cmpf ogt, %4, %5 : vector<128x128xf32>
    %c0_2 = arith.constant 0 : index
    %c0_3 = arith.constant 0 : index
    %7 = vector.load %arg2[%c0_2, %c0_3] : memref<128x2xf32, #tpu.memory_space<vmem>>, vector<128x1xf32>
    %c0_4 = arith.constant 0 : index
    %c0_5 = arith.constant 0 : index
    %8 = vector.load %arg3[%c0_4, %c0_5] : memref<2x128xf32, #tpu.memory_space<vmem>>, vector<1x128xf32>
    %9 = vector.broadcast %7 : vector<128x1xf32> to vector<128x128xf32>
    %10 = vector.broadcast %8 : vector<1x128xf32> to vector<128x128xf32>
    %11 = arith.addf %9, %10 : vector<128x128xf32>
    %cst_6 = arith.constant 0.000000e+00 : f32
    %12 = vector.broadcast %cst_6 : f32 to vector<128x128xf32>
    %13 = arith.cmpf ogt, %11, %12 : vector<128x128xf32>
    %cst_7 = arith.constant 0.000000e+00 : f32
    %14 = vector.broadcast %cst_7 : f32 to vector<128x128xf32>
    %15 = arith.subf %14, %11 : vector<128x128xf32>
    %cst_8 = arith.constant -2.000000e-01 : f32
    %16 = vector.broadcast %cst_8 : f32 to vector<128x128xf32>
    %17 = arith.mulf %16, %11 : vector<128x128xf32>
    %18 = arith.select %13, %15, %17 : vector<128x128xi1>, vector<128x128xf32>
    %cst_9 = arith.constant 6.000000e+01 : f32
    %19 = vector.broadcast %cst_9 : f32 to vector<128x128xf32>
    %20 = arith.minimumf %18, %19 : vector<128x128xf32>
    %21 = math.exp %20 : vector<128x128xf32>
    %cst_10 = arith.constant 0.000000e+00 : f32
    %22 = vector.broadcast %cst_10 : f32 to vector<128x128xf32>
    %23 = arith.select %6, %21, %22 : vector<128x128xi1>, vector<128x128xf32>
    %c0_11 = arith.constant 0 : index
    %c0_12 = arith.constant 0 : index
    %24 = vector.load %arg8[%c0_11, %c0_12] : memref<128x2xf32, #tpu.memory_space<vmem>>, vector<128x1xf32>
    %cst_13 = arith.constant dense<0.000000e+00> : vector<128xf32>
    %25 = vector.multi_reduction <add>, %23, %cst_13 [1] : vector<128x128xf32> to vector<128xf32>
    %26 = vector.shape_cast %25 : vector<128xf32> to vector<128x1xf32>
    %27 = arith.addf %24, %26 : vector<128x1xf32>
    %c0_14 = arith.constant 0 : index
    %c0_15 = arith.constant 0 : index
    %28 = vector.load %arg8[%c0_14, %c0_15] : memref<128x2xf32, #tpu.memory_space<vmem>>, vector<128x1xf32>
    tpu.vector_store %arg8[%c0_14, %c0_15], %27 {strides = array<i32>} : memref<128x2xf32, #tpu.memory_space<vmem>>, vector<128x1xf32>,
    %c0_16 = arith.constant 0 : index
    %c0_17 = arith.constant 0 : index
    %29 = vector.load %arg7[%c0_16, %c0_17] : memref<128x32xf32, #tpu.memory_space<vmem>>, vector<128x16xf32>
    %c0_18 = arith.constant 0 : index
    %c0_19 = arith.constant 0 : index
    %30 = vector.load %arg5[%c0_18, %c0_19] : memref<128x32xf32, #tpu.memory_space<vmem>>, vector<128x16xf32>
    %cst_20 = arith.constant dense<0.000000e+00> : vector<128x16xf32>
    %31 = tpu.matmul %23, %30, %cst_20 {dimension_numbers = #tpu.dot_dimension_numbers<[1], [0], [0], [1], [0, 0, 1, 1], [], []>} : vector<128x128xf32>, vector<128x16xf32>, vector<128x16xf32> -> vector<128x16xf32>
    %32 = arith.addf %29, %31 : vector<128x16xf32>
    %c0_21 = arith.constant 0 : index
    %c0_22 = arith.constant 0 : index
    %33 = vector.load %arg7[%c0_21, %c0_22] : memref<128x32xf32, #tpu.memory_space<vmem>>, vector<128x16xf32>
    tpu.vector_store %arg7[%c0_21, %c0_22], %32 {strides = array<i32>} : memref<128x32xf32, #tpu.memory_space<vmem>>, vector<128x16xf32>,
    %c0_23 = arith.constant 0 : index
    %c1 = arith.constant 1 : index
    %34 = vector.load %arg2[%c0_23, %c1] : memref<128x2xf32, #tpu.memory_space<vmem>>, vector<128x1xf32>
    %c1_24 = arith.constant 1 : index
    %c0_25 = arith.constant 0 : index
    %35 = vector.load %arg3[%c1_24, %c0_25] : memref<2x128xf32, #tpu.memory_space<vmem>>, vector<1x128xf32>
    %36 = vector.broadcast %34 : vector<128x1xf32> to vector<128x128xf32>
    %37 = vector.broadcast %35 : vector<1x128xf32> to vector<128x128xf32>
    %38 = arith.addf %36, %37 : vector<128x128xf32>
    %cst_26 = arith.constant 0.000000e+00 : f32
    %39 = vector.broadcast %cst_26 : f32 to vector<128x128xf32>
    %40 = arith.cmpf ogt, %38, %39 : vector<128x128xf32>
    %cst_27 = arith.constant 0.000000e+00 : f32
    %41 = vector.broadcast %cst_27 : f32 to vector<128x128xf32>
    %42 = arith.subf %41, %38 : vector<128x128xf32>
    %cst_28 = arith.constant -2.000000e-01 : f32
    %43 = vector.broadcast %cst_28 : f32 to vector<128x128xf32>
    %44 = arith.mulf %43, %38 : vector<128x128xf32>
    %45 = arith.select %40, %42, %44 : vector<128x128xi1>, vector<128x128xf32>
    %cst_29 = arith.constant 6.000000e+01 : f32
    %46 = vector.broadcast %cst_29 : f32 to vector<128x128xf32>
    %47 = arith.minimumf %45, %46 : vector<128x128xf32>
    %48 = math.exp %47 : vector<128x128xf32>
    %cst_30 = arith.constant 0.000000e+00 : f32
    %49 = vector.broadcast %cst_30 : f32 to vector<128x128xf32>
    %50 = arith.select %6, %48, %49 : vector<128x128xi1>, vector<128x128xf32>
    %c0_31 = arith.constant 0 : index
    %c1_32 = arith.constant 1 : index
    %51 = vector.load %arg8[%c0_31, %c1_32] : memref<128x2xf32, #tpu.memory_space<vmem>>, vector<128x1xf32>
    %cst_33 = arith.constant dense<0.000000e+00> : vector<128xf32>
    %52 = vector.multi_reduction <add>, %50, %cst_33 [1] : vector<128x128xf32> to vector<128xf32>
    %53 = vector.shape_cast %52 : vector<128xf32> to vector<128x1xf32>
    %54 = arith.addf %51, %53 : vector<128x1xf32>
    %c0_34 = arith.constant 0 : index
    %c1_35 = arith.constant 1 : index
    %55 = vector.load %arg8[%c0_34, %c1_35] : memref<128x2xf32, #tpu.memory_space<vmem>>, vector<128x1xf32>
    tpu.vector_store %arg8[%c0_34, %c1_35], %54 {strides = array<i32>} : memref<128x2xf32, #tpu.memory_space<vmem>>, vector<128x1xf32>,
    %c0_36 = arith.constant 0 : index
    %c16 = arith.constant 16 : index
    %56 = vector.load %arg7[%c0_36, %c16] : memref<128x32xf32, #tpu.memory_space<vmem>>, vector<128x16xf32>
    %c0_37 = arith.constant 0 : index
    %c16_38 = arith.constant 16 : index
    %57 = vector.load %arg5[%c0_37, %c16_38] : memref<128x32xf32, #tpu.memory_space<vmem>>, vector<128x16xf32>
    %cst_39 = arith.constant dense<0.000000e+00> : vector<128x16xf32>
    %58 = tpu.matmul %50, %57, %cst_39 {dimension_numbers = #tpu.dot_dimension_numbers<[1], [0], [0], [1], [0, 0, 1, 1], [], []>} : vector<128x128xf32>, vector<128x16xf32>, vector<128x16xf32> -> vector<128x16xf32>
    %59 = arith.addf %56, %58 : vector<128x16xf32>
    %c0_40 = arith.constant 0 : index
    %c16_41 = arith.constant 16 : index
    %60 = vector.load %arg7[%c0_40, %c16_41] : memref<128x32xf32, #tpu.memory_space<vmem>>, vector<128x16xf32>
    tpu.vector_store %arg7[%c0_40, %c16_41], %59 {strides = array<i32>} : memref<128x32xf32, #tpu.memory_space<vmem>>, vector<128x16xf32>,
    %c1_i32 = arith.constant 1 : i32
    %61 = arith.cmpi eq, %arg1, %c1_i32 : i32
    %62 = arith.extui %61 : i1 to i32
    %c0_i32_42 = arith.constant 0 : i32
    %63 = arith.cmpi ne, %62, %c0_i32_42 : i32
    scf.if %63 {
      %c0_43 = arith.constant 0 : index
      %c0_44 = arith.constant 0 : index
      %64 = vector.load %arg8[%c0_43, %c0_44] : memref<128x2xf32, #tpu.memory_space<vmem>>, vector<128x1xf32>
      %cst_45 = arith.constant 1.000000e-16 : f32
      %65 = vector.broadcast %cst_45 : f32 to vector<128x1xf32>
      %66 = arith.addf %64, %65 : vector<128x1xf32>
      %67 = tpu.reciprocal %66 {approx = true} : vector<128x1xf32> -> vector<128x1xf32>
      %c0_46 = arith.constant 0 : index
      %c0_47 = arith.constant 0 : index
      %68 = vector.load %arg7[%c0_46, %c0_47] : memref<128x32xf32, #tpu.memory_space<vmem>>, vector<128x16xf32>
      %69 = vector.broadcast %67 : vector<128x1xf32> to vector<128x16xf32>
      %70 = arith.mulf %68, %69 : vector<128x16xf32>
      %cst_48 = arith.constant 0.000000e+00 : f32
      %71 = vector.broadcast %cst_48 : f32 to vector<128x16xf32>
      %72 = arith.cmpf ogt, %70, %71 : vector<128x16xf32>
      %73 = math.exp %70 : vector<128x16xf32>
      %cst_49 = arith.constant 1.000000e+00 : f32
      %74 = vector.broadcast %cst_49 : f32 to vector<128x16xf32>
      %75 = arith.subf %73, %74 : vector<128x16xf32>
      %76 = arith.select %72, %70, %75 : vector<128x16xi1>, vector<128x16xf32>
      %c0_50 = arith.constant 0 : index
      %c0_51 = arith.constant 0 : index
      %77 = vector.load %arg6[%c0_50, %c0_51] : memref<128x32xf32, #tpu.memory_space<vmem>>, vector<128x16xf32>
      tpu.vector_store %arg6[%c0_50, %c0_51], %76 {strides = array<i32>} : memref<128x32xf32, #tpu.memory_space<vmem>>, vector<128x16xf32>,
      %c0_52 = arith.constant 0 : index
      %c1_53 = arith.constant 1 : index
      %78 = vector.load %arg8[%c0_52, %c1_53] : memref<128x2xf32, #tpu.memory_space<vmem>>, vector<128x1xf32>
      %cst_54 = arith.constant 1.000000e-16 : f32
      %79 = vector.broadcast %cst_54 : f32 to vector<128x1xf32>
      %80 = arith.addf %78, %79 : vector<128x1xf32>
      %81 = tpu.reciprocal %80 {approx = true} : vector<128x1xf32> -> vector<128x1xf32>
      %c0_55 = arith.constant 0 : index
      %c16_56 = arith.constant 16 : index
      %82 = vector.load %arg7[%c0_55, %c16_56] : memref<128x32xf32, #tpu.memory_space<vmem>>, vector<128x16xf32>
      %83 = vector.broadcast %81 : vector<128x1xf32> to vector<128x16xf32>
      %84 = arith.mulf %82, %83 : vector<128x16xf32>
      %cst_57 = arith.constant 0.000000e+00 : f32
      %85 = vector.broadcast %cst_57 : f32 to vector<128x16xf32>
      %86 = arith.cmpf ogt, %84, %85 : vector<128x16xf32>
      %87 = math.exp %84 : vector<128x16xf32>
      %cst_58 = arith.constant 1.000000e+00 : f32
      %88 = vector.broadcast %cst_58 : f32 to vector<128x16xf32>
      %89 = arith.subf %87, %88 : vector<128x16xf32>
      %90 = arith.select %86, %84, %89 : vector<128x16xi1>, vector<128x16xf32>
      %c0_59 = arith.constant 0 : index
      %c16_60 = arith.constant 16 : index
      %91 = vector.load %arg6[%c0_59, %c16_60] : memref<128x32xf32, #tpu.memory_space<vmem>>, vector<128x16xf32>
      tpu.vector_store %arg6[%c0_59, %c16_60], %90 {strides = array<i32>} : memref<128x32xf32, #tpu.memory_space<vmem>>, vector<128x16xf32>,
    } else {
    }
    return
  }
  func.func @transform_0(%arg0: i32, %arg1: i32) -> (i32, i32) {
    %c0_i32 = arith.constant 0 : i32
    %c0_i32_0 = arith.constant 0 : i32
    return %arg0, %c0_i32 : i32, i32
  }
  func.func @transform_1(%arg0: i32, %arg1: i32) -> (i32, i32) {
    %c0_i32 = arith.constant 0 : i32
    %c0_i32_0 = arith.constant 0 : i32
    return %c0_i32, %arg1 : i32, i32
  }
  func.func @transform_2(%arg0: i32, %arg1: i32) -> (i32, i32) {
    %c0_i32 = arith.constant 0 : i32
    return %arg0, %arg1 : i32, i32
  }
  func.func @transform_3(%arg0: i32, %arg1: i32) -> (i32, i32) {
    %c0_i32 = arith.constant 0 : i32
    %c0_i32_0 = arith.constant 0 : i32
    return %arg1, %c0_i32 : i32, i32
  }
  func.func @transform_4(%arg0: i32, %arg1: i32) -> (i32, i32) {
    %c0_i32 = arith.constant 0 : i32
    %c0_i32_0 = arith.constant 0 : i32
    return %arg0, %c0_i32 : i32, i32
  }
}

module attributes {stable_mosaic.version = 11 : i64} {
  func.func @_project_scores_kernel(%arg0: i32, %arg1: memref<128x32xf32, #tpu.memory_space<vmem>>, %arg2: memref<32x8xf32, #tpu.memory_space<vmem>>, %arg3: memref<1x8xf32, #tpu.memory_space<vmem>>, %arg4: memref<1x8xf32, #tpu.memory_space<vmem>>, %arg5: memref<128x8xf32, #tpu.memory_space<vmem>>, %arg6: memref<128x1xf32, #tpu.memory_space<vmem>>, %arg7: memref<128x1xf32, #tpu.memory_space<vmem>>) attributes {dimension_semantics = [#tpu.dimension_semantics<parallel>], iteration_bounds = array<i64: 2>, scalar_prefetch = 0 : i64, scratch_operands = 0 : i64, tpu.core_type = #tpu.core_type<tc>, window_params = [{transform_indices = @transform_0, window_bounds = array<i64: 128, 32>}, {pipeline_mode = #tpu.pipeline_mode<synchronous>, transform_indices = @transform_1, window_bounds = array<i64: 32, 8>}, {pipeline_mode = #tpu.pipeline_mode<synchronous>, transform_indices = @transform_2, window_bounds = array<i64: 1, 8>}, {pipeline_mode = #tpu.pipeline_mode<synchronous>, transform_indices = @transform_3, window_bounds = array<i64: 1, 8>}, {transform_indices = @transform_4, window_bounds = array<i64: 128, 8>}, {transform_indices = @transform_5, window_bounds = array<i64: 128, 1>}, {transform_indices = @transform_6, window_bounds = array<i64: 128, 1>}]} {
    %c0 = arith.constant 0 : index
    %c0_0 = arith.constant 0 : index
    %0 = vector.load %arg1[%c0, %c0_0] : memref<128x32xf32, #tpu.memory_space<vmem>>, vector<128x32xf32>
    %c0_1 = arith.constant 0 : index
    %c0_2 = arith.constant 0 : index
    %1 = vector.load %arg2[%c0_1, %c0_2] : memref<32x8xf32, #tpu.memory_space<vmem>>, vector<32x8xf32>
    %cst = arith.constant dense<0.000000e+00> : vector<128x8xf32>
    %2 = tpu.matmul %0, %1, %cst {dimension_numbers = #tpu.dot_dimension_numbers<[1], [0], [0], [1], [0, 0, 1, 1], [], []>} : vector<128x32xf32>, vector<32x8xf32>, vector<128x8xf32> -> vector<128x8xf32>
    %c0_3 = arith.constant 0 : index
    %c0_4 = arith.constant 0 : index
    %3 = vector.load %arg5[%c0_3, %c0_4] : memref<128x8xf32, #tpu.memory_space<vmem>>, vector<128x8xf32>
    tpu.vector_store %arg5[%c0_3, %c0_4], %2 {strides = array<i32>} : memref<128x8xf32, #tpu.memory_space<vmem>>, vector<128x8xf32>,
    %c0_5 = arith.constant 0 : index
    %c0_6 = arith.constant 0 : index
    %4 = vector.load %arg3[%c0_5, %c0_6] : memref<1x8xf32, #tpu.memory_space<vmem>>, vector<1x8xf32>
    %5 = vector.broadcast %4 : vector<1x8xf32> to vector<128x8xf32>
    %6 = arith.mulf %2, %5 : vector<128x8xf32>
    %cst_7 = arith.constant dense<0.000000e+00> : vector<128xf32>
    %7 = vector.multi_reduction <add>, %6, %cst_7 [1] : vector<128x8xf32> to vector<128xf32>
    %8 = vector.shape_cast %7 : vector<128xf32> to vector<128x1xf32>
    %c0_8 = arith.constant 0 : index
    %c0_9 = arith.constant 0 : index
    %9 = vector.load %arg6[%c0_8, %c0_9] : memref<128x1xf32, #tpu.memory_space<vmem>>, vector<128x1xf32>
    tpu.vector_store %arg6[%c0_8, %c0_9], %8 {strides = array<i32>} : memref<128x1xf32, #tpu.memory_space<vmem>>, vector<128x1xf32>,
    %c0_10 = arith.constant 0 : index
    %c0_11 = arith.constant 0 : index
    %10 = vector.load %arg4[%c0_10, %c0_11] : memref<1x8xf32, #tpu.memory_space<vmem>>, vector<1x8xf32>
    %11 = vector.broadcast %10 : vector<1x8xf32> to vector<128x8xf32>
    %12 = arith.mulf %2, %11 : vector<128x8xf32>
    %cst_12 = arith.constant dense<0.000000e+00> : vector<128xf32>
    %13 = vector.multi_reduction <add>, %12, %cst_12 [1] : vector<128x8xf32> to vector<128xf32>
    %14 = vector.shape_cast %13 : vector<128xf32> to vector<128x1xf32>
    %c0_13 = arith.constant 0 : index
    %c0_14 = arith.constant 0 : index
    %15 = vector.load %arg7[%c0_13, %c0_14] : memref<128x1xf32, #tpu.memory_space<vmem>>, vector<128x1xf32>
    tpu.vector_store %arg7[%c0_13, %c0_14], %14 {strides = array<i32>} : memref<128x1xf32, #tpu.memory_space<vmem>>, vector<128x1xf32>,
    return
  }
  func.func @transform_0(%arg0: i32) -> (i32, i32) {
    %c0_i32 = arith.constant 0 : i32
    %c0_i32_0 = arith.constant 0 : i32
    return %arg0, %c0_i32 : i32, i32
  }
  func.func @transform_1(%arg0: i32) -> (i32, i32) {
    %c0_i32 = arith.constant 0 : i32
    %c0_i32_0 = arith.constant 0 : i32
    %c0_i32_1 = arith.constant 0 : i32
    return %c0_i32, %c0_i32_0 : i32, i32
  }
  func.func @transform_2(%arg0: i32) -> (i32, i32) {
    %c0_i32 = arith.constant 0 : i32
    %c0_i32_0 = arith.constant 0 : i32
    %c0_i32_1 = arith.constant 0 : i32
    return %c0_i32, %c0_i32_0 : i32, i32
  }
  func.func @transform_3(%arg0: i32) -> (i32, i32) {
    %c0_i32 = arith.constant 0 : i32
    %c0_i32_0 = arith.constant 0 : i32
    %c0_i32_1 = arith.constant 0 : i32
    return %c0_i32, %c0_i32_0 : i32, i32
  }
  func.func @transform_4(%arg0: i32) -> (i32, i32) {
    %c0_i32 = arith.constant 0 : i32
    %c0_i32_0 = arith.constant 0 : i32
    return %arg0, %c0_i32 : i32, i32
  }
  func.func @transform_5(%arg0: i32) -> (i32, i32) {
    %c0_i32 = arith.constant 0 : i32
    %c0_i32_0 = arith.constant 0 : i32
    return %arg0, %c0_i32 : i32, i32
  }
  func.func @transform_6(%arg0: i32) -> (i32, i32) {
    %c0_i32 = arith.constant 0 : i32
    %c0_i32_0 = arith.constant 0 : i32
    return %arg0, %c0_i32 : i32, i32
  }
}

module attributes {stable_mosaic.version = 11 : i64} {
  func.func @_attention_kernel(%arg0: i32, %arg1: i32, %arg2: memref<128x1xf32, #tpu.memory_space<vmem>>, %arg3: memref<1x128xf32, #tpu.memory_space<vmem>>, %arg4: memref<128x128xi8, #tpu.memory_space<vmem>>, %arg5: memref<128x8xf32, #tpu.memory_space<vmem>>, %arg6: memref<128x8xf32, #tpu.memory_space<vmem>>, %arg7: memref<128x8xf32, #tpu.memory_space<vmem>>, %arg8: memref<128x1xf32, #tpu.memory_space<vmem>>) attributes {dimension_semantics = [#tpu.dimension_semantics<parallel>, #tpu.dimension_semantics<arbitrary>], iteration_bounds = array<i64: 2, 2>, scalar_prefetch = 0 : i64, scratch_operands = 2 : i64, tpu.core_type = #tpu.core_type<tc>, window_params = [{transform_indices = @transform_0, window_bounds = array<i64: 128, 1>}, {transform_indices = @transform_1, window_bounds = array<i64: 1, 128>}, {transform_indices = @transform_2, window_bounds = array<i64: 128, 128>}, {transform_indices = @transform_3, window_bounds = array<i64: 128, 8>}, {transform_indices = @transform_4, window_bounds = array<i64: 128, 8>}]} {
    %c0_i32 = arith.constant 0 : i32
    %0 = arith.cmpi eq, %arg1, %c0_i32 : i32
    %1 = arith.extui %0 : i1 to i32
    %c0_i32_0 = arith.constant 0 : i32
    %2 = arith.cmpi ne, %1, %c0_i32_0 : i32
    scf.if %2 {
      %cst_24 = arith.constant 0.000000e+00 : f32
      %37 = vector.broadcast %cst_24 : f32 to vector<128x8xf32>
      %c0_25 = arith.constant 0 : index
      %c0_26 = arith.constant 0 : index
      %38 = vector.load %arg7[%c0_25, %c0_26] : memref<128x8xf32, #tpu.memory_space<vmem>>, vector<128x8xf32>
      tpu.vector_store %arg7[%c0_25, %c0_26], %37 {strides = array<i32>} : memref<128x8xf32, #tpu.memory_space<vmem>>, vector<128x8xf32>,
      %cst_27 = arith.constant 0.000000e+00 : f32
      %39 = vector.broadcast %cst_27 : f32 to vector<128x1xf32>
      %c0_28 = arith.constant 0 : index
      %c0_29 = arith.constant 0 : index
      %40 = vector.load %arg8[%c0_28, %c0_29] : memref<128x1xf32, #tpu.memory_space<vmem>>, vector<128x1xf32>
      tpu.vector_store %arg8[%c0_28, %c0_29], %39 {strides = array<i32>} : memref<128x1xf32, #tpu.memory_space<vmem>>, vector<128x1xf32>,
    } else {
    }
    %c0 = arith.constant 0 : index
    %c0_1 = arith.constant 0 : index
    %3 = vector.load %arg4[%c0, %c0_1] : memref<128x128xi8, #tpu.memory_space<vmem>>, vector<128x128xi8>
    %4 = arith.sitofp %3 : vector<128x128xi8> to vector<128x128xf32>
    %cst = arith.constant 0.000000e+00 : f32
    %5 = vector.broadcast %cst : f32 to vector<128x128xf32>
    %6 = arith.cmpf ogt, %4, %5 : vector<128x128xf32>
    %c0_2 = arith.constant 0 : index
    %c0_3 = arith.constant 0 : index
    %7 = vector.load %arg2[%c0_2, %c0_3] : memref<128x1xf32, #tpu.memory_space<vmem>>, vector<128x1xf32>
    %c0_4 = arith.constant 0 : index
    %c0_5 = arith.constant 0 : index
    %8 = vector.load %arg3[%c0_4, %c0_5] : memref<1x128xf32, #tpu.memory_space<vmem>>, vector<1x128xf32>
    %9 = vector.broadcast %7 : vector<128x1xf32> to vector<128x128xf32>
    %10 = vector.broadcast %8 : vector<1x128xf32> to vector<128x128xf32>
    %11 = arith.addf %9, %10 : vector<128x128xf32>
    %cst_6 = arith.constant 0.000000e+00 : f32
    %12 = vector.broadcast %cst_6 : f32 to vector<128x128xf32>
    %13 = arith.cmpf ogt, %11, %12 : vector<128x128xf32>
    %cst_7 = arith.constant 0.000000e+00 : f32
    %14 = vector.broadcast %cst_7 : f32 to vector<128x128xf32>
    %15 = arith.subf %14, %11 : vector<128x128xf32>
    %cst_8 = arith.constant -2.000000e-01 : f32
    %16 = vector.broadcast %cst_8 : f32 to vector<128x128xf32>
    %17 = arith.mulf %16, %11 : vector<128x128xf32>
    %18 = arith.select %13, %15, %17 : vector<128x128xi1>, vector<128x128xf32>
    %cst_9 = arith.constant 6.000000e+01 : f32
    %19 = vector.broadcast %cst_9 : f32 to vector<128x128xf32>
    %20 = arith.minimumf %18, %19 : vector<128x128xf32>
    %21 = math.exp %20 : vector<128x128xf32>
    %cst_10 = arith.constant 0.000000e+00 : f32
    %22 = vector.broadcast %cst_10 : f32 to vector<128x128xf32>
    %23 = arith.select %6, %21, %22 : vector<128x128xi1>, vector<128x128xf32>
    %c0_11 = arith.constant 0 : index
    %c0_12 = arith.constant 0 : index
    %24 = vector.load %arg8[%c0_11, %c0_12] : memref<128x1xf32, #tpu.memory_space<vmem>>, vector<128x1xf32>
    %cst_13 = arith.constant dense<0.000000e+00> : vector<128xf32>
    %25 = vector.multi_reduction <add>, %23, %cst_13 [1] : vector<128x128xf32> to vector<128xf32>
    %26 = vector.shape_cast %25 : vector<128xf32> to vector<128x1xf32>
    %27 = arith.addf %24, %26 : vector<128x1xf32>
    %c0_14 = arith.constant 0 : index
    %c0_15 = arith.constant 0 : index
    %28 = vector.load %arg8[%c0_14, %c0_15] : memref<128x1xf32, #tpu.memory_space<vmem>>, vector<128x1xf32>
    tpu.vector_store %arg8[%c0_14, %c0_15], %27 {strides = array<i32>} : memref<128x1xf32, #tpu.memory_space<vmem>>, vector<128x1xf32>,
    %c0_16 = arith.constant 0 : index
    %c0_17 = arith.constant 0 : index
    %29 = vector.load %arg7[%c0_16, %c0_17] : memref<128x8xf32, #tpu.memory_space<vmem>>, vector<128x8xf32>
    %c0_18 = arith.constant 0 : index
    %c0_19 = arith.constant 0 : index
    %30 = vector.load %arg5[%c0_18, %c0_19] : memref<128x8xf32, #tpu.memory_space<vmem>>, vector<128x8xf32>
    %cst_20 = arith.constant dense<0.000000e+00> : vector<128x8xf32>
    %31 = tpu.matmul %23, %30, %cst_20 {dimension_numbers = #tpu.dot_dimension_numbers<[1], [0], [0], [1], [0, 0, 1, 1], [], []>} : vector<128x128xf32>, vector<128x8xf32>, vector<128x8xf32> -> vector<128x8xf32>
    %32 = arith.addf %29, %31 : vector<128x8xf32>
    %c0_21 = arith.constant 0 : index
    %c0_22 = arith.constant 0 : index
    %33 = vector.load %arg7[%c0_21, %c0_22] : memref<128x8xf32, #tpu.memory_space<vmem>>, vector<128x8xf32>
    tpu.vector_store %arg7[%c0_21, %c0_22], %32 {strides = array<i32>} : memref<128x8xf32, #tpu.memory_space<vmem>>, vector<128x8xf32>,
    %c1_i32 = arith.constant 1 : i32
    %34 = arith.cmpi eq, %arg1, %c1_i32 : i32
    %35 = arith.extui %34 : i1 to i32
    %c0_i32_23 = arith.constant 0 : i32
    %36 = arith.cmpi ne, %35, %c0_i32_23 : i32
    scf.if %36 {
      %c0_24 = arith.constant 0 : index
      %c0_25 = arith.constant 0 : index
      %37 = vector.load %arg8[%c0_24, %c0_25] : memref<128x1xf32, #tpu.memory_space<vmem>>, vector<128x1xf32>
      %cst_26 = arith.constant 1.000000e-16 : f32
      %38 = vector.broadcast %cst_26 : f32 to vector<128x1xf32>
      %39 = arith.addf %37, %38 : vector<128x1xf32>
      %40 = tpu.reciprocal %39 {approx = true} : vector<128x1xf32> -> vector<128x1xf32>
      %c0_27 = arith.constant 0 : index
      %c0_28 = arith.constant 0 : index
      %41 = vector.load %arg7[%c0_27, %c0_28] : memref<128x8xf32, #tpu.memory_space<vmem>>, vector<128x8xf32>
      %42 = vector.broadcast %40 : vector<128x1xf32> to vector<128x8xf32>
      %43 = arith.mulf %41, %42 : vector<128x8xf32>
      %cst_29 = arith.constant 0.000000e+00 : f32
      %44 = vector.broadcast %cst_29 : f32 to vector<128x8xf32>
      %45 = arith.cmpf ogt, %43, %44 : vector<128x8xf32>
      %46 = math.exp %43 : vector<128x8xf32>
      %cst_30 = arith.constant 1.000000e+00 : f32
      %47 = vector.broadcast %cst_30 : f32 to vector<128x8xf32>
      %48 = arith.subf %46, %47 : vector<128x8xf32>
      %49 = arith.select %45, %43, %48 : vector<128x8xi1>, vector<128x8xf32>
      %cst_31 = arith.constant dense<0xFF800000> : vector<128xf32>
      %50 = vector.multi_reduction <maximumf>, %49, %cst_31 [1] : vector<128x8xf32> to vector<128xf32>
      %51 = vector.shape_cast %50 : vector<128xf32> to vector<128x1xf32>
      %52 = vector.broadcast %51 : vector<128x1xf32> to vector<128x8xf32>
      %53 = arith.subf %49, %52 : vector<128x8xf32>
      %54 = math.exp %53 : vector<128x8xf32>
      %cst_32 = arith.constant dense<0.000000e+00> : vector<128xf32>
      %55 = vector.multi_reduction <add>, %54, %cst_32 [1] : vector<128x8xf32> to vector<128xf32>
      %56 = vector.shape_cast %55 : vector<128xf32> to vector<128x1xf32>
      %57 = math.log %56 : vector<128x1xf32>
      %58 = vector.broadcast %57 : vector<128x1xf32> to vector<128x8xf32>
      %59 = arith.subf %53, %58 : vector<128x8xf32>
      %c0_33 = arith.constant 0 : index
      %c0_34 = arith.constant 0 : index
      %60 = vector.load %arg6[%c0_33, %c0_34] : memref<128x8xf32, #tpu.memory_space<vmem>>, vector<128x8xf32>
      tpu.vector_store %arg6[%c0_33, %c0_34], %59 {strides = array<i32>} : memref<128x8xf32, #tpu.memory_space<vmem>>, vector<128x8xf32>,
    } else {
    }
    return
  }
  func.func @transform_0(%arg0: i32, %arg1: i32) -> (i32, i32) {
    %c0_i32 = arith.constant 0 : i32
    %c0_i32_0 = arith.constant 0 : i32
    return %arg0, %c0_i32 : i32, i32
  }
  func.func @transform_1(%arg0: i32, %arg1: i32) -> (i32, i32) {
    %c0_i32 = arith.constant 0 : i32
    %c0_i32_0 = arith.constant 0 : i32
    return %c0_i32, %arg1 : i32, i32
  }
  func.func @transform_2(%arg0: i32, %arg1: i32) -> (i32, i32) {
    %c0_i32 = arith.constant 0 : i32
    return %arg0, %arg1 : i32, i32
  }
  func.func @transform_3(%arg0: i32, %arg1: i32) -> (i32, i32) {
    %c0_i32 = arith.constant 0 : i32
    %c0_i32_0 = arith.constant 0 : i32
    return %arg1, %c0_i32 : i32, i32
  }
  func.func @transform_4(%arg0: i32, %arg1: i32) -> (i32, i32) {
    %c0_i32 = arith.constant 0 : i32
    %c0_i32_0 = arith.constant 0 : i32
    return %arg0, %c0_i32 : i32, i32
  }
}

</mosaic_0001>

<llo_original>
// kernel: spgat_forward.4
$region0: #{spgat_forward.4}
  #allocation0 [shape = 'u32[]', space=smem, size = 0x4, offset = 0x4, fixed_abs, tag = 'smem constant byte address 0x4 - core index']
  #allocation1 [shape = 'u32[72,128]{1,0:T(1,128)}', space=vmem, size = 0x9000, scoped, tag = 'internal scratch']
  %s0 = inlined_call_operand.vmem [shape: f32[256,64], index: 0, kind: input, shape index: {}]
  %s1 = inlined_call_operand.vmem [shape: f32[64,32], index: 1, kind: input, shape index: {}]
  %s2 = inlined_call_operand.vmem [shape: f32[2,16], index: 2, kind: input, shape index: {}]
  %s3 = inlined_call_operand.vmem [shape: f32[2,16], index: 3, kind: input, shape index: {}]
  %s4 = inlined_call_operand.vmem [shape: f32[256,32], index: 4, kind: output, shape index: {0}]
  %s5 = inlined_call_operand.vmem [shape: f32[256,2], index: 5, kind: output, shape index: {1}]
  %s6 = inlined_call_operand.vmem [shape: f32[256,2], index: 6, kind: output, shape index: {2}]
  %7 = xla_tuple %s4, %s5, %s6
  %s8 = sld [smem:[#allocation0]]
  $region65: #{spgat_forward.4} parent=0
    _
  %s10 = ssub.s32 1, %s8
  %s11 = scalar_select 0, %s10, %s8
  loop: start=0, step=1, limit=4
  $region2: #{spgat_forward.4} parent=0 // loop_pre_header
    _
  $region3: #{spgat_forward.4} parent=0 // loop_header
    %s13 = sphi 0, %s17
    %p14 = scmp.ge.s32.totalorder %s13, 4
    %s23 = sphi 0, %s25
    %s26 = sphi 0, %s23
    %s27 = sphi 0, %s26
    %s43 = sphi 0, %s27
    %s47 = sphi 0, %s47
    %s49 = sphi 0, %s47
    %s50 = sphi 0, %s49
    %s64 = sphi 0, %s50
    %s68 = sphi 0, %s68
    %s70 = sphi 0, %s68
    %s71 = sphi 0, %s70
    %s85 = sphi 0, %s71
    %s89 = sphi 0, %s89
    %s91 = sphi 0, %s89
    %s92 = sphi 0, %s91
    %s106 = sphi 0, %s92
    %s112 = sphi 0, %s114
    %s115 = sphi 0, %s112
    %s116 = sphi 0, %s115
    %s132 = sphi 0, %s116
    %s138 = sphi 0, %s140
    %s141 = sphi 0, %s138
    %s142 = sphi 0, %s141
    %s158 = sphi 0, %s142
    %s164 = sphi 0, %s166
    %s167 = sphi 0, %s164
    %s168 = sphi 0, %s167
    %s184 = sphi 0, %s168
  $region4: #{spgat_forward.4} parent=0 // loop_header_branch
    %16 = sbr.rel (%p14) target = $region8
  $region5: #{spgat_forward.4} parent=0 // loop_body
    %s18 = ssub.s32 %s13, 1
    %s19 = ssub.s32 %s13, 2
    %s20 = sadd.s32 %s13, 1
    %s21 = ssub.s32 %s13, %s20
    %p22 = scmp.eq.s32.totalorder %s21, 0
    %s24 = sadd.s32 %s23, 1
    %s25 = scalar_select %p22, %s23, %s24
    %p28 = pneg %p22
    %p29 = scmp.eq.s32.totalorder %s13, 1
    %p30 = por %p28, %p29
    %p31 = scmp.ne.s32.totalorder %s23, %s26
    %p32 = scmp.eq.s32.totalorder %s13, 0
    %p33 = por %p31, %p32
    %p34 = scmp.ne.s32.totalorder %s23, %s26
    %p35 = scmp.eq.s32.totalorder %s18, 1
    %p36 = por %p34, %p35
    %p37 = scmp.ne.s32.totalorder %s26, %s27
    %p38 = scmp.eq.s32.totalorder %s18, 0
    %p39 = por %p37, %p38
    %p40 = scmp.ne.s32.totalorder %s26, %s27
    %p41 = scmp.eq.s32.totalorder %s19, 1
    %p42 = por %p40, %p41
    %p44 = scmp.ne.s32.totalorder %s27, %s43
    %p45 = scmp.eq.s32.totalorder %s19, 0
    %p46 = por %p44, %p45
    %s48 = sadd.s32 %s47, 1
    %p51 = scmp.eq.s32.totalorder %s13, 1
    %p52 = scmp.ne.s32.totalorder %s47, %s49
    %p53 = scmp.eq.s32.totalorder %s13, 0
    %p54 = por %p52, %p53
    %p55 = scmp.ne.s32.totalorder %s47, %s49
    %p56 = scmp.eq.s32.totalorder %s18, 1
    %p57 = por %p55, %p56
    %p58 = scmp.ne.s32.totalorder %s49, %s50
    %p59 = scmp.eq.s32.totalorder %s18, 0
    %p60 = por %p58, %p59
    %p61 = scmp.ne.s32.totalorder %s49, %s50
    %p62 = scmp.eq.s32.totalorder %s19, 1
    %p63 = por %p61, %p62
    %p65 = scmp.ne.s32.totalorder %s50, %s64
    %p66 = scmp.eq.s32.totalorder %s19, 0
    %p67 = por %p65, %p66
    %s69 = sadd.s32 %s68, 1
    %p72 = scmp.eq.s32.totalorder %s13, 1
    %p73 = scmp.ne.s32.totalorder %s68, %s70
    %p74 = scmp.eq.s32.totalorder %s13, 0
    %p75 = por %p73, %p74
    %p76 = scmp.ne.s32.totalorder %s68, %s70
    %p77 = scmp.eq.s32.totalorder %s18, 1
    %p78 = por %p76, %p77
    %p79 = scmp.ne.s32.totalorder %s70, %s71
    %p80 = scmp.eq.s32.totalorder %s18, 0
    %p81 = por %p79, %p80
    %p82 = scmp.ne.s32.totalorder %s70, %s71
    %p83 = scmp.eq.s32.totalorder %s19, 1
    %p84 = por %p82, %p83
    %p86 = scmp.ne.s32.totalorder %s71, %s85
    %p87 = scmp.eq.s32.totalorder %s19, 0
    %p88 = por %p86, %p87
    %s90 = sadd.s32 %s89, 1
    %p93 = scmp.eq.s32.totalorder %s13, 1
    %p94 = scmp.ne.s32.totalorder %s89, %s91
    %p95 = scmp.eq.s32.totalorder %s13, 0
    %p96 = por %p94, %p95
    %p97 = scmp.ne.s32.totalorder %s89, %s91
    %p98 = scmp.eq.s32.totalorder %s18, 1
    %p99 = por %p97, %p98
    %p100 = scmp.ne.s32.totalorder %s91, %s92
    %p101 = scmp.eq.s32.totalorder %s18, 0
    %p102 = por %p100, %p101
    %p103 = scmp.ne.s32.totalorder %s91, %s92
    %p104 = scmp.eq.s32.totalorder %s19, 1
    %p105 = por %p103, %p104
    %p107 = scmp.ne.s32.totalorder %s92, %s106
    %p108 = scmp.eq.s32.totalorder %s19, 0
    %p109 = por %p107, %p108
    %s110 = ssub.s32 %s13, %s20
    %p111 = scmp.eq.s32.totalorder %s110, 0
    %s113 = sadd.s32 %s112, 1
    %s114 = scalar_select %p111, %s112, %s113
    %p117 = pneg %p111
    %p118 = scmp.eq.s32.totalorder %s13, 1
    %p119 = por %p117, %p118
    %p120 = scmp.ne.s32.totalorder %s112, %s115
    %p121 = scmp.eq.s32.totalorder %s13, 0
    %p122 = por %p120, %p121
    %p123 = scmp.ne.s32.totalorder %s112, %s115
    %p124 = scmp.eq.s32.totalorder %s18, 1
    %p125 = por %p123, %p124
    %p126 = scmp.ne.s32.totalorder %s115, %s116
    %p127 = scmp.eq.s32.totalorder %s18, 0
    %p128 = por %p126, %p127
    %p129 = scmp.ne.s32.totalorder %s115, %s116
    %p130 = scmp.eq.s32.totalorder %s19, 1
    %p131 = por %p129, %p130
    %p133 = scmp.ne.s32.totalorder %s116, %s132
    %p134 = scmp.eq.s32.totalorder %s19, 0
    %p135 = por %p133, %p134
    %s136 = ssub.s32 %s13, %s20
    %p137 = scmp.eq.s32.totalorder %s136, 0
    %s139 = sadd.s32 %s138, 1
    %s140 = scalar_select %p137, %s138, %s139
    %p143 = pneg %p137
    %p144 = scmp.eq.s32.totalorder %s13, 1
    %p145 = por %p143, %p144
    %p146 = scmp.ne.s32.totalorder %s138, %s141
    %p147 = scmp.eq.s32.totalorder %s13, 0
    %p148 = por %p146, %p147
    %p149 = scmp.ne.s32.totalorder %s138, %s141
    %p150 = scmp.eq.s32.totalorder %s18, 1
    %p151 = por %p149, %p150
    %p152 = scmp.ne.s32.totalorder %s141, %s142
    %p153 = scmp.eq.s32.totalorder %s18, 0
    %p154 = por %p152, %p153
    %p155 = scmp.ne.s32.totalorder %s141, %s142
    %p156 = scmp.eq.s32.totalorder %s19, 1
    %p157 = por %p155, %p156
    %p159 = scmp.ne.s32.totalorder %s142, %s158
    %p160 = scmp.eq.s32.totalorder %s19, 0
    %p161 = por %p159, %p160
    %s162 = ssub.s32 %s13, %s20
    %p163 = scmp.eq.s32.totalorder %s162, 0
    %s165 = sadd.s32 %s164, 1
    %s166 = scalar_select %p163, %s164, %s165
    %p169 = pneg %p163
    %p170 = scmp.eq.s32.totalorder %s13, 1
    %p171 = por %p169, %p170
    %p172 = scmp.ne.s32.totalorder %s164, %s167
    %p173 = scmp.eq.s32.totalorder %s13, 0
    %p174 = por %p172, %p173
    %p175 = scmp.ne.s32.totalorder %s164, %s167
    %p176 = scmp.eq.s32.totalorder %s18, 1
    %p177 = por %p175, %p176
    %p178 = scmp.ne.s32.totalorder %s167, %s168
    %p179 = scmp.eq.s32.totalorder %s18, 0
    %p180 = por %p178, %p179
    %p181 = scmp.ne.s32.totalorder %s167, %s168
    %p182 = scmp.eq.s32.totalorder %s19, 1
    %p183 = por %p181, %p182
    %p185 = scmp.ne.s32.totalorder %s168, %s184
    %p186 = scmp.eq.s32.totalorder %s19, 0
    %p187 = por %p185, %p186
    %p188 = scmp.le.s32.totalorder 1, %s13
    %p189 = scmp.lt.s32.totalorder %s13, 3
    %p190 = pnand %p188, %p189
    %p191 = pneg %p190
    // Predicated region
    $region9: #{spgat_forward.4} parent=5 // pred_check
      _
    $region10: #{spgat_forward.4} parent=5 // pred_check_branch
      %193 = sbr.rel (%p190) target = $region12
    $region11: #{spgat_forward.4} parent=5 // pred_region
      %s194 = ssub.s32 %s13, 1
      // Predicated region
      $region13: #{spgat_forward.4} parent=11 // pred_check
        %p195 = pneg %p60
      $region14: #{spgat_forward.4} parent=11 // pred_check_branch
        %197 = sbr.rel (%p195) target = $region16
      $region15: #{spgat_forward.4} parent=11 // pred_region
        _
      $region16: #{spgat_forward.4} parent=11 // pred_fallthru
        _
      // Predicated region
      $region17: #{spgat_forward.4} parent=11 // pred_check
        %p198 = pneg %p81
      $region18: #{spgat_forward.4} parent=11 // pred_check_branch
        %200 = sbr.rel (%p198) target = $region20
      $region19: #{spgat_forward.4} parent=11 // pred_region
        _
      $region20: #{spgat_forward.4} parent=11 // pred_fallthru
        _
      // Predicated region
      $region21: #{spgat_forward.4} parent=11 // pred_check
        %p201 = pneg %p102
      $region22: #{spgat_forward.4} parent=11 // pred_check_branch
        %203 = sbr.rel (%p201) target = $region24
      $region23: #{spgat_forward.4} parent=11 // pred_region
        _
      $region24: #{spgat_forward.4} parent=11 // pred_fallthru
        _
    $region12: #{spgat_forward.4} parent=5 // pred_fallthru
      _
    %p204 = scmp.lt.s32.totalorder %s13, 2
    // Predicated region
    $region25: #{spgat_forward.4} parent=5 // pred_check
      %p205 = pneg %p204
    $region26: #{spgat_forward.4} parent=5 // pred_check_branch
      %207 = sbr.rel (%p205) target = $region28
    $region27: #{spgat_forward.4} parent=5 // pred_region
      // Predicated region
      $region29: #{spgat_forward.4} parent=27 // pred_check
        %p208 = pneg %p33
      $region30: #{spgat_forward.4} parent=27 // pred_check_branch
        %210 = sbr.rel (%p208) target = $region32
      $region31: #{spgat_forward.4} parent=27 // pred_region
        %s211 = smul.u32 16, %s13
        %p212 = scmp.lt.s32.totalorder %s211, 31
        %s213 = scalar_select %p212, %s211, 31
        %s214 = smul.addr %s213, 8
        %s215 = scalar_lea.vmem %s0, %s214
        %s216 = smul.u32 16, %s13
      $region32: #{spgat_forward.4} parent=27 // pred_fallthru
        _
    $region28: #{spgat_forward.4} parent=5 // pred_fallthru
      _
    %p217 = scmp.le.s32.totalorder 1, %s13
    %p218 = scmp.lt.s32.totalorder %s13, 3
    %p219 = pnand %p217, %p218
    %p220 = pneg %p219
    // Predicated region
    $region33: #{spgat_forward.4} parent=5 // pred_check
      _
    $region34: #{spgat_forward.4} parent=5 // pred_check_branch
      %222 = sbr.rel (%p219) target = $region36
    $region35: #{spgat_forward.4} parent=5 // pred_region
      %s223 = ssub.s32 %s13, 1
      %s224 = smul.u32 16, %s18
      %p225 = scmp.lt.s32.totalorder %s224, 31
      %s226 = scalar_select %p225, %s224, 31
      %s227 = smul.addr %s226, 8
      %s228 = scalar_lea.vmem %s0, %s227
      %p229 = pneg %p39
      %p230 = pneg %p36
      %p231 = pneg %p60
      %p232 = pneg %p57
      %p233 = pneg %p81
      %p234 = pneg %p78
      %p235 = pneg %p102
      %p236 = pneg %p99
      %p237 = pneg %p128
      %p238 = pneg %p125
      %s239 = smul.u32 16, %s18
      %p240 = scmp.lt.s32.totalorder %s239, 31
      %s241 = scalar_select %p240, %s239, 31
      %s242 = smul.addr %s241, 8
      %s243 = scalar_lea.vmem %s4, %s242
      %p244 = pneg %p154
      %p245 = pneg %p151
      %s246 = smul.u32 16, %s18
      %p247 = scmp.lt.s32.totalorder %s246, 31
      %s248 = scalar_select %p247, %s246, 31
      %s249 = smul.addr %s248, 8
      %s250 = scalar_lea.vmem %s5, %s249
      %p251 = pneg %p180
      %p252 = pneg %p177
      %s253 = smul.u32 16, %s18
      %p254 = scmp.lt.s32.totalorder %s253, 31
      %s255 = scalar_select %p254, %s253, 31
      %s256 = smul.addr %s255, 8
      %s257 = scalar_lea.vmem %s6, %s256
      %s258 = smul.u32 16, %s18
      %p259 = scmp.lt.s32.totalorder %s258, 31
      %s260 = scalar_select %p259, %s258, 31
      %s261 = smul.addr %s260, 8
      %s262 = scalar_lea.vmem %s0, %s261
      %s263 = smul.u32 16, %s18
      %s264 = smul.u32 16, %s18
      %p265 = scmp.lt.s32.totalorder %s264, 31
      %s266 = scalar_select %p265, %s264, 31
      %s267 = smul.addr %s266, 8
      %s268 = scalar_lea.vmem %s4, %s267
      %s269 = smul.u32 16, %s18
      %s270 = smul.u32 16, %s18
      %p271 = scmp.lt.s32.totalorder %s270, 31
      %s272 = scalar_select %p271, %s270, 31
      %s273 = smul.addr %s272, 8
      %s274 = scalar_lea.vmem %s5, %s273
      %s275 = smul.u32 16, %s18
      %s276 = smul.u32 16, %s18
      %p277 = scmp.lt.s32.totalorder %s276, 31
      %s278 = scalar_select %p277, %s276, 31
      %s279 = smul.addr %s278, 8
      %s280 = scalar_lea.vmem %s6, %s279
      %s281 = smul.u32 16, %s18
      %v282 = vld [vmem:[%s262] sm:$0xff]
      %v283 = vld [vmem:[%s262 + $0x8] sm:$0xff]
      %v284 = vld [vmem:[%s262 + $0x10] sm:$0xff]
      %v285 = vld [vmem:[%s262 + $0x18] sm:$0xff]
      %v286 = vld [vmem:[%s262 + $0x20] sm:$0xff]
      %v287 = vld [vmem:[%s262 + $0x28] sm:$0xff]
      %v288 = vld [vmem:[%s262 + $0x30] sm:$0xff]
      %v289 = vld [vmem:[%s262 + $0x38] sm:$0xff]
      %v290 = vld [vmem:[%s262 + $0x40] sm:$0xff]
      %v291 = vld [vmem:[%s262 + $0x48] sm:$0xff]
      %v292 = vld [vmem:[%s262 + $0x50] sm:$0xff]
      %v293 = vld [vmem:[%s262 + $0x58] sm:$0xff]
      %v294 = vld [vmem:[%s262 + $0x60] sm:$0xff]
      %v295 = vld [vmem:[%s262 + $0x68] sm:$0xff]
      %v296 = vld [vmem:[%s262 + $0x70] sm:$0xff]
      %v297 = vld [vmem:[%s262 + $0x78] sm:$0xff]
      %v298 = vld [vmem:[%s1] sm:$0xff]
      %v299 = vld [vmem:[%s1 + $0x8] sm:$0xff]
      %v300 = vld [vmem:[%s1 + $0x10] sm:$0xff]
      %v301 = vld [vmem:[%s1 + $0x18] sm:$0xff]
      %v302 = vld [vmem:[%s1 + $0x20] sm:$0xff]
      %v303 = vld [vmem:[%s1 + $0x28] sm:$0xff]
      %v304 = vld [vmem:[%s1 + $0x30] sm:$0xff]
      %v305 = vld [vmem:[%s1 + $0x38] sm:$0xff]
      %vm306 = vcmask 523264
      %v308 = vsel %vm306, %v282, 0
      %v311 = vsel %vm306, %v283, 0
      %v314 = vsel %vm306, %v284, 0
      %v317 = vsel %vm306, %v285, 0
      %v320 = vsel %vm306, %v286, 0
      %v323 = vsel %vm306, %v287, 0
      %v326 = vsel %vm306, %v288, 0
      %v329 = vsel %vm306, %v289, 0
      %v332 = vsel %vm306, %v290, 0
      %v335 = vsel %vm306, %v291, 0
      %v338 = vsel %vm306, %v292, 0
      %v341 = vsel %vm306, %v293, 0
      %v344 = vsel %vm306, %v294, 0
      %v347 = vsel %vm306, %v295, 0
      %v350 = vsel %vm306, %v296, 0
      %v353 = vsel %vm306, %v297, 0
      %355 = vmatpush.msra.mxu0 0.0
      %356 = vmatpush.msra.mxu0 0.0
      %357 = vmatpush.msra.mxu0 0.0
      %358 = vmatpush.msra.mxu0 0.0
      %359 = vmatpush.msra.mxu0 0.0
      %360 = vmatpush.msra.mxu0 0.0
      %361 = vmatpush.msra.mxu0 0.0
      %362 = vmatpush.msra.mxu0 0.0
      %363 = vmatpush.msra.mxu0 %v305
      %364 = vmatpush.msra.mxu0 %v304
      %365 = vmatpush.msra.mxu0 %v303
      %366 = vmatpush.msra.mxu0 %v302
      %367 = vmatpush.msra.mxu0 %v301
      %368 = vmatpush.msra.mxu0 %v300
      %369 = vmatpush.msra.mxu0 %v299
      %370 = vmatpush.msra.mxu0 %v298
      %371 = vmatmul.f32.gmra.mxu0 %v308
      %v372 = vpop.f32.mrf.mxu0
      %v373 = vadd.f32 0.0, %v372
      %374 = vmatmul.f32.gmra.mxu0 %v311
      %v375 = vpop.f32.mrf.mxu0
      %v376 = vadd.f32 0.0, %v375
      %377 = vmatmul.f32.gmra.mxu0 %v314
      %v378 = vpop.f32.mrf.mxu0
      %v379 = vadd.f32 0.0, %v378
      %380 = vmatmul.f32.gmra.mxu0 %v317
      %v381 = vpop.f32.mrf.mxu0
      %v382 = vadd.f32 0.0, %v381
      %383 = vmatmul.f32.gmra.mxu0 %v320
      %v384 = vpop.f32.mrf.mxu0
      %v385 = vadd.f32 0.0, %v384
      %386 = vmatmul.f32.gmra.mxu0 %v323
      %v387 = vpop.f32.mrf.mxu0
      %v388 = vadd.f32 0.0, %v387
      %389 = vmatmul.f32.gmra.mxu0 %v326
      %v390 = vpop.f32.mrf.mxu0
      %v391 = vadd.f32 0.0, %v390
      %392 = vmatmul.f32.gmra.mxu0 %v329
      %v393 = vpop.f32.mrf.mxu0
      %v394 = vadd.f32 0.0, %v393
      %395 = vmatmul.f32.gmra.mxu0 %v332
      %v396 = vpop.f32.mrf.mxu0
      %v397 = vadd.f32 0.0, %v396
      %398 = vmatmul.f32.gmra.mxu0 %v335
      %v399 = vpop.f32.mrf.mxu0
      %v400 = vadd.f32 0.0, %v399
      %401 = vmatmul.f32.gmra.mxu0 %v338
      %v402 = vpop.f32.mrf.mxu0
      %v403 = vadd.f32 0.0, %v402
      %404 = vmatmul.f32.gmra.mxu0 %v341
      %v405 = vpop.f32.mrf.mxu0
      %v406 = vadd.f32 0.0, %v405
      %407 = vmatmul.f32.gmra.mxu0 %v344
      %v408 = vpop.f32.mrf.mxu0
      %v409 = vadd.f32 0.0, %v408
      %410 = vmatmul.f32.gmra.mxu0 %v347
      %v411 = vpop.f32.mrf.mxu0
      %v412 = vadd.f32 0.0, %v411
      %413 = vmatmul.f32.gmra.mxu0 %v350
      %v414 = vpop.f32.mrf.mxu0
      %v415 = vadd.f32 0.0, %v414
      %416 = vmatmul.f32.gmra.mxu0 %v353
      %v417 = vpop.f32.mrf.mxu0
      %v418 = vadd.f32 0.0, %v417
      %419 = vdwg.mxu0
      %vm420 = vcmask 261120
      %421 = vst.msk [vmem:[%s268] sm:$0xff] %vm420, %v373
      %422 = vst.msk [vmem:[%s268 + $0x8] sm:$0xff] %vm420, %v376
      %423 = vst.msk [vmem:[%s268 + $0x10] sm:$0xff] %vm420, %v379
      %424 = vst.msk [vmem:[%s268 + $0x18] sm:$0xff] %vm420, %v382
      %425 = vst.msk [vmem:[%s268 + $0x20] sm:$0xff] %vm420, %v385
      %426 = vst.msk [vmem:[%s268 + $0x28] sm:$0xff] %vm420, %v388
      %427 = vst.msk [vmem:[%s268 + $0x30] sm:$0xff] %vm420, %v391
      %428 = vst.msk [vmem:[%s268 + $0x38] sm:$0xff] %vm420, %v394
      %429 = vst.msk [vmem:[%s268 + $0x40] sm:$0xff] %vm420, %v397
      %430 = vst.msk [vmem:[%s268 + $0x48] sm:$0xff] %vm420, %v400
      %431 = vst.msk [vmem:[%s268 + $0x50] sm:$0xff] %vm420, %v403
      %432 = vst.msk [vmem:[%s268 + $0x58] sm:$0xff] %vm420, %v406
      %433 = vst.msk [vmem:[%s268 + $0x60] sm:$0xff] %vm420, %v409
      %434 = vst.msk [vmem:[%s268 + $0x68] sm:$0xff] %vm420, %v412
      %435 = vst.msk [vmem:[%s268 + $0x70] sm:$0xff] %vm420, %v415
      %436 = vst.msk [vmem:[%s268 + $0x78] sm:$0xff] %vm420, %v418
      %v437 = vld [vmem:[%s2] sm:$0x1]
      %v438 = vperm.slane %v437, 0
      %v439 = vmul.f32 %v373, %v438
      %v440 = vmul.f32 %v376, %v438
      %v441 = vmul.f32 %v379, %v438
      %v442 = vmul.f32 %v382, %v438
      %v443 = vmul.f32 %v385, %v438
      %v444 = vmul.f32 %v388, %v438
      %v445 = vmul.f32 %v391, %v438
      %v446 = vmul.f32 %v394, %v438
      %v447 = vmul.f32 %v397, %v438
      %v448 = vmul.f32 %v400, %v438
      %v449 = vmul.f32 %v403, %v438
      %v450 = vmul.f32 %v406, %v438
      %v451 = vmul.f32 %v409, %v438
      %v452 = vmul.f32 %v412, %v438
      %v453 = vmul.f32 %v415, %v438
      %v454 = vmul.f32 %v418, %v438
      %vm455 = vcmask 130048
      %v456 = vsel %vm455, %v439, 0.0
      %457 = vadd.xlane.f32.xlu0 %v456
      %v458 = vpop.xlane.xlu0 %457
      %v459 = vsel %vm455, %v440, 0.0
      %460 = vadd.xlane.f32.xlu0 %v459
      %v461 = vpop.xlane.xlu0 %460
      %v462 = vsel %vm455, %v441, 0.0
      %463 = vadd.xlane.f32.xlu0 %v462
      %v464 = vpop.xlane.xlu0 %463
      %v465 = vsel %vm455, %v442, 0.0
      %466 = vadd.xlane.f32.xlu0 %v465
      %v467 = vpop.xlane.xlu0 %466
      %v468 = vsel %vm455, %v443, 0.0
      %469 = vadd.xlane.f32.xlu0 %v468
      %v470 = vpop.xlane.xlu0 %469
      %v471 = vsel %vm455, %v444, 0.0
      %472 = vadd.xlane.f32.xlu0 %v471
      %v473 = vpop.xlane.xlu0 %472
      %v474 = vsel %vm455, %v445, 0.0
      %475 = vadd.xlane.f32.xlu0 %v474
      %v476 = vpop.xlane.xlu0 %475
      %v477 = vsel %vm455, %v446, 0.0
      %478 = vadd.xlane.f32.xlu0 %v477
      %v479 = vpop.xlane.xlu0 %478
      %v480 = vsel %vm455, %v447, 0.0
      %481 = vadd.xlane.f32.xlu0 %v480
      %v482 = vpop.xlane.xlu0 %481
      %v483 = vsel %vm455, %v448, 0.0
      %484 = vadd.xlane.f32.xlu0 %v483
      %v485 = vpop.xlane.xlu0 %484
      %v486 = vsel %vm455, %v449, 0.0
      %487 = vadd.xlane.f32.xlu0 %v486
      %v488 = vpop.xlane.xlu0 %487
      %v489 = vsel %vm455, %v450, 0.0
      %490 = vadd.xlane.f32.xlu0 %v489
      %v491 = vpop.xlane.xlu0 %490
      %v492 = vsel %vm455, %v451, 0.0
      %493 = vadd.xlane.f32.xlu0 %v492
      %v494 = vpop.xlane.xlu0 %493
      %v495 = vsel %vm455, %v452, 0.0
      %496 = vadd.xlane.f32.xlu0 %v495
      %v497 = vpop.xlane.xlu0 %496
      %v498 = vsel %vm455, %v453, 0.0
      %499 = vadd.xlane.f32.xlu0 %v498
      %v500 = vpop.xlane.xlu0 %499
      %v501 = vsel %vm455, %v454, 0.0
      %502 = vadd.xlane.f32.xlu0 %v501
      %v503 = vpop.xlane.xlu0 %502
      %vm504 = vcmask 7168
      %505 = vst.msk [vmem:[%s274] sm:$0xff] %vm504, %v458
      %506 = vst.msk [vmem:[%s274 + $0x8] sm:$0xff] %vm504, %v461
      %507 = vst.msk [vmem:[%s274 + $0x10] sm:$0xff] %vm504, %v464
      %508 = vst.msk [vmem:[%s274 + $0x18] sm:$0xff] %vm504, %v467
      %509 = vst.msk [vmem:[%s274 + $0x20] sm:$0xff] %vm504, %v470
      %510 = vst.msk [vmem:[%s274 + $0x28] sm:$0xff] %vm504, %v473
      %511 = vst.msk [vmem:[%s274 + $0x30] sm:$0xff] %vm504, %v476
      %512 = vst.msk [vmem:[%s274 + $0x38] sm:$0xff] %vm504, %v479
      %513 = vst.msk [vmem:[%s274 + $0x40] sm:$0xff] %vm504, %v482
      %514 = vst.msk [vmem:[%s274 + $0x48] sm:$0xff] %vm504, %v485
      %515 = vst.msk [vmem:[%s274 + $0x50] sm:$0xff] %vm504, %v488
      %516 = vst.msk [vmem:[%s274 + $0x58] sm:$0xff] %vm504, %v491
      %517 = vst.msk [vmem:[%s274 + $0x60] sm:$0xff] %vm504, %v494
      %518 = vst.msk [vmem:[%s274 + $0x68] sm:$0xff] %vm504, %v497
      %519 = vst.msk [vmem:[%s274 + $0x70] sm:$0xff] %vm504, %v500
      %520 = vst.msk [vmem:[%s274 + $0x78] sm:$0xff] %vm504, %v503
      %v521 = vld [vmem:[%s3] sm:$0x1]
      %v522 = vperm.slane %v521, 0
      %v523 = vmul.f32 %v373, %v522
      %v524 = vmul.f32 %v376, %v522
      %v525 = vmul.f32 %v379, %v522
      %v526 = vmul.f32 %v382, %v522
      %v527 = vmul.f32 %v385, %v522
      %v528 = vmul.f32 %v388, %v522
      %v529 = vmul.f32 %v391, %v522
      %v530 = vmul.f32 %v394, %v522
      %v531 = vmul.f32 %v397, %v522
      %v532 = vmul.f32 %v400, %v522
      %v533 = vmul.f32 %v403, %v522
      %v534 = vmul.f32 %v406, %v522
      %v535 = vmul.f32 %v409, %v522
      %v536 = vmul.f32 %v412, %v522
      %v537 = vmul.f32 %v415, %v522
      %v538 = vmul.f32 %v418, %v522
      %v539 = vsel %vm455, %v523, 0.0
      %540 = vadd.xlane.f32.xlu0 %v539
      %v541 = vpop.xlane.xlu0 %540
      %v542 = vsel %vm455, %v524, 0.0
      %543 = vadd.xlane.f32.xlu0 %v542
      %v544 = vpop.xlane.xlu0 %543
      %v545 = vsel %vm455, %v525, 0.0
      %546 = vadd.xlane.f32.xlu0 %v545
      %v547 = vpop.xlane.xlu0 %546
      %v548 = vsel %vm455, %v526, 0.0
      %549 = vadd.xlane.f32.xlu0 %v548
      %v550 = vpop.xlane.xlu0 %549
      %v551 = vsel %vm455, %v527, 0.0
      %552 = vadd.xlane.f32.xlu0 %v551
      %v553 = vpop.xlane.xlu0 %552
      %v554 = vsel %vm455, %v528, 0.0
      %555 = vadd.xlane.f32.xlu0 %v554
      %v556 = vpop.xlane.xlu0 %555
      %v557 = vsel %vm455, %v529, 0.0
      %558 = vadd.xlane.f32.xlu0 %v557
      %v559 = vpop.xlane.xlu0 %558
      %v560 = vsel %vm455, %v530, 0.0
      %561 = vadd.xlane.f32.xlu0 %v560
      %v562 = vpop.xlane.xlu0 %561
      %v563 = vsel %vm455, %v531, 0.0
      %564 = vadd.xlane.f32.xlu0 %v563
      %v565 = vpop.xlane.xlu0 %564
      %v566 = vsel %vm455, %v532, 0.0
      %567 = vadd.xlane.f32.xlu0 %v566
      %v568 = vpop.xlane.xlu0 %567
      %v569 = vsel %vm455, %v533, 0.0
      %570 = vadd.xlane.f32.xlu0 %v569
      %v571 = vpop.xlane.xlu0 %570
      %v572 = vsel %vm455, %v534, 0.0
      %573 = vadd.xlane.f32.xlu0 %v572
      %v574 = vpop.xlane.xlu0 %573
      %v575 = vsel %vm455, %v535, 0.0
      %576 = vadd.xlane.f32.xlu0 %v575
      %v577 = vpop.xlane.xlu0 %576
      %v578 = vsel %vm455, %v536, 0.0
      %579 = vadd.xlane.f32.xlu0 %v578
      %v580 = vpop.xlane.xlu0 %579
      %v581 = vsel %vm455, %v537, 0.0
      %582 = vadd.xlane.f32.xlu0 %v581
      %v583 = vpop.xlane.xlu0 %582
      %v584 = vsel %vm455, %v538, 0.0
      %585 = vadd.xlane.f32.xlu0 %v584
      %v586 = vpop.xlane.xlu0 %585
      %587 = vst.msk [vmem:[%s280] sm:$0xff] %vm504, %v541
      %588 = vst.msk [vmem:[%s280 + $0x8] sm:$0xff] %vm504, %v544
      %589 = vst.msk [vmem:[%s280 + $0x10] sm:$0xff] %vm504, %v547
      %590 = vst.msk [vmem:[%s280 + $0x18] sm:$0xff] %vm504, %v550
      %591 = vst.msk [vmem:[%s280 + $0x20] sm:$0xff] %vm504, %v553
      %592 = vst.msk [vmem:[%s280 + $0x28] sm:$0xff] %vm504, %v556
      %593 = vst.msk [vmem:[%s280 + $0x30] sm:$0xff] %vm504, %v559
      %594 = vst.msk [vmem:[%s280 + $0x38] sm:$0xff] %vm504, %v562
      %595 = vst.msk [vmem:[%s280 + $0x40] sm:$0xff] %vm504, %v565
      %596 = vst.msk [vmem:[%s280 + $0x48] sm:$0xff] %vm504, %v568
      %597 = vst.msk [vmem:[%s280 + $0x50] sm:$0xff] %vm504, %v571
      %598 = vst.msk [vmem:[%s280 + $0x58] sm:$0xff] %vm504, %v574
      %599 = vst.msk [vmem:[%s280 + $0x60] sm:$0xff] %vm504, %v577
      %600 = vst.msk [vmem:[%s280 + $0x68] sm:$0xff] %vm504, %v580
      %601 = vst.msk [vmem:[%s280 + $0x70] sm:$0xff] %vm504, %v583
      %602 = vst.msk [vmem:[%s280 + $0x78] sm:$0xff] %vm504, %v586
      %v603 = vld [vmem:[%s2 + $0x1] sm:$0x1]
      %v604 = vperm.slane %v603, 0
      %606 = vrot.lane.b32.xlu0 %v604, 16
      %v607 = vpop.permute.xlu0 %606
      %v609 = vmul.f32 %v373, %v607
      %v610 = vmul.f32 %v376, %v607
      %v611 = vmul.f32 %v379, %v607
      %v612 = vmul.f32 %v382, %v607
      %v613 = vmul.f32 %v385, %v607
      %v614 = vmul.f32 %v388, %v607
      %v615 = vmul.f32 %v391, %v607
      %v616 = vmul.f32 %v394, %v607
      %v617 = vmul.f32 %v397, %v607
      %v618 = vmul.f32 %v400, %v607
      %v619 = vmul.f32 %v403, %v607
      %v620 = vmul.f32 %v406, %v607
      %v621 = vmul.f32 %v409, %v607
      %v622 = vmul.f32 %v412, %v607
      %v623 = vmul.f32 %v415, %v607
      %v624 = vmul.f32 %v418, %v607
      %641 = vrot.lane.b32.xlu0 %v609, 112
      %v642 = vpop.permute.xlu0 %641
      %643 = vrot.lane.b32.xlu0 %v610, 112
      %v644 = vpop.permute.xlu0 %643
      %645 = vrot.lane.b32.xlu0 %v611, 112
      %v646 = vpop.permute.xlu0 %645
      %647 = vrot.lane.b32.xlu0 %v612, 112
      %v648 = vpop.permute.xlu0 %647
      %649 = vrot.lane.b32.xlu0 %v613, 112
      %v650 = vpop.permute.xlu0 %649
      %651 = vrot.lane.b32.xlu0 %v614, 112
      %v652 = vpop.permute.xlu0 %651
      %653 = vrot.lane.b32.xlu0 %v615, 112
      %v654 = vpop.permute.xlu0 %653
      %655 = vrot.lane.b32.xlu0 %v616, 112
      %v656 = vpop.permute.xlu0 %655
      %657 = vrot.lane.b32.xlu0 %v617, 112
      %v658 = vpop.permute.xlu0 %657
      %659 = vrot.lane.b32.xlu0 %v618, 112
      %v660 = vpop.permute.xlu0 %659
      %661 = vrot.lane.b32.xlu0 %v619, 112
      %v662 = vpop.permute.xlu0 %661
      %663 = vrot.lane.b32.xlu0 %v620, 112
      %v664 = vpop.permute.xlu0 %663
      %665 = vrot.lane.b32.xlu0 %v621, 112
      %v666 = vpop.permute.xlu0 %665
      %667 = vrot.lane.b32.xlu0 %v622, 112
      %v668 = vpop.permute.xlu0 %667
      %669 = vrot.lane.b32.xlu0 %v623, 112
      %v670 = vpop.permute.xlu0 %669
      %671 = vrot.lane.b32.xlu0 %v624, 112
      %v672 = vpop.permute.xlu0 %671
      %v689 = vsel %vm455, %v642, 0.0
      %690 = vadd.xlane.f32.xlu0 %v689
      %v691 = vpop.xlane.xlu0 %690
      %v692 = vsel %vm455, %v644, 0.0
      %693 = vadd.xlane.f32.xlu0 %v692
      %v694 = vpop.xlane.xlu0 %693
      %v695 = vsel %vm455, %v646, 0.0
      %696 = vadd.xlane.f32.xlu0 %v695
      %v697 = vpop.xlane.xlu0 %696
      %v698 = vsel %vm455, %v648, 0.0
      %699 = vadd.xlane.f32.xlu0 %v698
      %v700 = vpop.xlane.xlu0 %699
      %v701 = vsel %vm455, %v650, 0.0
      %702 = vadd.xlane.f32.xlu0 %v701
      %v703 = vpop.xlane.xlu0 %702
      %v704 = vsel %vm455, %v652, 0.0
      %705 = vadd.xlane.f32.xlu0 %v704
      %v706 = vpop.xlane.xlu0 %705
      %v707 = vsel %vm455, %v654, 0.0
      %708 = vadd.xlane.f32.xlu0 %v707
      %v709 = vpop.xlane.xlu0 %708
      %v710 = vsel %vm455, %v656, 0.0
      %711 = vadd.xlane.f32.xlu0 %v710
      %v712 = vpop.xlane.xlu0 %711
      %v713 = vsel %vm455, %v658, 0.0
      %714 = vadd.xlane.f32.xlu0 %v713
      %v715 = vpop.xlane.xlu0 %714
      %v716 = vsel %vm455, %v660, 0.0
      %717 = vadd.xlane.f32.xlu0 %v716
      %v718 = vpop.xlane.xlu0 %717
      %v719 = vsel %vm455, %v662, 0.0
      %720 = vadd.xlane.f32.xlu0 %v719
      %v721 = vpop.xlane.xlu0 %720
      %v722 = vsel %vm455, %v664, 0.0
      %723 = vadd.xlane.f32.xlu0 %v722
      %v724 = vpop.xlane.xlu0 %723
      %v725 = vsel %vm455, %v666, 0.0
      %726 = vadd.xlane.f32.xlu0 %v725
      %v727 = vpop.xlane.xlu0 %726
      %v728 = vsel %vm455, %v668, 0.0
      %729 = vadd.xlane.f32.xlu0 %v728
      %v730 = vpop.xlane.xlu0 %729
      %v731 = vsel %vm455, %v670, 0.0
      %732 = vadd.xlane.f32.xlu0 %v731
      %v733 = vpop.xlane.xlu0 %732
      %v734 = vsel %vm455, %v672, 0.0
      %735 = vadd.xlane.f32.xlu0 %v734
      %v736 = vpop.xlane.xlu0 %735
      %vm737 = vcmask 15368
      %738 = vst.msk [vmem:[%s274] sm:$0xff] %vm737, %v691
      %739 = vst.msk [vmem:[%s274 + $0x8] sm:$0xff] %vm737, %v694
      %740 = vst.msk [vmem:[%s274 + $0x10] sm:$0xff] %vm737, %v697
      %741 = vst.msk [vmem:[%s274 + $0x18] sm:$0xff] %vm737, %v700
      %742 = vst.msk [vmem:[%s274 + $0x20] sm:$0xff] %vm737, %v703
      %743 = vst.msk [vmem:[%s274 + $0x28] sm:$0xff] %vm737, %v706
      %744 = vst.msk [vmem:[%s274 + $0x30] sm:$0xff] %vm737, %v709
      %745 = vst.msk [vmem:[%s274 + $0x38] sm:$0xff] %vm737, %v712
      %746 = vst.msk [vmem:[%s274 + $0x40] sm:$0xff] %vm737, %v715
      %747 = vst.msk [vmem:[%s274 + $0x48] sm:$0xff] %vm737, %v718
      %748 = vst.msk [vmem:[%s274 + $0x50] sm:$0xff] %vm737, %v721
      %749 = vst.msk [vmem:[%s274 + $0x58] sm:$0xff] %vm737, %v724
      %750 = vst.msk [vmem:[%s274 + $0x60] sm:$0xff] %vm737, %v727
      %751 = vst.msk [vmem:[%s274 + $0x68] sm:$0xff] %vm737, %v730
      %752 = vst.msk [vmem:[%s274 + $0x70] sm:$0xff] %vm737, %v733
      %753 = vst.msk [vmem:[%s274 + $0x78] sm:$0xff] %vm737, %v736
      %v754 = vld [vmem:[%s3 + $0x1] sm:$0x1]
      %v755 = vperm.slane %v754, 0
      %757 = vrot.lane.b32.xlu0 %v755, 16
      %v758 = vpop.permute.xlu0 %757
      %v760 = vmul.f32 %v373, %v758
      %v761 = vmul.f32 %v376, %v758
      %v762 = vmul.f32 %v379, %v758
      %v763 = vmul.f32 %v382, %v758
      %v764 = vmul.f32 %v385, %v758
      %v765 = vmul.f32 %v388, %v758
      %v766 = vmul.f32 %v391, %v758
      %v767 = vmul.f32 %v394, %v758
      %v768 = vmul.f32 %v397, %v758
      %v769 = vmul.f32 %v400, %v758
      %v770 = vmul.f32 %v403, %v758
      %v771 = vmul.f32 %v406, %v758
      %v772 = vmul.f32 %v409, %v758
      %v773 = vmul.f32 %v412, %v758
      %v774 = vmul.f32 %v415, %v758
      %v775 = vmul.f32 %v418, %v758
      %792 = vrot.lane.b32.xlu0 %v760, 112
      %v793 = vpop.permute.xlu0 %792
      %794 = vrot.lane.b32.xlu0 %v761, 112
      %v795 = vpop.permute.xlu0 %794
      %796 = vrot.lane.b32.xlu0 %v762, 112
      %v797 = vpop.permute.xlu0 %796
      %798 = vrot.lane.b32.xlu0 %v763, 112
      %v799 = vpop.permute.xlu0 %798
      %800 = vrot.lane.b32.xlu0 %v764, 112
      %v801 = vpop.permute.xlu0 %800
      %802 = vrot.lane.b32.xlu0 %v765, 112
      %v803 = vpop.permute.xlu0 %802
      %804 = vrot.lane.b32.xlu0 %v766, 112
      %v805 = vpop.permute.xlu0 %804
      %806 = vrot.lane.b32.xlu0 %v767, 112
      %v807 = vpop.permute.xlu0 %806
      %808 = vrot.lane.b32.xlu0 %v768, 112
      %v809 = vpop.permute.xlu0 %808
      %810 = vrot.lane.b32.xlu0 %v769, 112
      %v811 = vpop.permute.xlu0 %810
      %812 = vrot.lane.b32.xlu0 %v770, 112
      %v813 = vpop.permute.xlu0 %812
      %814 = vrot.lane.b32.xlu0 %v771, 112
      %v815 = vpop.permute.xlu0 %814
      %816 = vrot.lane.b32.xlu0 %v772, 112
      %v817 = vpop.permute.xlu0 %816
      %818 = vrot.lane.b32.xlu0 %v773, 112
      %v819 = vpop.permute.xlu0 %818
      %820 = vrot.lane.b32.xlu0 %v774, 112
      %v821 = vpop.permute.xlu0 %820
      %822 = vrot.lane.b32.xlu0 %v775, 112
      %v823 = vpop.permute.xlu0 %822
      %v840 = vsel %vm455, %v793, 0.0
      %841 = vadd.xlane.f32.xlu0 %v840
      %v842 = vpop.xlane.xlu0 %841
      %v843 = vsel %vm455, %v795, 0.0
      %844 = vadd.xlane.f32.xlu0 %v843
      %v845 = vpop.xlane.xlu0 %844
      %v846 = vsel %vm455, %v797, 0.0
      %847 = vadd.xlane.f32.xlu0 %v846
      %v848 = vpop.xlane.xlu0 %847
      %v849 = vsel %vm455, %v799, 0.0
      %850 = vadd.xlane.f32.xlu0 %v849
      %v851 = vpop.xlane.xlu0 %850
      %v852 = vsel %vm455, %v801, 0.0
      %853 = vadd.xlane.f32.xlu0 %v852
      %v854 = vpop.xlane.xlu0 %853
      %v855 = vsel %vm455, %v803, 0.0
      %856 = vadd.xlane.f32.xlu0 %v855
      %v857 = vpop.xlane.xlu0 %856
      %v858 = vsel %vm455, %v805, 0.0
      %859 = vadd.xlane.f32.xlu0 %v858
      %v860 = vpop.xlane.xlu0 %859
      %v861 = vsel %vm455, %v807, 0.0
      %862 = vadd.xlane.f32.xlu0 %v861
      %v863 = vpop.xlane.xlu0 %862
      %v864 = vsel %vm455, %v809, 0.0
      %865 = vadd.xlane.f32.xlu0 %v864
      %v866 = vpop.xlane.xlu0 %865
      %v867 = vsel %vm455, %v811, 0.0
      %868 = vadd.xlane.f32.xlu0 %v867
      %v869 = vpop.xlane.xlu0 %868
      %v870 = vsel %vm455, %v813, 0.0
      %871 = vadd.xlane.f32.xlu0 %v870
      %v872 = vpop.xlane.xlu0 %871
      %v873 = vsel %vm455, %v815, 0.0
      %874 = vadd.xlane.f32.xlu0 %v873
      %v875 = vpop.xlane.xlu0 %874
      %v876 = vsel %vm455, %v817, 0.0
      %877 = vadd.xlane.f32.xlu0 %v876
      %v878 = vpop.xlane.xlu0 %877
      %v879 = vsel %vm455, %v819, 0.0
      %880 = vadd.xlane.f32.xlu0 %v879
      %v881 = vpop.xlane.xlu0 %880
      %v882 = vsel %vm455, %v821, 0.0
      %883 = vadd.xlane.f32.xlu0 %v882
      %v884 = vpop.xlane.xlu0 %883
      %v885 = vsel %vm455, %v823, 0.0
      %886 = vadd.xlane.f32.xlu0 %v885
      %v887 = vpop.xlane.xlu0 %886
      %888 = vst.msk [vmem:[%s280] sm:$0xff] %vm737, %v842
      %889 = vst.msk [vmem:[%s280 + $0x8] sm:$0xff] %vm737, %v845
      %890 = vst.msk [vmem:[%s280 + $0x10] sm:$0xff] %vm737, %v848
      %891 = vst.msk [vmem:[%s280 + $0x18] sm:$0xff] %vm737, %v851
      %892 = vst.msk [vmem:[%s280 + $0x20] sm:$0xff] %vm737, %v854
      %893 = vst.msk [vmem:[%s280 + $0x28] sm:$0xff] %vm737, %v857
      %894 = vst.msk [vmem:[%s280 + $0x30] sm:$0xff] %vm737, %v860
      %895 = vst.msk [vmem:[%s280 + $0x38] sm:$0xff] %vm737, %v863
      %896 = vst.msk [vmem:[%s280 + $0x40] sm:$0xff] %vm737, %v866
      %897 = vst.msk [vmem:[%s280 + $0x48] sm:$0xff] %vm737, %v869
      %898 = vst.msk [vmem:[%s280 + $0x50] sm:$0xff] %vm737, %v872
      %899 = vst.msk [vmem:[%s280 + $0x58] sm:$0xff] %vm737, %v875
      %900 = vst.msk [vmem:[%s280 + $0x60] sm:$0xff] %vm737, %v878
      %901 = vst.msk [vmem:[%s280 + $0x68] sm:$0xff] %vm737, %v881
      %902 = vst.msk [vmem:[%s280 + $0x70] sm:$0xff] %vm737, %v884
      %903 = vst.msk [vmem:[%s280 + $0x78] sm:$0xff] %vm737, %v887
      %s904 = smul.u32 16, %s18
      %p905 = scmp.lt.s32.totalorder %s904, 31
      %s906 = scalar_select %p905, %s904, 31
      %s907 = smul.addr %s906, 8
      %s908 = scalar_lea.vmem %s4, %s907
      %s909 = smul.u32 16, %s18
      %p910 = scmp.lt.s32.totalorder %s909, 31
      %s911 = scalar_select %p910, %s909, 31
      %s912 = smul.addr %s911, 8
      %s913 = scalar_lea.vmem %s5, %s912
      %s914 = smul.u32 16, %s18
      %p915 = scmp.lt.s32.totalorder %s914, 31
      %s916 = scalar_select %p915, %s914, 31
      %s917 = smul.addr %s916, 8
      %s918 = scalar_lea.vmem %s6, %s917
      // Predicated region
      $region37: #{spgat_forward.4} parent=35 // pred_check
        %p919 = pneg %p125
      $region38: #{spgat_forward.4} parent=35 // pred_check_branch
        %921 = sbr.rel (%p919) target = $region40
      $region39: #{spgat_forward.4} parent=35 // pred_region
        %s922 = smul.u32 16, %s18
      $region40: #{spgat_forward.4} parent=35 // pred_fallthru
        _
      // Predicated region
      $region41: #{spgat_forward.4} parent=35 // pred_check
        %p923 = pneg %p151
      $region42: #{spgat_forward.4} parent=35 // pred_check_branch
        %925 = sbr.rel (%p923) target = $region44
      $region43: #{spgat_forward.4} parent=35 // pred_region
        %s926 = smul.u32 16, %s18
      $region44: #{spgat_forward.4} parent=35 // pred_fallthru
        _
      // Predicated region
      $region45: #{spgat_forward.4} parent=35 // pred_check
        %p927 = pneg %p177
      $region46: #{spgat_forward.4} parent=35 // pred_check_branch
        %929 = sbr.rel (%p927) target = $region48
      $region47: #{spgat_forward.4} parent=35 // pred_region
        %s930 = smul.u32 16, %s18
      $region48: #{spgat_forward.4} parent=35 // pred_fallthru
        _
    $region36: #{spgat_forward.4} parent=5 // pred_fallthru
      _
    %p931 = scmp.le.s32.totalorder 2, %s13
    // Predicated region
    $region49: #{spgat_forward.4} parent=5 // pred_check
      %p932 = pneg %p931
    $region50: #{spgat_forward.4} parent=5 // pred_check_branch
      %934 = sbr.rel (%p932) target = $region52
    $region51: #{spgat_forward.4} parent=5 // pred_region
      %s935 = ssub.s32 %s13, 2
      // Predicated region
      $region53: #{spgat_forward.4} parent=51 // pred_check
        %p936 = pneg %p131
      $region54: #{spgat_forward.4} parent=51 // pred_check_branch
        %938 = sbr.rel (%p936) target = $region56
      $region55: #{spgat_forward.4} parent=51 // pred_region
        %s939 = smul.u32 16, %s19
        %p940 = scmp.lt.s32.totalorder %s939, 31
        %s941 = scalar_select %p940, %s939, 31
        %s942 = smul.addr %s941, 8
        %s943 = scalar_lea.vmem %s4, %s942
      $region56: #{spgat_forward.4} parent=51 // pred_fallthru
        _
      // Predicated region
      $region57: #{spgat_forward.4} parent=51 // pred_check
        %p944 = pneg %p157
      $region58: #{spgat_forward.4} parent=51 // pred_check_branch
        %946 = sbr.rel (%p944) target = $region60
      $region59: #{spgat_forward.4} parent=51 // pred_region
        %s947 = smul.u32 16, %s19
        %p948 = scmp.lt.s32.totalorder %s947, 31
        %s949 = scalar_select %p948, %s947, 31
        %s950 = smul.addr %s949, 8
        %s951 = scalar_lea.vmem %s5, %s950
      $region60: #{spgat_forward.4} parent=51 // pred_fallthru
        _
      // Predicated region
      $region61: #{spgat_forward.4} parent=51 // pred_check
        %p952 = pneg %p183
      $region62: #{spgat_forward.4} parent=51 // pred_check_branch
        %954 = sbr.rel (%p952) target = $region64
      $region63: #{spgat_forward.4} parent=51 // pred_region
        %s955 = smul.u32 16, %s19
        %p956 = scmp.lt.s32.totalorder %s955, 31
        %s957 = scalar_select %p956, %s955, 31
        %s958 = smul.addr %s957, 8
        %s959 = scalar_lea.vmem %s6, %s958
      $region64: #{spgat_forward.4} parent=51 // pred_fallthru
        _
    $region52: #{spgat_forward.4} parent=5 // pred_fallthru
      _
  $region6: #{spgat_forward.4} parent=0 // loop_footer
    %s17 = sadd.s32 1, %s13
  $region7: #{spgat_forward.4} parent=0 // loop_footer_branch
    %12 = sbr.rel target = $region3
  $region8: #{spgat_forward.4} parent=0 // loop_exit
    _

// kernel: spgat_forward.6
$region0: #{spgat_forward.6}
  #allocation0 [shape = 'u32[]', space=smem, size = 0x4, offset = 0x4, fixed_abs, tag = 'smem constant byte address 0x4 - core index']
  #allocation1 [shape = 'u32[72,128]{1,0:T(1,128)}', space=vmem, size = 0x9000, scoped, tag = 'internal scratch']
  %s0 = inlined_call_operand.vmem [shape: f32[256,32], index: 0, kind: input, shape index: {}]
  %s1 = inlined_call_operand.vmem [shape: f32[32,8], index: 1, kind: input, shape index: {}]
  %s2 = inlined_call_operand.vmem [shape: f32[1,8], index: 2, kind: input, shape index: {}]
  %s3 = inlined_call_operand.vmem [shape: f32[1,8], index: 3, kind: input, shape index: {}]
  %s4 = inlined_call_operand.vmem [shape: f32[256,8], index: 4, kind: output, shape index: {0}]
  %s5 = inlined_call_operand.vmem [shape: f32[256,1], index: 5, kind: output, shape index: {1}]
  %s6 = inlined_call_operand.vmem [shape: f32[256,1], index: 6, kind: output, shape index: {2}]
  %7 = xla_tuple %s4, %s5, %s6
  %s8 = sld [smem:[#allocation0]]
  $region65: #{spgat_forward.6} parent=0
    _
  %s10 = ssub.s32 1, %s8
  %s11 = scalar_select 0, %s10, %s8
  loop: start=0, step=1, limit=4
  $region2: #{spgat_forward.6} parent=0 // loop_pre_header
    _
  $region3: #{spgat_forward.6} parent=0 // loop_header
    %s13 = sphi 0, %s17
    %p14 = scmp.ge.s32.totalorder %s13, 4
    %s23 = sphi 0, %s25
    %s26 = sphi 0, %s23
    %s27 = sphi 0, %s26
    %s43 = sphi 0, %s27
    %s47 = sphi 0, %s47
    %s49 = sphi 0, %s47
    %s50 = sphi 0, %s49
    %s64 = sphi 0, %s50
    %s68 = sphi 0, %s68
    %s70 = sphi 0, %s68
    %s71 = sphi 0, %s70
    %s85 = sphi 0, %s71
    %s89 = sphi 0, %s89
    %s91 = sphi 0, %s89
    %s92 = sphi 0, %s91
    %s106 = sphi 0, %s92
    %s112 = sphi 0, %s114
    %s115 = sphi 0, %s112
    %s116 = sphi 0, %s115
    %s132 = sphi 0, %s116
    %s138 = sphi 0, %s140
    %s141 = sphi 0, %s138
    %s142 = sphi 0, %s141
    %s158 = sphi 0, %s142
    %s164 = sphi 0, %s166
    %s167 = sphi 0, %s164
    %s168 = sphi 0, %s167
    %s184 = sphi 0, %s168
  $region4: #{spgat_forward.6} parent=0 // loop_header_branch
    %16 = sbr.rel (%p14) target = $region8
  $region5: #{spgat_forward.6} parent=0 // loop_body
    %s18 = ssub.s32 %s13, 1
    %s19 = ssub.s32 %s13, 2
    %s20 = sadd.s32 %s13, 1
    %s21 = ssub.s32 %s13, %s20
    %p22 = scmp.eq.s32.totalorder %s21, 0
    %s24 = sadd.s32 %s23, 1
    %s25 = scalar_select %p22, %s23, %s24
    %p28 = pneg %p22
    %p29 = scmp.eq.s32.totalorder %s13, 1
    %p30 = por %p28, %p29
    %p31 = scmp.ne.s32.totalorder %s23, %s26
    %p32 = scmp.eq.s32.totalorder %s13, 0
    %p33 = por %p31, %p32
    %p34 = scmp.ne.s32.totalorder %s23, %s26
    %p35 = scmp.eq.s32.totalorder %s18, 1
    %p36 = por %p34, %p35
    %p37 = scmp.ne.s32.totalorder %s26, %s27
    %p38 = scmp.eq.s32.totalorder %s18, 0
    %p39 = por %p37, %p38
    %p40 = scmp.ne.s32.totalorder %s26, %s27
    %p41 = scmp.eq.s32.totalorder %s19, 1
    %p42 = por %p40, %p41
    %p44 = scmp.ne.s32.totalorder %s27, %s43
    %p45 = scmp.eq.s32.totalorder %s19, 0
    %p46 = por %p44, %p45
    %s48 = sadd.s32 %s47, 1
    %p51 = scmp.eq.s32.totalorder %s13, 1
    %p52 = scmp.ne.s32.totalorder %s47, %s49
    %p53 = scmp.eq.s32.totalorder %s13, 0
    %p54 = por %p52, %p53
    %p55 = scmp.ne.s32.totalorder %s47, %s49
    %p56 = scmp.eq.s32.totalorder %s18, 1
    %p57 = por %p55, %p56
    %p58 = scmp.ne.s32.totalorder %s49, %s50
    %p59 = scmp.eq.s32.totalorder %s18, 0
    %p60 = por %p58, %p59
    %p61 = scmp.ne.s32.totalorder %s49, %s50
    %p62 = scmp.eq.s32.totalorder %s19, 1
    %p63 = por %p61, %p62
    %p65 = scmp.ne.s32.totalorder %s50, %s64
    %p66 = scmp.eq.s32.totalorder %s19, 0
    %p67 = por %p65, %p66
    %s69 = sadd.s32 %s68, 1
    %p72 = scmp.eq.s32.totalorder %s13, 1
    %p73 = scmp.ne.s32.totalorder %s68, %s70
    %p74 = scmp.eq.s32.totalorder %s13, 0
    %p75 = por %p73, %p74
    %p76 = scmp.ne.s32.totalorder %s68, %s70
    %p77 = scmp.eq.s32.totalorder %s18, 1
    %p78 = por %p76, %p77
    %p79 = scmp.ne.s32.totalorder %s70, %s71
    %p80 = scmp.eq.s32.totalorder %s18, 0
    %p81 = por %p79, %p80
    %p82 = scmp.ne.s32.totalorder %s70, %s71
    %p83 = scmp.eq.s32.totalorder %s19, 1
    %p84 = por %p82, %p83
    %p86 = scmp.ne.s32.totalorder %s71, %s85
    %p87 = scmp.eq.s32.totalorder %s19, 0
    %p88 = por %p86, %p87
    %s90 = sadd.s32 %s89, 1
    %p93 = scmp.eq.s32.totalorder %s13, 1
    %p94 = scmp.ne.s32.totalorder %s89, %s91
    %p95 = scmp.eq.s32.totalorder %s13, 0
    %p96 = por %p94, %p95
    %p97 = scmp.ne.s32.totalorder %s89, %s91
    %p98 = scmp.eq.s32.totalorder %s18, 1
    %p99 = por %p97, %p98
    %p100 = scmp.ne.s32.totalorder %s91, %s92
    %p101 = scmp.eq.s32.totalorder %s18, 0
    %p102 = por %p100, %p101
    %p103 = scmp.ne.s32.totalorder %s91, %s92
    %p104 = scmp.eq.s32.totalorder %s19, 1
    %p105 = por %p103, %p104
    %p107 = scmp.ne.s32.totalorder %s92, %s106
    %p108 = scmp.eq.s32.totalorder %s19, 0
    %p109 = por %p107, %p108
    %s110 = ssub.s32 %s13, %s20
    %p111 = scmp.eq.s32.totalorder %s110, 0
    %s113 = sadd.s32 %s112, 1
    %s114 = scalar_select %p111, %s112, %s113
    %p117 = pneg %p111
    %p118 = scmp.eq.s32.totalorder %s13, 1
    %p119 = por %p117, %p118
    %p120 = scmp.ne.s32.totalorder %s112, %s115
    %p121 = scmp.eq.s32.totalorder %s13, 0
    %p122 = por %p120, %p121
    %p123 = scmp.ne.s32.totalorder %s112, %s115
    %p124 = scmp.eq.s32.totalorder %s18, 1
    %p125 = por %p123, %p124
    %p126 = scmp.ne.s32.totalorder %s115, %s116
    %p127 = scmp.eq.s32.totalorder %s18, 0
    %p128 = por %p126, %p127
    %p129 = scmp.ne.s32.totalorder %s115, %s116
    %p130 = scmp.eq.s32.totalorder %s19, 1
    %p131 = por %p129, %p130
    %p133 = scmp.ne.s32.totalorder %s116, %s132
    %p134 = scmp.eq.s32.totalorder %s19, 0
    %p135 = por %p133, %p134
    %s136 = ssub.s32 %s13, %s20
    %p137 = scmp.eq.s32.totalorder %s136, 0
    %s139 = sadd.s32 %s138, 1
    %s140 = scalar_select %p137, %s138, %s139
    %p143 = pneg %p137
    %p144 = scmp.eq.s32.totalorder %s13, 1
    %p145 = por %p143, %p144
    %p146 = scmp.ne.s32.totalorder %s138, %s141
    %p147 = scmp.eq.s32.totalorder %s13, 0
    %p148 = por %p146, %p147
    %p149 = scmp.ne.s32.totalorder %s138, %s141
    %p150 = scmp.eq.s32.totalorder %s18, 1
    %p151 = por %p149, %p150
    %p152 = scmp.ne.s32.totalorder %s141, %s142
    %p153 = scmp.eq.s32.totalorder %s18, 0
    %p154 = por %p152, %p153
    %p155 = scmp.ne.s32.totalorder %s141, %s142
    %p156 = scmp.eq.s32.totalorder %s19, 1
    %p157 = por %p155, %p156
    %p159 = scmp.ne.s32.totalorder %s142, %s158
    %p160 = scmp.eq.s32.totalorder %s19, 0
    %p161 = por %p159, %p160
    %s162 = ssub.s32 %s13, %s20
    %p163 = scmp.eq.s32.totalorder %s162, 0
    %s165 = sadd.s32 %s164, 1
    %s166 = scalar_select %p163, %s164, %s165
    %p169 = pneg %p163
    %p170 = scmp.eq.s32.totalorder %s13, 1
    %p171 = por %p169, %p170
    %p172 = scmp.ne.s32.totalorder %s164, %s167
    %p173 = scmp.eq.s32.totalorder %s13, 0
    %p174 = por %p172, %p173
    %p175 = scmp.ne.s32.totalorder %s164, %s167
    %p176 = scmp.eq.s32.totalorder %s18, 1
    %p177 = por %p175, %p176
    %p178 = scmp.ne.s32.totalorder %s167, %s168
    %p179 = scmp.eq.s32.totalorder %s18, 0
    %p180 = por %p178, %p179
    %p181 = scmp.ne.s32.totalorder %s167, %s168
    %p182 = scmp.eq.s32.totalorder %s19, 1
    %p183 = por %p181, %p182
    %p185 = scmp.ne.s32.totalorder %s168, %s184
    %p186 = scmp.eq.s32.totalorder %s19, 0
    %p187 = por %p185, %p186
    %p188 = scmp.le.s32.totalorder 1, %s13
    %p189 = scmp.lt.s32.totalorder %s13, 3
    %p190 = pnand %p188, %p189
    %p191 = pneg %p190
    // Predicated region
    $region9: #{spgat_forward.6} parent=5 // pred_check
      _
    $region10: #{spgat_forward.6} parent=5 // pred_check_branch
      %193 = sbr.rel (%p190) target = $region12
    $region11: #{spgat_forward.6} parent=5 // pred_region
      %s194 = ssub.s32 %s13, 1
      // Predicated region
      $region13: #{spgat_forward.6} parent=11 // pred_check
        %p195 = pneg %p60
      $region14: #{spgat_forward.6} parent=11 // pred_check_branch
        %197 = sbr.rel (%p195) target = $region16
      $region15: #{spgat_forward.6} parent=11 // pred_region
        _
      $region16: #{spgat_forward.6} parent=11 // pred_fallthru
        _
      // Predicated region
      $region17: #{spgat_forward.6} parent=11 // pred_check
        %p198 = pneg %p81
      $region18: #{spgat_forward.6} parent=11 // pred_check_branch
        %200 = sbr.rel (%p198) target = $region20
      $region19: #{spgat_forward.6} parent=11 // pred_region
        _
      $region20: #{spgat_forward.6} parent=11 // pred_fallthru
        _
      // Predicated region
      $region21: #{spgat_forward.6} parent=11 // pred_check
        %p201 = pneg %p102
      $region22: #{spgat_forward.6} parent=11 // pred_check_branch
        %203 = sbr.rel (%p201) target = $region24
      $region23: #{spgat_forward.6} parent=11 // pred_region
        _
      $region24: #{spgat_forward.6} parent=11 // pred_fallthru
        _
    $region12: #{spgat_forward.6} parent=5 // pred_fallthru
      _
    %p204 = scmp.lt.s32.totalorder %s13, 2
    // Predicated region
    $region25: #{spgat_forward.6} parent=5 // pred_check
      %p205 = pneg %p204
    $region26: #{spgat_forward.6} parent=5 // pred_check_branch
      %207 = sbr.rel (%p205) target = $region28
    $region27: #{spgat_forward.6} parent=5 // pred_region
      // Predicated region
      $region29: #{spgat_forward.6} parent=27 // pred_check
        %p208 = pneg %p33
      $region30: #{spgat_forward.6} parent=27 // pred_check_branch
        %210 = sbr.rel (%p208) target = $region32
      $region31: #{spgat_forward.6} parent=27 // pred_region
        %s211 = smul.u32 16, %s13
        %p212 = scmp.lt.s32.totalorder %s211, 31
        %s213 = scalar_select %p212, %s211, 31
        %s214 = smul.addr %s213, 8
        %s215 = scalar_lea.vmem %s0, %s214
        %s216 = smul.u32 16, %s13
      $region32: #{spgat_forward.6} parent=27 // pred_fallthru
        _
    $region28: #{spgat_forward.6} parent=5 // pred_fallthru
      _
    %p217 = scmp.le.s32.totalorder 1, %s13
    %p218 = scmp.lt.s32.totalorder %s13, 3
    %p219 = pnand %p217, %p218
    %p220 = pneg %p219
    // Predicated region
    $region33: #{spgat_forward.6} parent=5 // pred_check
      _
    $region34: #{spgat_forward.6} parent=5 // pred_check_branch
      %222 = sbr.rel (%p219) target = $region36
    $region35: #{spgat_forward.6} parent=5 // pred_region
      %s223 = ssub.s32 %s13, 1
      %s224 = smul.u32 16, %s18
      %p225 = scmp.lt.s32.totalorder %s224, 31
      %s226 = scalar_select %p225, %s224, 31
      %s227 = smul.addr %s226, 8
      %s228 = scalar_lea.vmem %s0, %s227
      %p229 = pneg %p39
      %p230 = pneg %p36
      %p231 = pneg %p60
      %p232 = pneg %p57
      %p233 = pneg %p81
      %p234 = pneg %p78
      %p235 = pneg %p102
      %p236 = pneg %p99
      %p237 = pneg %p128
      %p238 = pneg %p125
      %s239 = smul.u32 16, %s18
      %p240 = scmp.lt.s32.totalorder %s239, 31
      %s241 = scalar_select %p240, %s239, 31
      %s242 = smul.addr %s241, 8
      %s243 = scalar_lea.vmem %s4, %s242
      %p244 = pneg %p154
      %p245 = pneg %p151
      %s246 = smul.u32 16, %s18
      %p247 = scmp.lt.s32.totalorder %s246, 31
      %s248 = scalar_select %p247, %s246, 31
      %s249 = smul.addr %s248, 8
      %s250 = scalar_lea.vmem %s5, %s249
      %p251 = pneg %p180
      %p252 = pneg %p177
      %s253 = smul.u32 16, %s18
      %p254 = scmp.lt.s32.totalorder %s253, 31
      %s255 = scalar_select %p254, %s253, 31
      %s256 = smul.addr %s255, 8
      %s257 = scalar_lea.vmem %s6, %s256
      %s258 = smul.u32 16, %s18
      %p259 = scmp.lt.s32.totalorder %s258, 31
      %s260 = scalar_select %p259, %s258, 31
      %s261 = smul.addr %s260, 8
      %s262 = scalar_lea.vmem %s0, %s261
      %s263 = smul.u32 16, %s18
      %s264 = smul.u32 16, %s18
      %p265 = scmp.lt.s32.totalorder %s264, 31
      %s266 = scalar_select %p265, %s264, 31
      %s267 = smul.addr %s266, 8
      %s268 = scalar_lea.vmem %s4, %s267
      %s269 = smul.u32 16, %s18
      %s270 = smul.u32 16, %s18
      %p271 = scmp.lt.s32.totalorder %s270, 31
      %s272 = scalar_select %p271, %s270, 31
      %s273 = smul.addr %s272, 8
      %s274 = scalar_lea.vmem %s5, %s273
      %s275 = smul.u32 16, %s18
      %s276 = smul.u32 16, %s18
      %p277 = scmp.lt.s32.totalorder %s276, 31
      %s278 = scalar_select %p277, %s276, 31
      %s279 = smul.addr %s278, 8
      %s280 = scalar_lea.vmem %s6, %s279
      %s281 = smul.u32 16, %s18
      %v282 = vld [vmem:[%s262] sm:$0xff]
      %v283 = vld [vmem:[%s262 + $0x8] sm:$0xff]
      %v284 = vld [vmem:[%s262 + $0x10] sm:$0xff]
      %v285 = vld [vmem:[%s262 + $0x18] sm:$0xff]
      %v286 = vld [vmem:[%s262 + $0x20] sm:$0xff]
      %v287 = vld [vmem:[%s262 + $0x28] sm:$0xff]
      %v288 = vld [vmem:[%s262 + $0x30] sm:$0xff]
      %v289 = vld [vmem:[%s262 + $0x38] sm:$0xff]
      %v290 = vld [vmem:[%s262 + $0x40] sm:$0xff]
      %v291 = vld [vmem:[%s262 + $0x48] sm:$0xff]
      %v292 = vld [vmem:[%s262 + $0x50] sm:$0xff]
      %v293 = vld [vmem:[%s262 + $0x58] sm:$0xff]
      %v294 = vld [vmem:[%s262 + $0x60] sm:$0xff]
      %v295 = vld [vmem:[%s262 + $0x68] sm:$0xff]
      %v296 = vld [vmem:[%s262 + $0x70] sm:$0xff]
      %v297 = vld [vmem:[%s262 + $0x78] sm:$0xff]
      %v298 = vld [vmem:[%s1] sm:$0xff]
      %v299 = vld [vmem:[%s1 + $0x8] sm:$0xff]
      %v300 = vld [vmem:[%s1 + $0x10] sm:$0xff]
      %v301 = vld [vmem:[%s1 + $0x18] sm:$0xff]
      %vm302 = vcmask 261120
      %v304 = vsel %vm302, %v282, 0
      %v307 = vsel %vm302, %v283, 0
      %v310 = vsel %vm302, %v284, 0
      %v313 = vsel %vm302, %v285, 0
      %v316 = vsel %vm302, %v286, 0
      %v319 = vsel %vm302, %v287, 0
      %v322 = vsel %vm302, %v288, 0
      %v325 = vsel %vm302, %v289, 0
      %v328 = vsel %vm302, %v290, 0
      %v331 = vsel %vm302, %v291, 0
      %v334 = vsel %vm302, %v292, 0
      %v337 = vsel %vm302, %v293, 0
      %v340 = vsel %vm302, %v294, 0
      %v343 = vsel %vm302, %v295, 0
      %v346 = vsel %vm302, %v296, 0
      %v349 = vsel %vm302, %v297, 0
      %351 = vmatpush.msra.mxu0 0.0
      %352 = vmatpush.msra.mxu0 0.0
      %353 = vmatpush.msra.mxu0 0.0
      %354 = vmatpush.msra.mxu0 0.0
      %355 = vmatpush.msra.mxu0 0.0
      %356 = vmatpush.msra.mxu0 0.0
      %357 = vmatpush.msra.mxu0 0.0
      %358 = vmatpush.msra.mxu0 0.0
      %359 = vmatpush.msra.mxu0 0.0
      %360 = vmatpush.msra.mxu0 0.0
      %361 = vmatpush.msra.mxu0 0.0
      %362 = vmatpush.msra.mxu0 0.0
      %363 = vmatpush.msra.mxu0 %v301
      %364 = vmatpush.msra.mxu0 %v300
      %365 = vmatpush.msra.mxu0 %v299
      %366 = vmatpush.msra.mxu0 %v298
      %367 = vmatmul.f32.gmra.mxu0 %v304
      %v368 = vpop.f32.mrf.mxu0
      %v369 = vadd.f32 0.0, %v368
      %370 = vmatmul.f32.gmra.mxu0 %v307
      %v371 = vpop.f32.mrf.mxu0
      %v372 = vadd.f32 0.0, %v371
      %373 = vmatmul.f32.gmra.mxu0 %v310
      %v374 = vpop.f32.mrf.mxu0
      %v375 = vadd.f32 0.0, %v374
      %376 = vmatmul.f32.gmra.mxu0 %v313
      %v377 = vpop.f32.mrf.mxu0
      %v378 = vadd.f32 0.0, %v377
      %379 = vmatmul.f32.gmra.mxu0 %v316
      %v380 = vpop.f32.mrf.mxu0
      %v381 = vadd.f32 0.0, %v380
      %382 = vmatmul.f32.gmra.mxu0 %v319
      %v383 = vpop.f32.mrf.mxu0
      %v384 = vadd.f32 0.0, %v383
      %385 = vmatmul.f32.gmra.mxu0 %v322
      %v386 = vpop.f32.mrf.mxu0
      %v387 = vadd.f32 0.0, %v386
      %388 = vmatmul.f32.gmra.mxu0 %v325
      %v389 = vpop.f32.mrf.mxu0
      %v390 = vadd.f32 0.0, %v389
      %391 = vmatmul.f32.gmra.mxu0 %v328
      %v392 = vpop.f32.mrf.mxu0
      %v393 = vadd.f32 0.0, %v392
      %394 = vmatmul.f32.gmra.mxu0 %v331
      %v395 = vpop.f32.mrf.mxu0
      %v396 = vadd.f32 0.0, %v395
      %397 = vmatmul.f32.gmra.mxu0 %v334
      %v398 = vpop.f32.mrf.mxu0
      %v399 = vadd.f32 0.0, %v398
      %400 = vmatmul.f32.gmra.mxu0 %v337
      %v401 = vpop.f32.mrf.mxu0
      %v402 = vadd.f32 0.0, %v401
      %403 = vmatmul.f32.gmra.mxu0 %v340
      %v404 = vpop.f32.mrf.mxu0
      %v405 = vadd.f32 0.0, %v404
      %406 = vmatmul.f32.gmra.mxu0 %v343
      %v407 = vpop.f32.mrf.mxu0
      %v408 = vadd.f32 0.0, %v407
      %409 = vmatmul.f32.gmra.mxu0 %v346
      %v410 = vpop.f32.mrf.mxu0
      %v411 = vadd.f32 0.0, %v410
      %412 = vmatmul.f32.gmra.mxu0 %v349
      %v413 = vpop.f32.mrf.mxu0
      %v414 = vadd.f32 0.0, %v413
      %415 = vdwg.mxu0
      %vm416 = vcmask 64512
      %417 = vst.msk [vmem:[%s268] sm:$0xff] %vm416, %v369
      %418 = vst.msk [vmem:[%s268 + $0x8] sm:$0xff] %vm416, %v372
      %419 = vst.msk [vmem:[%s268 + $0x10] sm:$0xff] %vm416, %v375
      %420 = vst.msk [vmem:[%s268 + $0x18] sm:$0xff] %vm416, %v378
      %421 = vst.msk [vmem:[%s268 + $0x20] sm:$0xff] %vm416, %v381
      %422 = vst.msk [vmem:[%s268 + $0x28] sm:$0xff] %vm416, %v384
      %423 = vst.msk [vmem:[%s268 + $0x30] sm:$0xff] %vm416, %v387
      %424 = vst.msk [vmem:[%s268 + $0x38] sm:$0xff] %vm416, %v390
      %425 = vst.msk [vmem:[%s268 + $0x40] sm:$0xff] %vm416, %v393
      %426 = vst.msk [vmem:[%s268 + $0x48] sm:$0xff] %vm416, %v396
      %427 = vst.msk [vmem:[%s268 + $0x50] sm:$0xff] %vm416, %v399
      %428 = vst.msk [vmem:[%s268 + $0x58] sm:$0xff] %vm416, %v402
      %429 = vst.msk [vmem:[%s268 + $0x60] sm:$0xff] %vm416, %v405
      %430 = vst.msk [vmem:[%s268 + $0x68] sm:$0xff] %vm416, %v408
      %431 = vst.msk [vmem:[%s268 + $0x70] sm:$0xff] %vm416, %v411
      %432 = vst.msk [vmem:[%s268 + $0x78] sm:$0xff] %vm416, %v414
      %v433 = vld [vmem:[%s2] sm:$0x1]
      %v435 = vperm.slane %v433, 0
      %v437 = vmul.f32 %v369, %v435
      %v438 = vmul.f32 %v372, %v435
      %v439 = vmul.f32 %v375, %v435
      %v440 = vmul.f32 %v378, %v435
      %v441 = vmul.f32 %v381, %v435
      %v442 = vmul.f32 %v384, %v435
      %v443 = vmul.f32 %v387, %v435
      %v444 = vmul.f32 %v390, %v435
      %v445 = vmul.f32 %v393, %v435
      %v446 = vmul.f32 %v396, %v435
      %v447 = vmul.f32 %v399, %v435
      %v448 = vmul.f32 %v402, %v435
      %v449 = vmul.f32 %v405, %v435
      %v450 = vmul.f32 %v408, %v435
      %v451 = vmul.f32 %v411, %v435
      %v452 = vmul.f32 %v414, %v435
      %v453 = vsel %vm416, %v437, 0.0
      %454 = vadd.xlane.f32.xlu0 %v453
      %v455 = vpop.xlane.xlu0 %454
      %v456 = vsel %vm416, %v438, 0.0
      %457 = vadd.xlane.f32.xlu0 %v456
      %v458 = vpop.xlane.xlu0 %457
      %v459 = vsel %vm416, %v439, 0.0
      %460 = vadd.xlane.f32.xlu0 %v459
      %v461 = vpop.xlane.xlu0 %460
      %v462 = vsel %vm416, %v440, 0.0
      %463 = vadd.xlane.f32.xlu0 %v462
      %v464 = vpop.xlane.xlu0 %463
      %v465 = vsel %vm416, %v441, 0.0
      %466 = vadd.xlane.f32.xlu0 %v465
      %v467 = vpop.xlane.xlu0 %466
      %v468 = vsel %vm416, %v442, 0.0
      %469 = vadd.xlane.f32.xlu0 %v468
      %v470 = vpop.xlane.xlu0 %469
      %v471 = vsel %vm416, %v443, 0.0
      %472 = vadd.xlane.f32.xlu0 %v471
      %v473 = vpop.xlane.xlu0 %472
      %v474 = vsel %vm416, %v444, 0.0
      %475 = vadd.xlane.f32.xlu0 %v474
      %v476 = vpop.xlane.xlu0 %475
      %v477 = vsel %vm416, %v445, 0.0
      %478 = vadd.xlane.f32.xlu0 %v477
      %v479 = vpop.xlane.xlu0 %478
      %v480 = vsel %vm416, %v446, 0.0
      %481 = vadd.xlane.f32.xlu0 %v480
      %v482 = vpop.xlane.xlu0 %481
      %v483 = vsel %vm416, %v447, 0.0
      %484 = vadd.xlane.f32.xlu0 %v483
      %v485 = vpop.xlane.xlu0 %484
      %v486 = vsel %vm416, %v448, 0.0
      %487 = vadd.xlane.f32.xlu0 %v486
      %v488 = vpop.xlane.xlu0 %487
      %v489 = vsel %vm416, %v449, 0.0
      %490 = vadd.xlane.f32.xlu0 %v489
      %v491 = vpop.xlane.xlu0 %490
      %v492 = vsel %vm416, %v450, 0.0
      %493 = vadd.xlane.f32.xlu0 %v492
      %v494 = vpop.xlane.xlu0 %493
      %v495 = vsel %vm416, %v451, 0.0
      %496 = vadd.xlane.f32.xlu0 %v495
      %v497 = vpop.xlane.xlu0 %496
      %v498 = vsel %vm416, %v452, 0.0
      %499 = vadd.xlane.f32.xlu0 %v498
      %v500 = vpop.xlane.xlu0 %499
      %vm501 = vcmask 7168
      %502 = vst.msk [vmem:[%s274] sm:$0xff] %vm501, %v455
      %503 = vst.msk [vmem:[%s274 + $0x8] sm:$0xff] %vm501, %v458
      %504 = vst.msk [vmem:[%s274 + $0x10] sm:$0xff] %vm501, %v461
      %505 = vst.msk [vmem:[%s274 + $0x18] sm:$0xff] %vm501, %v464
      %506 = vst.msk [vmem:[%s274 + $0x20] sm:$0xff] %vm501, %v467
      %507 = vst.msk [vmem:[%s274 + $0x28] sm:$0xff] %vm501, %v470
      %508 = vst.msk [vmem:[%s274 + $0x30] sm:$0xff] %vm501, %v473
      %509 = vst.msk [vmem:[%s274 + $0x38] sm:$0xff] %vm501, %v476
      %510 = vst.msk [vmem:[%s274 + $0x40] sm:$0xff] %vm501, %v479
      %511 = vst.msk [vmem:[%s274 + $0x48] sm:$0xff] %vm501, %v482
      %512 = vst.msk [vmem:[%s274 + $0x50] sm:$0xff] %vm501, %v485
      %513 = vst.msk [vmem:[%s274 + $0x58] sm:$0xff] %vm501, %v488
      %514 = vst.msk [vmem:[%s274 + $0x60] sm:$0xff] %vm501, %v491
      %515 = vst.msk [vmem:[%s274 + $0x68] sm:$0xff] %vm501, %v494
      %516 = vst.msk [vmem:[%s274 + $0x70] sm:$0xff] %vm501, %v497
      %517 = vst.msk [vmem:[%s274 + $0x78] sm:$0xff] %vm501, %v500
      %v518 = vld [vmem:[%s3] sm:$0x1]
      %v520 = vperm.slane %v518, 0
      %v522 = vmul.f32 %v369, %v520
      %v523 = vmul.f32 %v372, %v520
      %v524 = vmul.f32 %v375, %v520
      %v525 = vmul.f32 %v378, %v520
      %v526 = vmul.f32 %v381, %v520
      %v527 = vmul.f32 %v384, %v520
      %v528 = vmul.f32 %v387, %v520
      %v529 = vmul.f32 %v390, %v520
      %v530 = vmul.f32 %v393, %v520
      %v531 = vmul.f32 %v396, %v520
      %v532 = vmul.f32 %v399, %v520
      %v533 = vmul.f32 %v402, %v520
      %v534 = vmul.f32 %v405, %v520
      %v535 = vmul.f32 %v408, %v520
      %v536 = vmul.f32 %v411, %v520
      %v537 = vmul.f32 %v414, %v520
      %v538 = vsel %vm416, %v522, 0.0
      %539 = vadd.xlane.f32.xlu0 %v538
      %v540 = vpop.xlane.xlu0 %539
      %v541 = vsel %vm416, %v523, 0.0
      %542 = vadd.xlane.f32.xlu0 %v541
      %v543 = vpop.xlane.xlu0 %542
      %v544 = vsel %vm416, %v524, 0.0
      %545 = vadd.xlane.f32.xlu0 %v544
      %v546 = vpop.xlane.xlu0 %545
      %v547 = vsel %vm416, %v525, 0.0
      %548 = vadd.xlane.f32.xlu0 %v547
      %v549 = vpop.xlane.xlu0 %548
      %v550 = vsel %vm416, %v526, 0.0
      %551 = vadd.xlane.f32.xlu0 %v550
      %v552 = vpop.xlane.xlu0 %551
      %v553 = vsel %vm416, %v527, 0.0
      %554 = vadd.xlane.f32.xlu0 %v553
      %v555 = vpop.xlane.xlu0 %554
      %v556 = vsel %vm416, %v528, 0.0
      %557 = vadd.xlane.f32.xlu0 %v556
      %v558 = vpop.xlane.xlu0 %557
      %v559 = vsel %vm416, %v529, 0.0
      %560 = vadd.xlane.f32.xlu0 %v559
      %v561 = vpop.xlane.xlu0 %560
      %v562 = vsel %vm416, %v530, 0.0
      %563 = vadd.xlane.f32.xlu0 %v562
      %v564 = vpop.xlane.xlu0 %563
      %v565 = vsel %vm416, %v531, 0.0
      %566 = vadd.xlane.f32.xlu0 %v565
      %v567 = vpop.xlane.xlu0 %566
      %v568 = vsel %vm416, %v532, 0.0
      %569 = vadd.xlane.f32.xlu0 %v568
      %v570 = vpop.xlane.xlu0 %569
      %v571 = vsel %vm416, %v533, 0.0
      %572 = vadd.xlane.f32.xlu0 %v571
      %v573 = vpop.xlane.xlu0 %572
      %v574 = vsel %vm416, %v534, 0.0
      %575 = vadd.xlane.f32.xlu0 %v574
      %v576 = vpop.xlane.xlu0 %575
      %v577 = vsel %vm416, %v535, 0.0
      %578 = vadd.xlane.f32.xlu0 %v577
      %v579 = vpop.xlane.xlu0 %578
      %v580 = vsel %vm416, %v536, 0.0
      %581 = vadd.xlane.f32.xlu0 %v580
      %v582 = vpop.xlane.xlu0 %581
      %v583 = vsel %vm416, %v537, 0.0
      %584 = vadd.xlane.f32.xlu0 %v583
      %v585 = vpop.xlane.xlu0 %584
      %586 = vst.msk [vmem:[%s280] sm:$0xff] %vm501, %v540
      %587 = vst.msk [vmem:[%s280 + $0x8] sm:$0xff] %vm501, %v543
      %588 = vst.msk [vmem:[%s280 + $0x10] sm:$0xff] %vm501, %v546
      %589 = vst.msk [vmem:[%s280 + $0x18] sm:$0xff] %vm501, %v549
      %590 = vst.msk [vmem:[%s280 + $0x20] sm:$0xff] %vm501, %v552
      %591 = vst.msk [vmem:[%s280 + $0x28] sm:$0xff] %vm501, %v555
      %592 = vst.msk [vmem:[%s280 + $0x30] sm:$0xff] %vm501, %v558
      %593 = vst.msk [vmem:[%s280 + $0x38] sm:$0xff] %vm501, %v561
      %594 = vst.msk [vmem:[%s280 + $0x40] sm:$0xff] %vm501, %v564
      %595 = vst.msk [vmem:[%s280 + $0x48] sm:$0xff] %vm501, %v567
      %596 = vst.msk [vmem:[%s280 + $0x50] sm:$0xff] %vm501, %v570
      %597 = vst.msk [vmem:[%s280 + $0x58] sm:$0xff] %vm501, %v573
      %598 = vst.msk [vmem:[%s280 + $0x60] sm:$0xff] %vm501, %v576
      %599 = vst.msk [vmem:[%s280 + $0x68] sm:$0xff] %vm501, %v579
      %600 = vst.msk [vmem:[%s280 + $0x70] sm:$0xff] %vm501, %v582
      %601 = vst.msk [vmem:[%s280 + $0x78] sm:$0xff] %vm501, %v585
      %s602 = smul.u32 16, %s18
      %p603 = scmp.lt.s32.totalorder %s602, 31
      %s604 = scalar_select %p603, %s602, 31
      %s605 = smul.addr %s604, 8
      %s606 = scalar_lea.vmem %s4, %s605
      %s607 = smul.u32 16, %s18
      %p608 = scmp.lt.s32.totalorder %s607, 31
      %s609 = scalar_select %p608, %s607, 31
      %s610 = smul.addr %s609, 8
      %s611 = scalar_lea.vmem %s5, %s610
      %s612 = smul.u32 16, %s18
      %p613 = scmp.lt.s32.totalorder %s612, 31
      %s614 = scalar_select %p613, %s612, 31
      %s615 = smul.addr %s614, 8
      %s616 = scalar_lea.vmem %s6, %s615
      // Predicated region
      $region37: #{spgat_forward.6} parent=35 // pred_check
        %p617 = pneg %p125
      $region38: #{spgat_forward.6} parent=35 // pred_check_branch
        %619 = sbr.rel (%p617) target = $region40
      $region39: #{spgat_forward.6} parent=35 // pred_region
        %s620 = smul.u32 16, %s18
      $region40: #{spgat_forward.6} parent=35 // pred_fallthru
        _
      // Predicated region
      $region41: #{spgat_forward.6} parent=35 // pred_check
        %p621 = pneg %p151
      $region42: #{spgat_forward.6} parent=35 // pred_check_branch
        %623 = sbr.rel (%p621) target = $region44
      $region43: #{spgat_forward.6} parent=35 // pred_region
        %s624 = smul.u32 16, %s18
      $region44: #{spgat_forward.6} parent=35 // pred_fallthru
        _
      // Predicated region
      $region45: #{spgat_forward.6} parent=35 // pred_check
        %p625 = pneg %p177
      $region46: #{spgat_forward.6} parent=35 // pred_check_branch
        %627 = sbr.rel (%p625) target = $region48
      $region47: #{spgat_forward.6} parent=35 // pred_region
        %s628 = smul.u32 16, %s18
      $region48: #{spgat_forward.6} parent=35 // pred_fallthru
        _
    $region36: #{spgat_forward.6} parent=5 // pred_fallthru
      _
    %p629 = scmp.le.s32.totalorder 2, %s13
    // Predicated region
    $region49: #{spgat_forward.6} parent=5 // pred_check
      %p630 = pneg %p629
    $region50: #{spgat_forward.6} parent=5 // pred_check_branch
      %632 = sbr.rel (%p630) target = $region52
    $region51: #{spgat_forward.6} parent=5 // pred_region
      %s633 = ssub.s32 %s13, 2
      // Predicated region
      $region53: #{spgat_forward.6} parent=51 // pred_check
        %p634 = pneg %p131
      $region54: #{spgat_forward.6} parent=51 // pred_check_branch
        %636 = sbr.rel (%p634) target = $region56
      $region55: #{spgat_forward.6} parent=51 // pred_region
        %s637 = smul.u32 16, %s19
        %p638 = scmp.lt.s32.totalorder %s637, 31
        %s639 = scalar_select %p638, %s637, 31
        %s640 = smul.addr %s639, 8
        %s641 = scalar_lea.vmem %s4, %s640
      $region56: #{spgat_forward.6} parent=51 // pred_fallthru
        _
      // Predicated region
      $region57: #{spgat_forward.6} parent=51 // pred_check
        %p642 = pneg %p157
      $region58: #{spgat_forward.6} parent=51 // pred_check_branch
        %644 = sbr.rel (%p642) target = $region60
      $region59: #{spgat_forward.6} parent=51 // pred_region
        %s645 = smul.u32 16, %s19
        %p646 = scmp.lt.s32.totalorder %s645, 31
        %s647 = scalar_select %p646, %s645, 31
        %s648 = smul.addr %s647, 8
        %s649 = scalar_lea.vmem %s5, %s648
      $region60: #{spgat_forward.6} parent=51 // pred_fallthru
        _
      // Predicated region
      $region61: #{spgat_forward.6} parent=51 // pred_check
        %p650 = pneg %p183
      $region62: #{spgat_forward.6} parent=51 // pred_check_branch
        %652 = sbr.rel (%p650) target = $region64
      $region63: #{spgat_forward.6} parent=51 // pred_region
        %s653 = smul.u32 16, %s19
        %p654 = scmp.lt.s32.totalorder %s653, 31
        %s655 = scalar_select %p654, %s653, 31
        %s656 = smul.addr %s655, 8
        %s657 = scalar_lea.vmem %s6, %s656
      $region64: #{spgat_forward.6} parent=51 // pred_fallthru
        _
    $region52: #{spgat_forward.6} parent=5 // pred_fallthru
      _
  $region6: #{spgat_forward.6} parent=0 // loop_footer
    %s17 = sadd.s32 1, %s13
  $region7: #{spgat_forward.6} parent=0 // loop_footer_branch
    %12 = sbr.rel target = $region3
  $region8: #{spgat_forward.6} parent=0 // loop_exit
    _

// kernel: spgat_forward.7
$region0: #{spgat_forward.7}
  #allocation0 [shape = 'u32[]', space=smem, size = 0x4, offset = 0x4, fixed_abs, tag = 'smem constant byte address 0x4 - core index']
  #allocation1 [shape = 'u32[72,128]{1,0:T(1,128)}', space=vmem, size = 0x9000, scoped, tag = 'internal scratch']
  #allocation2 [shape = 'f32[128,8]{1,0:T(8,128)}', space=vmem, size = 0x10000, scoped, tag = 'scratch operand']
  #allocation3 [shape = 'f32[128,1]{1,0:T(8,128)}', space=vmem, size = 0x10000, scoped, tag = 'scratch operand']
  %s0 = inlined_call_operand.vmem [shape: f32[256,1], index: 0, kind: input, shape index: {}]
  %s1 = inlined_call_operand.vmem [shape: f32[1,256], index: 1, kind: input, shape index: {}]
  %s2 = inlined_call_operand.vmem [shape: s8[256,256], index: 2, kind: input, shape index: {}]
  %s3 = inlined_call_operand.vmem [shape: f32[256,8], index: 3, kind: input, shape index: {}]
  %s4 = inlined_call_operand.vmem [shape: f32[256,8], index: 4, kind: output, shape index: {}]
  %s5 = sld [smem:[#allocation0]]
  $region95: #{spgat_forward.7} parent=0
    _
  %s7 = ssub.s32 1, %s5
  %s8 = scalar_select 0, %s7, %s5
  $region1: #{spgat_forward.7} parent=0
    #allocation4 [shape = 'u8[32768]{0}', space=vmem, size = 0x8000, scoped, tag = 'input window, operand 2']
    loop: start=0, step=1, limit=6
    $region2: #{spgat_forward.7} parent=1 // loop_pre_header
      _
    $region3: #{spgat_forward.7} parent=1 // loop_header
      %s10 = sphi 0, %s14
      %p11 = scmp.ge.s32.totalorder %s10, 6
      %s17 = sphi 0, %s29
      %s18 = sphi 0, %s25
      %s19 = sphi 0, %s17
      %s20 = sphi 0, %s18
      %s21 = sphi 0, %s19
      %s22 = sphi 0, %s20
      %s32 = sphi 0, %s34
      %s35 = sphi 0, %s32
      %s36 = sphi 0, %s35
      %s52 = sphi 0, %s36
      %s58 = sphi 0, %s60
      %s61 = sphi 0, %s58
      %s62 = sphi 0, %s61
      %s78 = sphi 0, %s62
      %s86 = sphi 0, %s88
      %s89 = sphi 0, %s86
      %s90 = sphi 0, %s89
      %s106 = sphi 0, %s90
      %s112 = sphi 0, %s114
      %s115 = sphi 0, %s112
      %s116 = sphi 0, %s115
      %s132 = sphi 0, %s116
      %s138 = sphi 0, %s140
      %s141 = sphi 0, %s138
      %s142 = sphi 0, %s141
      %s158 = sphi 0, %s142
    $region4: #{spgat_forward.7} parent=1 // loop_header_branch
      %13 = sbr.rel (%p11) target = $region8
    $region5: #{spgat_forward.7} parent=1 // loop_body
      %s15 = ssub.s32 %s10, 1
      %s16 = ssub.s32 %s10, 2
      %s23 = sadd.s32 1, %s18
      %p24 = scmp.ge.s32.totalorder %s23, 2
      %s25 = scalar_select %p24, 0, %s23
      %s26 = sadd.s32 1, %s17
      %s27 = scalar_select %p24, %s26, %s17
      %p28 = scmp.ge.s32.totalorder %s27, 2
      %s29 = scalar_select %p28, 0, %s27
      %s30 = ssub.s32 %s17, %s29
      %p31 = scmp.eq.s32.totalorder %s30, 0
      %s33 = sadd.s32 %s32, 1
      %s34 = scalar_select %p31, %s32, %s33
      %p37 = pneg %p31
      %p38 = scmp.eq.s32.totalorder %s10, 3
      %p39 = por %p37, %p38
      %p40 = scmp.ne.s32.totalorder %s32, %s35
      %p41 = scmp.eq.s32.totalorder %s10, 0
      %p42 = por %p40, %p41
      %p43 = scmp.ne.s32.totalorder %s32, %s35
      %p44 = scmp.eq.s32.totalorder %s15, 3
      %p45 = por %p43, %p44
      %p46 = scmp.ne.s32.totalorder %s35, %s36
      %p47 = scmp.eq.s32.totalorder %s15, 0
      %p48 = por %p46, %p47
      %p49 = scmp.ne.s32.totalorder %s35, %s36
      %p50 = scmp.eq.s32.totalorder %s16, 3
      %p51 = por %p49, %p50
      %p53 = scmp.ne.s32.totalorder %s36, %s52
      %p54 = scmp.eq.s32.totalorder %s16, 0
      %p55 = por %p53, %p54
      %s56 = ssub.s32 %s18, %s25
      %p57 = scmp.eq.s32.totalorder %s56, 0
      %s59 = sadd.s32 %s58, 1
      %s60 = scalar_select %p57, %s58, %s59
      %p63 = pneg %p57
      %p64 = scmp.eq.s32.totalorder %s10, 3
      %p65 = por %p63, %p64
      %p66 = scmp.ne.s32.totalorder %s58, %s61
      %p67 = scmp.eq.s32.totalorder %s10, 0
      %p68 = por %p66, %p67
      %p69 = scmp.ne.s32.totalorder %s58, %s61
      %p70 = scmp.eq.s32.totalorder %s15, 3
      %p71 = por %p69, %p70
      %p72 = scmp.ne.s32.totalorder %s61, %s62
      %p73 = scmp.eq.s32.totalorder %s15, 0
      %p74 = por %p72, %p73
      %p75 = scmp.ne.s32.totalorder %s61, %s62
      %p76 = scmp.eq.s32.totalorder %s16, 3
      %p77 = por %p75, %p76
      %p79 = scmp.ne.s32.totalorder %s62, %s78
      %p80 = scmp.eq.s32.totalorder %s16, 0
      %p81 = por %p79, %p80
      %s82 = ssub.s32 %s17, %s29
      %s83 = ssub.s32 %s18, %s25
      %s84 = sor.u32 %s82, %s83
      %p85 = scmp.eq.s32.totalorder %s84, 0
      %s87 = sadd.s32 %s86, 1
      %s88 = scalar_select %p85, %s86, %s87
      %p91 = pneg %p85
      %p92 = scmp.eq.s32.totalorder %s10, 3
      %p93 = por %p91, %p92
      %p94 = scmp.ne.s32.totalorder %s86, %s89
      %p95 = scmp.eq.s32.totalorder %s10, 0
      %p96 = por %p94, %p95
      %p97 = scmp.ne.s32.totalorder %s86, %s89
      %p98 = scmp.eq.s32.totalorder %s15, 3
      %p99 = por %p97, %p98
      %p100 = scmp.ne.s32.totalorder %s89, %s90
      %p101 = scmp.eq.s32.totalorder %s15, 0
      %p102 = por %p100, %p101
      %p103 = scmp.ne.s32.totalorder %s89, %s90
      %p104 = scmp.eq.s32.totalorder %s16, 3
      %p105 = por %p103, %p104
      %p107 = scmp.ne.s32.totalorder %s90, %s106
      %p108 = scmp.eq.s32.totalorder %s16, 0
      %p109 = por %p107, %p108
      %s110 = ssub.s32 %s18, %s25
      %p111 = scmp.eq.s32.totalorder %s110, 0
      %s113 = sadd.s32 %s112, 1
      %s114 = scalar_select %p111, %s112, %s113
      %p117 = pneg %p111
      %p118 = scmp.eq.s32.totalorder %s10, 3
      %p119 = por %p117, %p118
      %p120 = scmp.ne.s32.totalorder %s112, %s115
      %p121 = scmp.eq.s32.totalorder %s10, 0
      %p122 = por %p120, %p121
      %p123 = scmp.ne.s32.totalorder %s112, %s115
      %p124 = scmp.eq.s32.totalorder %s15, 3
      %p125 = por %p123, %p124
      %p126 = scmp.ne.s32.totalorder %s115, %s116
      %p127 = scmp.eq.s32.totalorder %s15, 0
      %p128 = por %p126, %p127
      %p129 = scmp.ne.s32.totalorder %s115, %s116
      %p130 = scmp.eq.s32.totalorder %s16, 3
      %p131 = por %p129, %p130
      %p133 = scmp.ne.s32.totalorder %s116, %s132
      %p134 = scmp.eq.s32.totalorder %s16, 0
      %p135 = por %p133, %p134
      %s136 = ssub.s32 %s17, %s29
      %p137 = scmp.eq.s32.totalorder %s136, 0
      %s139 = sadd.s32 %s138, 1
      %s140 = scalar_select %p137, %s138, %s139
      %p143 = pneg %p137
      %p144 = scmp.eq.s32.totalorder %s10, 3
      %p145 = por %p143, %p144
      %p146 = scmp.ne.s32.totalorder %s138, %s141
      %p147 = scmp.eq.s32.totalorder %s10, 0
      %p148 = por %p146, %p147
      %p149 = scmp.ne.s32.totalorder %s138, %s141
      %p150 = scmp.eq.s32.totalorder %s15, 3
      %p151 = por %p149, %p150
      %p152 = scmp.ne.s32.totalorder %s141, %s142
      %p153 = scmp.eq.s32.totalorder %s15, 0
      %p154 = por %p152, %p153
      %p155 = scmp.ne.s32.totalorder %s141, %s142
      %p156 = scmp.eq.s32.totalorder %s16, 3
      %p157 = por %p155, %p156
      %p159 = scmp.ne.s32.totalorder %s142, %s158
      %p160 = scmp.eq.s32.totalorder %s16, 0
      %p161 = por %p159, %p160
      %p162 = scmp.le.s32.totalorder 1, %s10
      %p163 = scmp.lt.s32.totalorder %s10, 5
      %p164 = pnand %p162, %p163
      %p165 = pneg %p164
      // Predicated region
      $region9: #{spgat_forward.7} parent=5 // pred_check
        _
      $region10: #{spgat_forward.7} parent=5 // pred_check_branch
        %167 = sbr.rel (%p164) target = $region12
      $region11: #{spgat_forward.7} parent=5 // pred_region
        %s168 = ssub.s32 %s10, 1
      $region12: #{spgat_forward.7} parent=5 // pred_fallthru
        _
      %p169 = scmp.lt.s32.totalorder %s10, 4
      // Predicated region
      $region13: #{spgat_forward.7} parent=5 // pred_check
        %p170 = pneg %p169
      $region14: #{spgat_forward.7} parent=5 // pred_check_branch
        %172 = sbr.rel (%p170) target = $region16
      $region15: #{spgat_forward.7} parent=5 // pred_region
        // Predicated region
        $region17: #{spgat_forward.7} parent=15 // pred_check
          %p173 = pneg %p42
        $region18: #{spgat_forward.7} parent=15 // pred_check_branch
          %175 = sbr.rel (%p173) target = $region20
        $region19: #{spgat_forward.7} parent=15 // pred_region
          %s176 = smul.u32 16, %s17
          %p177 = scmp.lt.s32.totalorder %s176, 31
          %s178 = scalar_select %p177, %s176, 31
          %s179 = smul.addr %s178, 8
          %s180 = scalar_lea.vmem %s0, %s179
          %s181 = smul.u32 16, %s17
        $region20: #{spgat_forward.7} parent=15 // pred_fallthru
          _
        // Predicated region
        $region21: #{spgat_forward.7} parent=15 // pred_check
          %p182 = pneg %p68
        $region22: #{spgat_forward.7} parent=15 // pred_check_branch
          %184 = sbr.rel (%p182) target = $region24
        $region23: #{spgat_forward.7} parent=15 // pred_region
          %p185 = scmp.lt.s32.totalorder %s18, 1
          %s186 = scalar_select %p185, %s18, 1
          %s187 = scalar_lea.vmem %s1, %s186
        $region24: #{spgat_forward.7} parent=15 // pred_fallthru
          _
        // Predicated region
        $region25: #{spgat_forward.7} parent=15 // pred_check
          %p188 = pneg %p96
        $region26: #{spgat_forward.7} parent=15 // pred_check_branch
          %190 = sbr.rel (%p188) target = $region28
        $region27: #{spgat_forward.7} parent=15 // pred_region
          %s191 = sand.u32 %s86, 1
          %s192 = sand.u32 %s86, 1
          %s193 = smul.addr %s192, 32
          %s194 = scalar_lea.vmem [#allocation4], %s193
          %s195 = smul.u32 4, %s17
          %s196 = smul.addr %s195, 2
          %s197 = sadd.s32 %s18, %s196
          %s198 = smul.addr %s197, 8
          %s199 = scalar_lea.vmem %s2, %s198
          // Predicated region
          $region29: #{spgat_forward.7} parent=27 // pred_check
            _
          $region30: #{spgat_forward.7} parent=27 // pred_check_branch
            %201 = sbr.rel (0) target = $region32
          $region31: #{spgat_forward.7} parent=27 // pred_region
            // Predicated region
            $region33: #{spgat_forward.7} parent=31 // pred_check
              _
            $region34: #{spgat_forward.7} parent=31 // pred_check_branch
              %203 = sbr.rel (0) target = $region36
            $region35: #{spgat_forward.7} parent=31 // pred_region
              // Predicated region
              $region48: #{spgat_forward.7} parent=35 // pred_check
                _
              $region49: #{spgat_forward.7} parent=35 // pred_check_branch
                %225 = sbr.rel (0) target = $region51
              $region50: #{spgat_forward.7} parent=35 // pred_region
                loop: start=0, step=1, limit=1
                $region52: #{spgat_forward.7} parent=50 // loop_pre_header
                  _
                $region53: #{spgat_forward.7} parent=50 // loop_header
                  %s227 = sphi 0, %s231
                  %p228 = scmp.ge.s32.totalorder %s227, 1
                  %s232 = sphi %s199, %s199
                  %s233 = sphi %s194, %s194
                $region54: #{spgat_forward.7} parent=50 // loop_header_branch
                  %230 = sbr.rel (%p228) target = $region58
                $region55: #{spgat_forward.7} parent=50 // loop_body
                  %v234 = vld [vmem:[%s232] sm:$0xff]
                  %235 = vst [vmem:[%s233] sm:$0xff] %v234
                  %v236 = vld [vmem:[%s232 + $0x10] sm:$0xff]
                  %237 = vst [vmem:[%s233 + $0x8] sm:$0xff] %v236
                  %v238 = vld [vmem:[%s232 + $0x20] sm:$0xff]
                  %239 = vst [vmem:[%s233 + $0x10] sm:$0xff] %v238
                  %v240 = vld [vmem:[%s232 + $0x30] sm:$0xff]
                  %241 = vst [vmem:[%s233 + $0x18] sm:$0xff] %v240
                $region56: #{spgat_forward.7} parent=50 // loop_footer
                  %s231 = sadd.s32 1, %s227
                $region57: #{spgat_forward.7} parent=50 // loop_footer_branch
                  %226 = sbr.rel target = $region53
                $region58: #{spgat_forward.7} parent=50 // loop_exit
                  _
              $region51: #{spgat_forward.7} parent=35 // pred_fallthru
                _
              // Predicated region
              $region59: #{spgat_forward.7} parent=35 // pred_check
                _
              $region60: #{spgat_forward.7} parent=35 // pred_check_branch
                %243 = sbr.rel target = $region62
              $region61: #{spgat_forward.7} parent=35 // pred_region
                _
              $region62: #{spgat_forward.7} parent=35 // pred_fallthru
                _
            $region36: #{spgat_forward.7} parent=31 // pred_fallthru
              _
            // Predicated region
            $region37: #{spgat_forward.7} parent=31 // pred_check
              _
            $region38: #{spgat_forward.7} parent=31 // pred_check_branch
              %205 = sbr.rel target = $region40
            $region39: #{spgat_forward.7} parent=31 // pred_region
              %s207 = ssub.s32 256, 1
              loop: start=0, step=1, limit=1
              $region41: #{spgat_forward.7} parent=39 // loop_pre_header
                _
              $region42: #{spgat_forward.7} parent=39 // loop_header
                %s209 = sphi 0, %s213
                %p210 = scmp.ge.s32.totalorder %s209, 1
                %s214 = sphi %s199, %s199
                %s215 = sphi %s194, %s194
              $region43: #{spgat_forward.7} parent=39 // loop_header_branch
                %212 = sbr.rel (%p210) target = $region47
              $region44: #{spgat_forward.7} parent=39 // loop_body
                %v216 = vld [vmem:[%s214] sm:%s207]
                %217 = vst [vmem:[%s215] sm:%s207] %v216
                %v218 = vld [vmem:[%s214 + $0x10] sm:%s207]
                %219 = vst [vmem:[%s215 + $0x8] sm:%s207] %v218
                %v220 = vld [vmem:[%s214 + $0x20] sm:%s207]
                %221 = vst [vmem:[%s215 + $0x10] sm:%s207] %v220
                %v222 = vld [vmem:[%s214 + $0x30] sm:%s207]
                %223 = vst [vmem:[%s215 + $0x18] sm:%s207] %v222
              $region45: #{spgat_forward.7} parent=39 // loop_footer
                %s213 = sadd.s32 1, %s209
              $region46: #{spgat_forward.7} parent=39 // loop_footer_branch
                %208 = sbr.rel target = $region42
              $region47: #{spgat_forward.7} parent=39 // loop_exit
                _
            $region40: #{spgat_forward.7} parent=31 // pred_fallthru
              _
          $region32: #{spgat_forward.7} parent=27 // pred_fallthru
            _
          %244 = vnop
        $region28: #{spgat_forward.7} parent=15 // pred_fallthru
          _
        // Predicated region
        $region63: #{spgat_forward.7} parent=15 // pred_check
          %p245 = pneg %p122
        $region64: #{spgat_forward.7} parent=15 // pred_check_branch
          %247 = sbr.rel (%p245) target = $region66
        $region65: #{spgat_forward.7} parent=15 // pred_region
          %s248 = smul.u32 16, %s18
          %p249 = scmp.lt.s32.totalorder %s248, 31
          %s250 = scalar_select %p249, %s248, 31
          %s251 = smul.addr %s250, 8
          %s252 = scalar_lea.vmem %s3, %s251
          %s253 = smul.u32 16, %s18
        $region66: #{spgat_forward.7} parent=15 // pred_fallthru
          _
      $region16: #{spgat_forward.7} parent=5 // pred_fallthru
        _
      %p254 = scmp.le.s32.totalorder 1, %s10
      %p255 = scmp.lt.s32.totalorder %s10, 5
      %p256 = pnand %p254, %p255
      %p257 = pneg %p256
      // Predicated region
      $region67: #{spgat_forward.7} parent=5 // pred_check
        _
      $region68: #{spgat_forward.7} parent=5 // pred_check_branch
        %259 = sbr.rel (%p256) target = $region70
      $region69: #{spgat_forward.7} parent=5 // pred_region
        %s260 = ssub.s32 %s10, 1
        %s261 = sand.u32 %s89, 1
        %s262 = sand.u32 %s89, 1
        %s263 = smul.addr %s262, 32
        %s264 = scalar_lea.vmem [#allocation4], %s263
        // Predicated region
        $region71: #{spgat_forward.7} parent=69 // pred_check
          %p265 = pneg %p102
        $region72: #{spgat_forward.7} parent=69 // pred_check_branch
          %267 = sbr.rel (%p265) target = $region74
        $region73: #{spgat_forward.7} parent=69 // pred_region
          _
        $region74: #{spgat_forward.7} parent=69 // pred_fallthru
          _
        %s268 = smul.u32 16, %s19
        %p269 = scmp.lt.s32.totalorder %s268, 31
        %s270 = scalar_select %p269, %s268, 31
        %s271 = smul.addr %s270, 8
        %s272 = scalar_lea.vmem %s0, %s271
        %p273 = pneg %p48
        %p274 = pneg %p45
        %p275 = scmp.lt.s32.totalorder %s20, 1
        %s276 = scalar_select %p275, %s20, 1
        %s277 = scalar_lea.vmem %s1, %s276
        %p278 = pneg %p74
        %p279 = pneg %p71
        %s280 = sand.u32 %s89, 1
        %s281 = sand.u32 %s89, 1
        %s282 = smul.addr %s281, 32
        %s283 = scalar_lea.vmem [#allocation4], %s282
        %p284 = pneg %p102
        %p285 = pneg %p99
        %s286 = smul.u32 16, %s20
        %p287 = scmp.lt.s32.totalorder %s286, 31
        %s288 = scalar_select %p287, %s286, 31
        %s289 = smul.addr %s288, 8
        %s290 = scalar_lea.vmem %s3, %s289
        %p291 = pneg %p128
        %p292 = pneg %p125
        %p293 = pneg %p154
        %p294 = pneg %p151
        %s295 = smul.u32 16, %s19
        %p296 = scmp.lt.s32.totalorder %s295, 31
        %s297 = scalar_select %p296, %s295, 31
        %s298 = smul.addr %s297, 8
        %s299 = scalar_lea.vmem %s4, %s298
        %s300 = smul.u32 16, %s19
        %p301 = scmp.lt.s32.totalorder %s300, 31
        %s302 = scalar_select %p301, %s300, 31
        %s303 = smul.addr %s302, 8
        %s304 = scalar_lea.vmem %s0, %s303
        %s305 = smul.u32 16, %s19
        %p306 = scmp.lt.s32.totalorder %s20, 1
        %s307 = scalar_select %p306, %s20, 1
        %s308 = scalar_lea.vmem %s1, %s307
        %s309 = smul.u32 4, %s19
        %s310 = smul.u32 16, %s20
        %p311 = scmp.lt.s32.totalorder %s310, 31
        %s312 = scalar_select %p311, %s310, 31
        %s313 = smul.addr %s312, 8
        %s314 = scalar_lea.vmem %s3, %s313
        %s315 = smul.u32 16, %s20
        %s316 = smul.u32 16, %s19
        %p317 = scmp.lt.s32.totalorder %s316, 31
        %s318 = scalar_select %p317, %s316, 31
        %s319 = smul.addr %s318, 8
        %s320 = scalar_lea.vmem %s4, %s319
        %s321 = smul.u32 16, %s19
        %p322 = scmp.eq.s32.totalorder %s20, 0
        // Predicated region
        $region75: #{spgat_forward.7} parent=69 // pred_check
          %p323 = pneg %p322
        $region76: #{spgat_forward.7} parent=69 // pred_check_branch
          %325 = sbr.rel (%p323) target = $region78
        $region77: #{spgat_forward.7} parent=69 // pred_region
          %vm326 = vcmask 64512
          %327 = vst.msk [vmem:[#allocation2] sm:$0xff] %vm326, 0.0
          %328 = vst.msk [vmem:[#allocation2 + $0x8] sm:$0xff] %vm326, 0.0
          %329 = vst.msk [vmem:[#allocation2 + $0x10] sm:$0xff] %vm326, 0.0
          %330 = vst.msk [vmem:[#allocation2 + $0x18] sm:$0xff] %vm326, 0.0
          %331 = vst.msk [vmem:[#allocation2 + $0x20] sm:$0xff] %vm326, 0.0
          %332 = vst.msk [vmem:[#allocation2 + $0x28] sm:$0xff] %vm326, 0.0
          %333 = vst.msk [vmem:[#allocation2 + $0x30] sm:$0xff] %vm326, 0.0
          %334 = vst.msk [vmem:[#allocation2 + $0x38] sm:$0xff] %vm326, 0.0
          %335 = vst.msk [vmem:[#allocation2 + $0x40] sm:$0xff] %vm326, 0.0
          %336 = vst.msk [vmem:[#allocation2 + $0x48] sm:$0xff] %vm326, 0.0
          %337 = vst.msk [vmem:[#allocation2 + $0x50] sm:$0xff] %vm326, 0.0
          %338 = vst.msk [vmem:[#allocation2 + $0x58] sm:$0xff] %vm326, 0.0
          %339 = vst.msk [vmem:[#allocation2 + $0x60] sm:$0xff] %vm326, 0.0
          %340 = vst.msk [vmem:[#allocation2 + $0x68] sm:$0xff] %vm326, 0.0
          %341 = vst.msk [vmem:[#allocation2 + $0x70] sm:$0xff] %vm326, 0.0
          %342 = vst.msk [vmem:[#allocation2 + $0x78] sm:$0xff] %vm326, 0.0
          %vm343 = vcmask 7168
          %344 = vst.msk [vmem:[#allocation3] sm:$0xff] %vm343, 0.0
          %345 = vst.msk [vmem:[#allocation3 + $0x8] sm:$0xff] %vm343, 0.0
          %346 = vst.msk [vmem:[#allocation3 + $0x10] sm:$0xff] %vm343, 0.0
          %347 = vst.msk [vmem:[#allocation3 + $0x18] sm:$0xff] %vm343, 0.0
          %348 = vst.msk [vmem:[#allocation3 + $0x20] sm:$0xff] %vm343, 0.0
          %349 = vst.msk [vmem:[#allocation3 + $0x28] sm:$0xff] %vm343, 0.0
          %350 = vst.msk [vmem:[#allocation3 + $0x30] sm:$0xff] %vm343, 0.0
          %351 = vst.msk [vmem:[#allocation3 + $0x38] sm:$0xff] %vm343, 0.0
          %352 = vst.msk [vmem:[#allocation3 + $0x40] sm:$0xff] %vm343, 0.0
          %353 = vst.msk [vmem:[#allocation3 + $0x48] sm:$0xff] %vm343, 0.0
          %354 = vst.msk [vmem:[#allocation3 + $0x50] sm:$0xff] %vm343, 0.0
          %355 = vst.msk [vmem:[#allocation3 + $0x58] sm:$0xff] %vm343, 0.0
          %356 = vst.msk [vmem:[#allocation3 + $0x60] sm:$0xff] %vm343, 0.0
          %357 = vst.msk [vmem:[#allocation3 + $0x68] sm:$0xff] %vm343, 0.0
          %358 = vst.msk [vmem:[#allocation3 + $0x70] sm:$0xff] %vm343, 0.0
          %359 = vst.msk [vmem:[#allocation3 + $0x78] sm:$0xff] %vm343, 0.0
        $region78: #{spgat_forward.7} parent=69 // pred_fallthru
          _
        %v360 = vld [vmem:[%s264] sm:$0xff]
        %v361 = vld [vmem:[%s264 + $0x8] sm:$0xff]
        %v362 = vld [vmem:[%s264 + $0x10] sm:$0xff]
        %v363 = vld [vmem:[%s264 + $0x18] sm:$0xff]
        %v364 = vunpack.c.0.s8 %v360
        %v365 = vunpack.c.1.s8 %v360
        %v366 = vunpack.c.2.s8 %v360
        %v367 = vunpack.c.3.s8 %v360
        %v368 = vunpack.c.0.s8 %v361
        %v369 = vunpack.c.1.s8 %v361
        %v370 = vunpack.c.2.s8 %v361
        %v371 = vunpack.c.3.s8 %v361
        %v372 = vunpack.c.0.s8 %v362
        %v373 = vunpack.c.1.s8 %v362
        %v374 = vunpack.c.2.s8 %v362
        %v375 = vunpack.c.3.s8 %v362
        %v376 = vunpack.c.0.s8 %v363
        %v377 = vunpack.c.1.s8 %v363
        %v378 = vunpack.c.2.s8 %v363
        %v379 = vunpack.c.3.s8 %v363
        %v380 = vcvt.s32.f32 %v364
        %v381 = vcvt.s32.f32 %v365
        %v382 = vcvt.s32.f32 %v366
        %v383 = vcvt.s32.f32 %v367
        %v384 = vcvt.s32.f32 %v368
        %v385 = vcvt.s32.f32 %v369
        %v386 = vcvt.s32.f32 %v370
        %v387 = vcvt.s32.f32 %v371
        %v388 = vcvt.s32.f32 %v372
        %v389 = vcvt.s32.f32 %v373
        %v390 = vcvt.s32.f32 %v374
        %v391 = vcvt.s32.f32 %v375
        %v392 = vcvt.s32.f32 %v376
        %v393 = vcvt.s32.f32 %v377
        %v394 = vcvt.s32.f32 %v378
        %v395 = vcvt.s32.f32 %v379
        %vm396 = vcmp.gt.f32.partialorder %v380, 0.0
        %vm397 = vcmp.gt.f32.partialorder %v381, 0.0
        %vm398 = vcmp.gt.f32.partialorder %v382, 0.0
        %vm399 = vcmp.gt.f32.partialorder %v383, 0.0
        %vm400 = vcmp.gt.f32.partialorder %v384, 0.0
        %vm401 = vcmp.gt.f32.partialorder %v385, 0.0
        %vm402 = vcmp.gt.f32.partialorder %v386, 0.0
        %vm403 = vcmp.gt.f32.partialorder %v387, 0.0
        %vm404 = vcmp.gt.f32.partialorder %v388, 0.0
        %vm405 = vcmp.gt.f32.partialorder %v389, 0.0
        %vm406 = vcmp.gt.f32.partialorder %v390, 0.0
        %vm407 = vcmp.gt.f32.partialorder %v391, 0.0
        %vm408 = vcmp.gt.f32.partialorder %v392, 0.0
        %vm409 = vcmp.gt.f32.partialorder %v393, 0.0
        %vm410 = vcmp.gt.f32.partialorder %v394, 0.0
        %vm411 = vcmp.gt.f32.partialorder %v395, 0.0
        %v412 = vld [vmem:[%s304] sm:$0xff]
        %v413 = vld [vmem:[%s304 + $0x8] sm:$0xff]
        %v414 = vld [vmem:[%s304 + $0x10] sm:$0xff]
        %v415 = vld [vmem:[%s304 + $0x18] sm:$0xff]
        %v416 = vld [vmem:[%s304 + $0x20] sm:$0xff]
        %v417 = vld [vmem:[%s304 + $0x28] sm:$0xff]
        %v418 = vld [vmem:[%s304 + $0x30] sm:$0xff]
        %v419 = vld [vmem:[%s304 + $0x38] sm:$0xff]
        %v420 = vld [vmem:[%s304 + $0x40] sm:$0xff]
        %v421 = vld [vmem:[%s304 + $0x48] sm:$0xff]
        %v422 = vld [vmem:[%s304 + $0x50] sm:$0xff]
        %v423 = vld [vmem:[%s304 + $0x58] sm:$0xff]
        %v424 = vld [vmem:[%s304 + $0x60] sm:$0xff]
        %v425 = vld [vmem:[%s304 + $0x68] sm:$0xff]
        %v426 = vld [vmem:[%s304 + $0x70] sm:$0xff]
        %v427 = vld [vmem:[%s304 + $0x78] sm:$0xff]
        %v428 = vld [vmem:[%s308] sm:$0x1]
        %430 = vset.pattern.permute.xlu0 0
        %431 = vperm.xlu0 %430, %v412
        %v432 = vpop.permute.xlu0 %431
        %435 = vset.pattern.permute.xlu0 0
        %436 = vperm.xlu0 %435, %v413
        %v437 = vpop.permute.xlu0 %436
        %440 = vset.pattern.permute.xlu0 0
        %441 = vperm.xlu0 %440, %v414
        %v442 = vpop.permute.xlu0 %441
        %445 = vset.pattern.permute.xlu0 0
        %446 = vperm.xlu0 %445, %v415
        %v447 = vpop.permute.xlu0 %446
        %450 = vset.pattern.permute.xlu0 0
        %451 = vperm.xlu0 %450, %v416
        %v452 = vpop.permute.xlu0 %451
        %455 = vset.pattern.permute.xlu0 0
        %456 = vperm.xlu0 %455, %v417
        %v457 = vpop.permute.xlu0 %456
        %460 = vset.pattern.permute.xlu0 0
        %461 = vperm.xlu0 %460, %v418
        %v462 = vpop.permute.xlu0 %461
        %465 = vset.pattern.permute.xlu0 0
        %466 = vperm.xlu0 %465, %v419
        %v467 = vpop.permute.xlu0 %466
        %470 = vset.pattern.permute.xlu0 0
        %471 = vperm.xlu0 %470, %v420
        %v472 = vpop.permute.xlu0 %471
        %475 = vset.pattern.permute.xlu0 0
        %476 = vperm.xlu0 %475, %v421
        %v477 = vpop.permute.xlu0 %476
        %480 = vset.pattern.permute.xlu0 0
        %481 = vperm.xlu0 %480, %v422
        %v482 = vpop.permute.xlu0 %481
        %485 = vset.pattern.permute.xlu0 0
        %486 = vperm.xlu0 %485, %v423
        %v487 = vpop.permute.xlu0 %486
        %490 = vset.pattern.permute.xlu0 0
        %491 = vperm.xlu0 %490, %v424
        %v492 = vpop.permute.xlu0 %491
        %495 = vset.pattern.permute.xlu0 0
        %496 = vperm.xlu0 %495, %v425
        %v497 = vpop.permute.xlu0 %496
        %500 = vset.pattern.permute.xlu0 0
        %501 = vperm.xlu0 %500, %v426
        %v502 = vpop.permute.xlu0 %501
        %505 = vset.pattern.permute.xlu0 0
        %506 = vperm.xlu0 %505, %v427
        %v507 = vpop.permute.xlu0 %506
        %v510 = vperm.slane %v428, 0
        %v512 = vadd.f32 %v432, %v510
        %v513 = vadd.f32 %v437, %v510
        %v514 = vadd.f32 %v442, %v510
        %v515 = vadd.f32 %v447, %v510
        %v516 = vadd.f32 %v452, %v510
        %v517 = vadd.f32 %v457, %v510
        %v518 = vadd.f32 %v462, %v510
        %v519 = vadd.f32 %v467, %v510
        %v520 = vadd.f32 %v472, %v510
        %v521 = vadd.f32 %v477, %v510
        %v522 = vadd.f32 %v482, %v510
        %v523 = vadd.f32 %v487, %v510
        %v524 = vadd.f32 %v492, %v510
        %v525 = vadd.f32 %v497, %v510
        %v526 = vadd.f32 %v502, %v510
        %v527 = vadd.f32 %v507, %v510
        %vm528 = vcmp.gt.f32.partialorder %v512, 0.0
        %vm529 = vcmp.gt.f32.partialorder %v513, 0.0
        %vm530 = vcmp.gt.f32.partialorder %v514, 0.0
        %vm531 = vcmp.gt.f32.partialorder %v515, 0.0
        %vm532 = vcmp.gt.f32.partialorder %v516, 0.0
        %vm533 = vcmp.gt.f32.partialorder %v517, 0.0
        %vm534 = vcmp.gt.f32.partialorder %v518, 0.0
        %vm535 = vcmp.gt.f32.partialorder %v519, 0.0
        %vm536 = vcmp.gt.f32.partialorder %v520, 0.0
        %vm537 = vcmp.gt.f32.partialorder %v521, 0.0
        %vm538 = vcmp.gt.f32.partialorder %v522, 0.0
        %vm539 = vcmp.gt.f32.partialorder %v523, 0.0
        %vm540 = vcmp.gt.f32.partialorder %v524, 0.0
        %vm541 = vcmp.gt.f32.partialorder %v525, 0.0
        %vm542 = vcmp.gt.f32.partialorder %v526, 0.0
        %vm543 = vcmp.gt.f32.partialorder %v527, 0.0
        %v544 = vsub.f32 0.0, %v512
        %v545 = vsub.f32 0.0, %v513
        %v546 = vsub.f32 0.0, %v514
        %v547 = vsub.f32 0.0, %v515
        %v548 = vsub.f32 0.0, %v516
        %v549 = vsub.f32 0.0, %v517
        %v550 = vsub.f32 0.0, %v518
        %v551 = vsub.f32 0.0, %v519
        %v552 = vsub.f32 0.0, %v520
        %v553 = vsub.f32 0.0, %v521
        %v554 = vsub.f32 0.0, %v522
        %v555 = vsub.f32 0.0, %v523
        %v556 = vsub.f32 0.0, %v524
        %v557 = vsub.f32 0.0, %v525
        %v558 = vsub.f32 0.0, %v526
        %v559 = vsub.f32 0.0, %v527
        %v560 = vmul.f32 %v512, -0.2
        %v561 = vmul.f32 %v513, -0.2
        %v562 = vmul.f32 %v514, -0.2
        %v563 = vmul.f32 %v515, -0.2
        %v564 = vmul.f32 %v516, -0.2
        %v565 = vmul.f32 %v517, -0.2
        %v566 = vmul.f32 %v518, -0.2
        %v567 = vmul.f32 %v519, -0.2
        %v568 = vmul.f32 %v520, -0.2
        %v569 = vmul.f32 %v521, -0.2
        %v570 = vmul.f32 %v522, -0.2
        %v571 = vmul.f32 %v523, -0.2
        %v572 = vmul.f32 %v524, -0.2
        %v573 = vmul.f32 %v525, -0.2
        %v574 = vmul.f32 %v526, -0.2
        %v575 = vmul.f32 %v527, -0.2
        %v576 = vsel %vm528, %v544, %v560
        %v577 = vsel %vm529, %v545, %v561
        %v578 = vsel %vm530, %v546, %v562
        %v579 = vsel %vm531, %v547, %v563
        %v580 = vsel %vm532, %v548, %v564
        %v581 = vsel %vm533, %v549, %v565
        %v582 = vsel %vm534, %v550, %v566
        %v583 = vsel %vm535, %v551, %v567
        %v584 = vsel %vm536, %v552, %v568
        %v585 = vsel %vm537, %v553, %v569
        %v586 = vsel %vm538, %v554, %v570
        %v587 = vsel %vm539, %v555, %v571
        %v588 = vsel %vm540, %v556, %v572
        %v589 = vsel %vm541, %v557, %v573
        %v590 = vsel %vm542, %v558, %v574
        %v591 = vsel %vm543, %v559, %v575
        %v592 = vmin.f32 %v576, 60.0
        %v593 = vmin.f32 %v577, 60.0
        %v594 = vmin.f32 %v578, 60.0
        %v595 = vmin.f32 %v579, 60.0
        %v596 = vmin.f32 %v580, 60.0
        %v597 = vmin.f32 %v581, 60.0
        %v598 = vmin.f32 %v582, 60.0
        %v599 = vmin.f32 %v583, 60.0
        %v600 = vmin.f32 %v584, 60.0
        %v601 = vmin.f32 %v585, 60.0
        %v602 = vmin.f32 %v586, 60.0
        %v603 = vmin.f32 %v587, 60.0
        %v604 = vmin.f32 %v588, 60.0
        %v605 = vmin.f32 %v589, 60.0
        %v606 = vmin.f32 %v590, 60.0
        %v607 = vmin.f32 %v591, 60.0
        %v608 = vmul.f32 %v592, 1.442695
        %v609 = vpow.pop %v608
        %v610 = vmul.f32 %v593, 1.442695
        %v611 = vpow.pop %v610
        %v612 = vmul.f32 %v594, 1.442695
        %v613 = vpow.pop %v612
        %v614 = vmul.f32 %v595, 1.442695
        %v615 = vpow.pop %v614
        %v616 = vmul.f32 %v596, 1.442695
        %v617 = vpow.pop %v616
        %v618 = vmul.f32 %v597, 1.442695
        %v619 = vpow.pop %v618
        %v620 = vmul.f32 %v598, 1.442695
        %v621 = vpow.pop %v620
        %v622 = vmul.f32 %v599, 1.442695
        %v623 = vpow.pop %v622
        %v624 = vmul.f32 %v600, 1.442695
        %v625 = vpow.pop %v624
        %v626 = vmul.f32 %v601, 1.442695
        %v627 = vpow.pop %v626
        %v628 = vmul.f32 %v602, 1.442695
        %v629 = vpow.pop %v628
        %v630 = vmul.f32 %v603, 1.442695
        %v631 = vpow.pop %v630
        %v632 = vmul.f32 %v604, 1.442695
        %v633 = vpow.pop %v632
        %v634 = vmul.f32 %v605, 1.442695
        %v635 = vpow.pop %v634
        %v636 = vmul.f32 %v606, 1.442695
        %v637 = vpow.pop %v636
        %v638 = vmul.f32 %v607, 1.442695
        %v639 = vpow.pop %v638
        %v640 = vsel %vm396, %v609, 0.0
        %v641 = vsel %vm397, %v611, 0.0
        %v642 = vsel %vm398, %v613, 0.0
        %v643 = vsel %vm399, %v615, 0.0
        %v644 = vsel %vm400, %v617, 0.0
        %v645 = vsel %vm401, %v619, 0.0
        %v646 = vsel %vm402, %v621, 0.0
        %v647 = vsel %vm403, %v623, 0.0
        %v648 = vsel %vm404, %v625, 0.0
        %v649 = vsel %vm405, %v627, 0.0
        %v650 = vsel %vm406, %v629, 0.0
        %v651 = vsel %vm407, %v631, 0.0
        %v652 = vsel %vm408, %v633, 0.0
        %v653 = vsel %vm409, %v635, 0.0
        %v654 = vsel %vm410, %v637, 0.0
        %v655 = vsel %vm411, %v639, 0.0
        %v656 = vld [vmem:[#allocation3] sm:$0xff]
        %v657 = vld [vmem:[#allocation3 + $0x8] sm:$0xff]
        %v658 = vld [vmem:[#allocation3 + $0x10] sm:$0xff]
        %v659 = vld [vmem:[#allocation3 + $0x18] sm:$0xff]
        %v660 = vld [vmem:[#allocation3 + $0x20] sm:$0xff]
        %v661 = vld [vmem:[#allocation3 + $0x28] sm:$0xff]
        %v662 = vld [vmem:[#allocation3 + $0x30] sm:$0xff]
        %v663 = vld [vmem:[#allocation3 + $0x38] sm:$0xff]
        %v664 = vld [vmem:[#allocation3 + $0x40] sm:$0xff]
        %v665 = vld [vmem:[#allocation3 + $0x48] sm:$0xff]
        %v666 = vld [vmem:[#allocation3 + $0x50] sm:$0xff]
        %v667 = vld [vmem:[#allocation3 + $0x58] sm:$0xff]
        %v668 = vld [vmem:[#allocation3 + $0x60] sm:$0xff]
        %v669 = vld [vmem:[#allocation3 + $0x68] sm:$0xff]
        %v670 = vld [vmem:[#allocation3 + $0x70] sm:$0xff]
        %v671 = vld [vmem:[#allocation3 + $0x78] sm:$0xff]
        %672 = vadd.xlane.f32.xlu0 %v640
        %v673 = vpop.xlane.xlu0 %672
        %674 = vadd.xlane.f32.xlu0 %v641
        %v675 = vpop.xlane.xlu0 %674
        %676 = vadd.xlane.f32.xlu0 %v642
        %v677 = vpop.xlane.xlu0 %676
        %678 = vadd.xlane.f32.xlu0 %v643
        %v679 = vpop.xlane.xlu0 %678
        %680 = vadd.xlane.f32.xlu0 %v644
        %v681 = vpop.xlane.xlu0 %680
        %682 = vadd.xlane.f32.xlu0 %v645
        %v683 = vpop.xlane.xlu0 %682
        %684 = vadd.xlane.f32.xlu0 %v646
        %v685 = vpop.xlane.xlu0 %684
        %686 = vadd.xlane.f32.xlu0 %v647
        %v687 = vpop.xlane.xlu0 %686
        %688 = vadd.xlane.f32.xlu0 %v648
        %v689 = vpop.xlane.xlu0 %688
        %690 = vadd.xlane.f32.xlu0 %v649
        %v691 = vpop.xlane.xlu0 %690
        %692 = vadd.xlane.f32.xlu0 %v650
        %v693 = vpop.xlane.xlu0 %692
        %694 = vadd.xlane.f32.xlu0 %v651
        %v695 = vpop.xlane.xlu0 %694
        %696 = vadd.xlane.f32.xlu0 %v652
        %v697 = vpop.xlane.xlu0 %696
        %698 = vadd.xlane.f32.xlu0 %v653
        %v699 = vpop.xlane.xlu0 %698
        %700 = vadd.xlane.f32.xlu0 %v654
        %v701 = vpop.xlane.xlu0 %700
        %702 = vadd.xlane.f32.xlu0 %v655
        %v703 = vpop.xlane.xlu0 %702
        %v704 = vadd.f32 %v656, %v673
        %v705 = vadd.f32 %v657, %v675
        %v706 = vadd.f32 %v658, %v677
        %v707 = vadd.f32 %v659, %v679
        %v708 = vadd.f32 %v660, %v681
        %v709 = vadd.f32 %v661, %v683
        %v710 = vadd.f32 %v662, %v685
        %v711 = vadd.f32 %v663, %v687
        %v712 = vadd.f32 %v664, %v689
        %v713 = vadd.f32 %v665, %v691
        %v714 = vadd.f32 %v666, %v693
        %v715 = vadd.f32 %v667, %v695
        %v716 = vadd.f32 %v668, %v697
        %v717 = vadd.f32 %v669, %v699
        %v718 = vadd.f32 %v670, %v701
        %v719 = vadd.f32 %v671, %v703
        %vm720 = vcmask 7168
        %721 = vst.msk [vmem:[#allocation3] sm:$0xff] %vm720, %v704
        %722 = vst.msk [vmem:[#allocation3 + $0x8] sm:$0xff] %vm720, %v705
        %723 = vst.msk [vmem:[#allocation3 + $0x10] sm:$0xff] %vm720, %v706
        %724 = vst.msk [vmem:[#allocation3 + $0x18] sm:$0xff] %vm720, %v707
        %725 = vst.msk [vmem:[#allocation3 + $0x20] sm:$0xff] %vm720, %v708
        %726 = vst.msk [vmem:[#allocation3 + $0x28] sm:$0xff] %vm720, %v709
        %727 = vst.msk [vmem:[#allocation3 + $0x30] sm:$0xff] %vm720, %v710
        %728 = vst.msk [vmem:[#allocation3 + $0x38] sm:$0xff] %vm720, %v711
        %729 = vst.msk [vmem:[#allocation3 + $0x40] sm:$0xff] %vm720, %v712
        %730 = vst.msk [vmem:[#allocation3 + $0x48] sm:$0xff] %vm720, %v713
        %731 = vst.msk [vmem:[#allocation3 + $0x50] sm:$0xff] %vm720, %v714
        %732 = vst.msk [vmem:[#allocation3 + $0x58] sm:$0xff] %vm720, %v715
        %733 = vst.msk [vmem:[#allocation3 + $0x60] sm:$0xff] %vm720, %v716
        %734 = vst.msk [vmem:[#allocation3 + $0x68] sm:$0xff] %vm720, %v717
        %735 = vst.msk [vmem:[#allocation3 + $0x70] sm:$0xff] %vm720, %v718
        %736 = vst.msk [vmem:[#allocation3 + $0x78] sm:$0xff] %vm720, %v719
        %v737 = vld [vmem:[#allocation2] sm:$0xff]
        %v738 = vld [vmem:[#allocation2 + $0x8] sm:$0xff]
        %v739 = vld [vmem:[#allocation2 + $0x10] sm:$0xff]
        %v740 = vld [vmem:[#allocation2 + $0x18] sm:$0xff]
        %v741 = vld [vmem:[#allocation2 + $0x20] sm:$0xff]
        %v742 = vld [vmem:[#allocation2 + $0x28] sm:$0xff]
        %v743 = vld [vmem:[#allocation2 + $0x30] sm:$0xff]
        %v744 = vld [vmem:[#allocation2 + $0x38] sm:$0xff]
        %v745 = vld [vmem:[#allocation2 + $0x40] sm:$0xff]
        %v746 = vld [vmem:[#allocation2 + $0x48] sm:$0xff]
        %v747 = vld [vmem:[#allocation2 + $0x50] sm:$0xff]
        %v748 = vld [vmem:[#allocation2 + $0x58] sm:$0xff]
        %v749 = vld [vmem:[#allocation2 + $0x60] sm:$0xff]
        %v750 = vld [vmem:[#allocation2 + $0x68] sm:$0xff]
        %v751 = vld [vmem:[#allocation2 + $0x70] sm:$0xff]
        %v752 = vld [vmem:[#allocation2 + $0x78] sm:$0xff]
        %v753 = vld [vmem:[%s314] sm:$0xff]
        %v754 = vld [vmem:[%s314 + $0x8] sm:$0xff]
        %v755 = vld [vmem:[%s314 + $0x10] sm:$0xff]
        %v756 = vld [vmem:[%s314 + $0x18] sm:$0xff]
        %v757 = vld [vmem:[%s314 + $0x20] sm:$0xff]
        %v758 = vld [vmem:[%s314 + $0x28] sm:$0xff]
        %v759 = vld [vmem:[%s314 + $0x30] sm:$0xff]
        %v760 = vld [vmem:[%s314 + $0x38] sm:$0xff]
        %v761 = vld [vmem:[%s314 + $0x40] sm:$0xff]
        %v762 = vld [vmem:[%s314 + $0x48] sm:$0xff]
        %v763 = vld [vmem:[%s314 + $0x50] sm:$0xff]
        %v764 = vld [vmem:[%s314 + $0x58] sm:$0xff]
        %v765 = vld [vmem:[%s314 + $0x60] sm:$0xff]
        %v766 = vld [vmem:[%s314 + $0x68] sm:$0xff]
        %v767 = vld [vmem:[%s314 + $0x70] sm:$0xff]
        %v768 = vld [vmem:[%s314 + $0x78] sm:$0xff]
        %769 = vmatpush.msra.mxu0 %v768
        %770 = vmatpush.msra.mxu0 %v767
        %771 = vmatpush.msra.mxu0 %v766
        %772 = vmatpush.msra.mxu0 %v765
        %773 = vmatpush.msra.mxu0 %v764
        %774 = vmatpush.msra.mxu0 %v763
        %775 = vmatpush.msra.mxu0 %v762
        %776 = vmatpush.msra.mxu0 %v761
        %777 = vmatpush.msra.mxu0 %v760
        %778 = vmatpush.msra.mxu0 %v759
        %779 = vmatpush.msra.mxu0 %v758
        %780 = vmatpush.msra.mxu0 %v757
        %781 = vmatpush.msra.mxu0 %v756
        %782 = vmatpush.msra.mxu0 %v755
        %783 = vmatpush.msra.mxu0 %v754
        %784 = vmatpush.msra.mxu0 %v753
        %785 = vmatmul.f32.gmra.mxu0 %v640
        %v786 = vpop.f32.mrf.mxu0
        %v787 = vadd.f32 0.0, %v786
        %788 = vmatmul.f32.gmra.mxu0 %v641
        %v789 = vpop.f32.mrf.mxu0
        %v790 = vadd.f32 0.0, %v789
        %791 = vmatmul.f32.gmra.mxu0 %v642
        %v792 = vpop.f32.mrf.mxu0
        %v793 = vadd.f32 0.0, %v792
        %794 = vmatmul.f32.gmra.mxu0 %v643
        %v795 = vpop.f32.mrf.mxu0
        %v796 = vadd.f32 0.0, %v795
        %797 = vmatmul.f32.gmra.mxu0 %v644
        %v798 = vpop.f32.mrf.mxu0
        %v799 = vadd.f32 0.0, %v798
        %800 = vmatmul.f32.gmra.mxu0 %v645
        %v801 = vpop.f32.mrf.mxu0
        %v802 = vadd.f32 0.0, %v801
        %803 = vmatmul.f32.gmra.mxu0 %v646
        %v804 = vpop.f32.mrf.mxu0
        %v805 = vadd.f32 0.0, %v804
        %806 = vmatmul.f32.gmra.mxu0 %v647
        %v807 = vpop.f32.mrf.mxu0
        %v808 = vadd.f32 0.0, %v807
        %809 = vmatmul.f32.gmra.mxu0 %v648
        %v810 = vpop.f32.mrf.mxu0
        %v811 = vadd.f32 0.0, %v810
        %812 = vmatmul.f32.gmra.mxu0 %v649
        %v813 = vpop.f32.mrf.mxu0
        %v814 = vadd.f32 0.0, %v813
        %815 = vmatmul.f32.gmra.mxu0 %v650
        %v816 = vpop.f32.mrf.mxu0
        %v817 = vadd.f32 0.0, %v816
        %818 = vmatmul.f32.gmra.mxu0 %v651
        %v819 = vpop.f32.mrf.mxu0
        %v820 = vadd.f32 0.0, %v819
        %821 = vmatmul.f32.gmra.mxu0 %v652
        %v822 = vpop.f32.mrf.mxu0
        %v823 = vadd.f32 0.0, %v822
        %824 = vmatmul.f32.gmra.mxu0 %v653
        %v825 = vpop.f32.mrf.mxu0
        %v826 = vadd.f32 0.0, %v825
        %827 = vmatmul.f32.gmra.mxu0 %v654
        %v828 = vpop.f32.mrf.mxu0
        %v829 = vadd.f32 0.0, %v828
        %830 = vmatmul.f32.gmra.mxu0 %v655
        %v831 = vpop.f32.mrf.mxu0
        %v832 = vadd.f32 0.0, %v831
        %833 = vdwg.mxu0
        %v834 = vadd.f32 %v737, %v787
        %v835 = vadd.f32 %v738, %v790
        %v836 = vadd.f32 %v739, %v793
        %v837 = vadd.f32 %v740, %v796
        %v838 = vadd.f32 %v741, %v799
        %v839 = vadd.f32 %v742, %v802
        %v840 = vadd.f32 %v743, %v805
        %v841 = vadd.f32 %v744, %v808
        %v842 = vadd.f32 %v745, %v811
        %v843 = vadd.f32 %v746, %v814
        %v844 = vadd.f32 %v747, %v817
        %v845 = vadd.f32 %v748, %v820
        %v846 = vadd.f32 %v749, %v823
        %v847 = vadd.f32 %v750, %v826
        %v848 = vadd.f32 %v751, %v829
        %v849 = vadd.f32 %v752, %v832
        %vm850 = vcmask 64512
        %851 = vst.msk [vmem:[#allocation2] sm:$0xff] %vm850, %v834
        %852 = vst.msk [vmem:[#allocation2 + $0x8] sm:$0xff] %vm850, %v835
        %853 = vst.msk [vmem:[#allocation2 + $0x10] sm:$0xff] %vm850, %v836
        %854 = vst.msk [vmem:[#allocation2 + $0x18] sm:$0xff] %vm850, %v837
        %855 = vst.msk [vmem:[#allocation2 + $0x20] sm:$0xff] %vm850, %v838
        %856 = vst.msk [vmem:[#allocation2 + $0x28] sm:$0xff] %vm850, %v839
        %857 = vst.msk [vmem:[#allocation2 + $0x30] sm:$0xff] %vm850, %v840
        %858 = vst.msk [vmem:[#allocation2 + $0x38] sm:$0xff] %vm850, %v841
        %859 = vst.msk [vmem:[#allocation2 + $0x40] sm:$0xff] %vm850, %v842
        %860 = vst.msk [vmem:[#allocation2 + $0x48] sm:$0xff] %vm850, %v843
        %861 = vst.msk [vmem:[#allocation2 + $0x50] sm:$0xff] %vm850, %v844
        %862 = vst.msk [vmem:[#allocation2 + $0x58] sm:$0xff] %vm850, %v845
        %863 = vst.msk [vmem:[#allocation2 + $0x60] sm:$0xff] %vm850, %v846
        %864 = vst.msk [vmem:[#allocation2 + $0x68] sm:$0xff] %vm850, %v847
        %865 = vst.msk [vmem:[#allocation2 + $0x70] sm:$0xff] %vm850, %v848
        %866 = vst.msk [vmem:[#allocation2 + $0x78] sm:$0xff] %vm850, %v849
        %p867 = scmp.eq.s32.totalorder %s20, 1
        // Predicated region
        $region79: #{spgat_forward.7} parent=69 // pred_check
          %p868 = pneg %p867
        $region80: #{spgat_forward.7} parent=69 // pred_check_branch
          %870 = sbr.rel (%p868) target = $region82
        $region81: #{spgat_forward.7} parent=69 // pred_region
          %v871 = vld [vmem:[#allocation3] sm:$0xff]
          %v872 = vld [vmem:[#allocation3 + $0x8] sm:$0xff]
          %v873 = vld [vmem:[#allocation3 + $0x10] sm:$0xff]
          %v874 = vld [vmem:[#allocation3 + $0x18] sm:$0xff]
          %v875 = vld [vmem:[#allocation3 + $0x20] sm:$0xff]
          %v876 = vld [vmem:[#allocation3 + $0x28] sm:$0xff]
          %v877 = vld [vmem:[#allocation3 + $0x30] sm:$0xff]
          %v878 = vld [vmem:[#allocation3 + $0x38] sm:$0xff]
          %v879 = vld [vmem:[#allocation3 + $0x40] sm:$0xff]
          %v880 = vld [vmem:[#allocation3 + $0x48] sm:$0xff]
          %v881 = vld [vmem:[#allocation3 + $0x50] sm:$0xff]
          %v882 = vld [vmem:[#allocation3 + $0x58] sm:$0xff]
          %v883 = vld [vmem:[#allocation3 + $0x60] sm:$0xff]
          %v884 = vld [vmem:[#allocation3 + $0x68] sm:$0xff]
          %v885 = vld [vmem:[#allocation3 + $0x70] sm:$0xff]
          %v886 = vld [vmem:[#allocation3 + $0x78] sm:$0xff]
          %v887 = vadd.f32 %v871, 1e-16
          %v888 = vadd.f32 %v872, 1e-16
          %v889 = vadd.f32 %v873, 1e-16
          %v890 = vadd.f32 %v874, 1e-16
          %v891 = vadd.f32 %v875, 1e-16
          %v892 = vadd.f32 %v876, 1e-16
          %v893 = vadd.f32 %v877, 1e-16
          %v894 = vadd.f32 %v878, 1e-16
          %v895 = vadd.f32 %v879, 1e-16
          %v896 = vadd.f32 %v880, 1e-16
          %v897 = vadd.f32 %v881, 1e-16
          %v898 = vadd.f32 %v882, 1e-16
          %v899 = vadd.f32 %v883, 1e-16
          %v900 = vadd.f32 %v884, 1e-16
          %v901 = vadd.f32 %v885, 1e-16
          %v902 = vadd.f32 %v886, 1e-16
          %v903 = vrcp.pop %v887
          %v904 = vrcp.pop %v888
          %v905 = vrcp.pop %v889
          %v906 = vrcp.pop %v890
          %v907 = vrcp.pop %v891
          %v908 = vrcp.pop %v892
          %v909 = vrcp.pop %v893
          %v910 = vrcp.pop %v894
          %v911 = vrcp.pop %v895
          %v912 = vrcp.pop %v896
          %v913 = vrcp.pop %v897
          %v914 = vrcp.pop %v898
          %v915 = vrcp.pop %v899
          %v916 = vrcp.pop %v900
          %v917 = vrcp.pop %v901
          %v918 = vrcp.pop %v902
          %v919 = vld [vmem:[#allocation2] sm:$0xff]
          %v920 = vld [vmem:[#allocation2 + $0x8] sm:$0xff]
          %v921 = vld [vmem:[#allocation2 + $0x10] sm:$0xff]
          %v922 = vld [vmem:[#allocation2 + $0x18] sm:$0xff]
          %v923 = vld [vmem:[#allocation2 + $0x20] sm:$0xff]
          %v924 = vld [vmem:[#allocation2 + $0x28] sm:$0xff]
          %v925 = vld [vmem:[#allocation2 + $0x30] sm:$0xff]
          %v926 = vld [vmem:[#allocation2 + $0x38] sm:$0xff]
          %v927 = vld [vmem:[#allocation2 + $0x40] sm:$0xff]
          %v928 = vld [vmem:[#allocation2 + $0x48] sm:$0xff]
          %v929 = vld [vmem:[#allocation2 + $0x50] sm:$0xff]
          %v930 = vld [vmem:[#allocation2 + $0x58] sm:$0xff]
          %v931 = vld [vmem:[#allocation2 + $0x60] sm:$0xff]
          %v932 = vld [vmem:[#allocation2 + $0x68] sm:$0xff]
          %v933 = vld [vmem:[#allocation2 + $0x70] sm:$0xff]
          %v934 = vld [vmem:[#allocation2 + $0x78] sm:$0xff]
          %936 = vset.pattern.permute.xlu0 0
          %937 = vperm.xlu0 %936, %v903
          %v938 = vpop.permute.xlu0 %937
          %941 = vset.pattern.permute.xlu0 0
          %942 = vperm.xlu0 %941, %v904
          %v943 = vpop.permute.xlu0 %942
          %946 = vset.pattern.permute.xlu0 0
          %947 = vperm.xlu0 %946, %v905
          %v948 = vpop.permute.xlu0 %947
          %951 = vset.pattern.permute.xlu0 0
          %952 = vperm.xlu0 %951, %v906
          %v953 = vpop.permute.xlu0 %952
          %956 = vset.pattern.permute.xlu0 0
          %957 = vperm.xlu0 %956, %v907
          %v958 = vpop.permute.xlu0 %957
          %961 = vset.pattern.permute.xlu0 0
          %962 = vperm.xlu0 %961, %v908
          %v963 = vpop.permute.xlu0 %962
          %966 = vset.pattern.permute.xlu0 0
          %967 = vperm.xlu0 %966, %v909
          %v968 = vpop.permute.xlu0 %967
          %971 = vset.pattern.permute.xlu0 0
          %972 = vperm.xlu0 %971, %v910
          %v973 = vpop.permute.xlu0 %972
          %976 = vset.pattern.permute.xlu0 0
          %977 = vperm.xlu0 %976, %v911
          %v978 = vpop.permute.xlu0 %977
          %981 = vset.pattern.permute.xlu0 0
          %982 = vperm.xlu0 %981, %v912
          %v983 = vpop.permute.xlu0 %982
          %986 = vset.pattern.permute.xlu0 0
          %987 = vperm.xlu0 %986, %v913
          %v988 = vpop.permute.xlu0 %987
          %991 = vset.pattern.permute.xlu0 0
          %992 = vperm.xlu0 %991, %v914
          %v993 = vpop.permute.xlu0 %992
          %996 = vset.pattern.permute.xlu0 0
          %997 = vperm.xlu0 %996, %v915
          %v998 = vpop.permute.xlu0 %997
          %1001 = vset.pattern.permute.xlu0 0
          %1002 = vperm.xlu0 %1001, %v916
          %v1003 = vpop.permute.xlu0 %1002
          %1006 = vset.pattern.permute.xlu0 0
          %1007 = vperm.xlu0 %1006, %v917
          %v1008 = vpop.permute.xlu0 %1007
          %1011 = vset.pattern.permute.xlu0 0
          %1012 = vperm.xlu0 %1011, %v918
          %v1013 = vpop.permute.xlu0 %1012
          %v1015 = vmul.f32 %v919, %v938
          %v1016 = vmul.f32 %v920, %v943
          %v1017 = vmul.f32 %v921, %v948
          %v1018 = vmul.f32 %v922, %v953
          %v1019 = vmul.f32 %v923, %v958
          %v1020 = vmul.f32 %v924, %v963
          %v1021 = vmul.f32 %v925, %v968
          %v1022 = vmul.f32 %v926, %v973
          %v1023 = vmul.f32 %v927, %v978
          %v1024 = vmul.f32 %v928, %v983
          %v1025 = vmul.f32 %v929, %v988
          %v1026 = vmul.f32 %v930, %v993
          %v1027 = vmul.f32 %v931, %v998
          %v1028 = vmul.f32 %v932, %v1003
          %v1029 = vmul.f32 %v933, %v1008
          %v1030 = vmul.f32 %v934, %v1013
          %vm1031 = vcmp.gt.f32.partialorder %v1015, 0.0
          %vm1032 = vcmp.gt.f32.partialorder %v1016, 0.0
          %vm1033 = vcmp.gt.f32.partialorder %v1017, 0.0
          %vm1034 = vcmp.gt.f32.partialorder %v1018, 0.0
          %vm1035 = vcmp.gt.f32.partialorder %v1019, 0.0
          %vm1036 = vcmp.gt.f32.partialorder %v1020, 0.0
          %vm1037 = vcmp.gt.f32.partialorder %v1021, 0.0
          %vm1038 = vcmp.gt.f32.partialorder %v1022, 0.0
          %vm1039 = vcmp.gt.f32.partialorder %v1023, 0.0
          %vm1040 = vcmp.gt.f32.partialorder %v1024, 0.0
          %vm1041 = vcmp.gt.f32.partialorder %v1025, 0.0
          %vm1042 = vcmp.gt.f32.partialorder %v1026, 0.0
          %vm1043 = vcmp.gt.f32.partialorder %v1027, 0.0
          %vm1044 = vcmp.gt.f32.partialorder %v1028, 0.0
          %vm1045 = vcmp.gt.f32.partialorder %v1029, 0.0
          %vm1046 = vcmp.gt.f32.partialorder %v1030, 0.0
          %v1047 = vmul.f32 %v1015, 1.442695
          %v1048 = vpow.pop %v1047
          %v1049 = vmul.f32 %v1016, 1.442695
          %v1050 = vpow.pop %v1049
          %v1051 = vmul.f32 %v1017, 1.442695
          %v1052 = vpow.pop %v1051
          %v1053 = vmul.f32 %v1018, 1.442695
          %v1054 = vpow.pop %v1053
          %v1055 = vmul.f32 %v1019, 1.442695
          %v1056 = vpow.pop %v1055
          %v1057 = vmul.f32 %v1020, 1.442695
          %v1058 = vpow.pop %v1057
          %v1059 = vmul.f32 %v1021, 1.442695
          %v1060 = vpow.pop %v1059
          %v1061 = vmul.f32 %v1022, 1.442695
          %v1062 = vpow.pop %v1061
          %v1063 = vmul.f32 %v1023, 1.442695
          %v1064 = vpow.pop %v1063
          %v1065 = vmul.f32 %v1024, 1.442695
          %v1066 = vpow.pop %v1065
          %v1067 = vmul.f32 %v1025, 1.442695
          %v1068 = vpow.pop %v1067
          %v1069 = vmul.f32 %v1026, 1.442695
          %v1070 = vpow.pop %v1069
          %v1071 = vmul.f32 %v1027, 1.442695
          %v1072 = vpow.pop %v1071
          %v1073 = vmul.f32 %v1028, 1.442695
          %v1074 = vpow.pop %v1073
          %v1075 = vmul.f32 %v1029, 1.442695
          %v1076 = vpow.pop %v1075
          %v1077 = vmul.f32 %v1030, 1.442695
          %v1078 = vpow.pop %v1077
          %v1079 = vsub.f32 %v1048, 1.0
          %v1080 = vsub.f32 %v1050, 1.0
          %v1081 = vsub.f32 %v1052, 1.0
          %v1082 = vsub.f32 %v1054, 1.0
          %v1083 = vsub.f32 %v1056, 1.0
          %v1084 = vsub.f32 %v1058, 1.0
          %v1085 = vsub.f32 %v1060, 1.0
          %v1086 = vsub.f32 %v1062, 1.0
          %v1087 = vsub.f32 %v1064, 1.0
          %v1088 = vsub.f32 %v1066, 1.0
          %v1089 = vsub.f32 %v1068, 1.0
          %v1090 = vsub.f32 %v1070, 1.0
          %v1091 = vsub.f32 %v1072, 1.0
          %v1092 = vsub.f32 %v1074, 1.0
          %v1093 = vsub.f32 %v1076, 1.0
          %v1094 = vsub.f32 %v1078, 1.0
          %v1095 = vsel %vm1031, %v1015, %v1079
          %v1096 = vsel %vm1032, %v1016, %v1080
          %v1097 = vsel %vm1033, %v1017, %v1081
          %v1098 = vsel %vm1034, %v1018, %v1082
          %v1099 = vsel %vm1035, %v1019, %v1083
          %v1100 = vsel %vm1036, %v1020, %v1084
          %v1101 = vsel %vm1037, %v1021, %v1085
          %v1102 = vsel %vm1038, %v1022, %v1086
          %v1103 = vsel %vm1039, %v1023, %v1087
          %v1104 = vsel %vm1040, %v1024, %v1088
          %v1105 = vsel %vm1041, %v1025, %v1089
          %v1106 = vsel %vm1042, %v1026, %v1090
          %v1107 = vsel %vm1043, %v1027, %v1091
          %v1108 = vsel %vm1044, %v1028, %v1092
          %v1109 = vsel %vm1045, %v1029, %v1093
          %v1110 = vsel %vm1046, %v1030, %v1094
          %v1111 = vsel %vm850, %v1095, -inf
          %1112 = vmax.xlane.f32.xlu0 %v1111
          %v1113 = vpop.xlane.xlu0 %1112
          %v1114 = vsel %vm850, %v1096, -inf
          %1115 = vmax.xlane.f32.xlu0 %v1114
          %v1116 = vpop.xlane.xlu0 %1115
          %v1117 = vsel %vm850, %v1097, -inf
          %1118 = vmax.xlane.f32.xlu0 %v1117
          %v1119 = vpop.xlane.xlu0 %1118
          %v1120 = vsel %vm850, %v1098, -inf
          %1121 = vmax.xlane.f32.xlu0 %v1120
          %v1122 = vpop.xlane.xlu0 %1121
          %v1123 = vsel %vm850, %v1099, -inf
          %1124 = vmax.xlane.f32.xlu0 %v1123
          %v1125 = vpop.xlane.xlu0 %1124
          %v1126 = vsel %vm850, %v1100, -inf
          %1127 = vmax.xlane.f32.xlu0 %v1126
          %v1128 = vpop.xlane.xlu0 %1127
          %v1129 = vsel %vm850, %v1101, -inf
          %1130 = vmax.xlane.f32.xlu0 %v1129
          %v1131 = vpop.xlane.xlu0 %1130
          %v1132 = vsel %vm850, %v1102, -inf
          %1133 = vmax.xlane.f32.xlu0 %v1132
          %v1134 = vpop.xlane.xlu0 %1133
          %v1135 = vsel %vm850, %v1103, -inf
          %1136 = vmax.xlane.f32.xlu0 %v1135
          %v1137 = vpop.xlane.xlu0 %1136
          %v1138 = vsel %vm850, %v1104, -inf
          %1139 = vmax.xlane.f32.xlu0 %v1138
          %v1140 = vpop.xlane.xlu0 %1139
          %v1141 = vsel %vm850, %v1105, -inf
          %1142 = vmax.xlane.f32.xlu0 %v1141
          %v1143 = vpop.xlane.xlu0 %1142
          %v1144 = vsel %vm850, %v1106, -inf
          %1145 = vmax.xlane.f32.xlu0 %v1144
          %v1146 = vpop.xlane.xlu0 %1145
          %v1147 = vsel %vm850, %v1107, -inf
          %1148 = vmax.xlane.f32.xlu0 %v1147
          %v1149 = vpop.xlane.xlu0 %1148
          %v1150 = vsel %vm850, %v1108, -inf
          %1151 = vmax.xlane.f32.xlu0 %v1150
          %v1152 = vpop.xlane.xlu0 %1151
          %v1153 = vsel %vm850, %v1109, -inf
          %1154 = vmax.xlane.f32.xlu0 %v1153
          %v1155 = vpop.xlane.xlu0 %1154
          %v1156 = vsel %vm850, %v1110, -inf
          %1157 = vmax.xlane.f32.xlu0 %v1156
          %v1158 = vpop.xlane.xlu0 %1157
          %v1159 = vsub.f32 %v1095, %v1113
          %v1160 = vsub.f32 %v1096, %v1116
          %v1161 = vsub.f32 %v1097, %v1119
          %v1162 = vsub.f32 %v1098, %v1122
          %v1163 = vsub.f32 %v1099, %v1125
          %v1164 = vsub.f32 %v1100, %v1128
          %v1165 = vsub.f32 %v1101, %v1131
          %v1166 = vsub.f32 %v1102, %v1134
          %v1167 = vsub.f32 %v1103, %v1137
          %v1168 = vsub.f32 %v1104, %v1140
          %v1169 = vsub.f32 %v1105, %v1143
          %v1170 = vsub.f32 %v1106, %v1146
          %v1171 = vsub.f32 %v1107, %v1149
          %v1172 = vsub.f32 %v1108, %v1152
          %v1173 = vsub.f32 %v1109, %v1155
          %v1174 = vsub.f32 %v1110, %v1158
          %v1175 = vmul.f32 %v1159, 1.442695
          %v1176 = vpow.pop %v1175
          %v1177 = vmul.f32 %v1160, 1.442695
          %v1178 = vpow.pop %v1177
          %v1179 = vmul.f32 %v1161, 1.442695
          %v1180 = vpow.pop %v1179
          %v1181 = vmul.f32 %v1162, 1.442695
          %v1182 = vpow.pop %v1181
          %v1183 = vmul.f32 %v1163, 1.442695
          %v1184 = vpow.pop %v1183
          %v1185 = vmul.f32 %v1164, 1.442695
          %v1186 = vpow.pop %v1185
          %v1187 = vmul.f32 %v1165, 1.442695
          %v1188 = vpow.pop %v1187
          %v1189 = vmul.f32 %v1166, 1.442695
          %v1190 = vpow.pop %v1189
          %v1191 = vmul.f32 %v1167, 1.442695
          %v1192 = vpow.pop %v1191
          %v1193 = vmul.f32 %v1168, 1.442695
          %v1194 = vpow.pop %v1193
          %v1195 = vmul.f32 %v1169, 1.442695
          %v1196 = vpow.pop %v1195
          %v1197 = vmul.f32 %v1170, 1.442695
          %v1198 = vpow.pop %v1197
          %v1199 = vmul.f32 %v1171, 1.442695
          %v1200 = vpow.pop %v1199
          %v1201 = vmul.f32 %v1172, 1.442695
          %v1202 = vpow.pop %v1201
          %v1203 = vmul.f32 %v1173, 1.442695
          %v1204 = vpow.pop %v1203
          %v1205 = vmul.f32 %v1174, 1.442695
          %v1206 = vpow.pop %v1205
          %v1207 = vsel %vm850, %v1176, 0.0
          %1208 = vadd.xlane.f32.xlu0 %v1207
          %v1209 = vpop.xlane.xlu0 %1208
          %v1210 = vsel %vm850, %v1178, 0.0
          %1211 = vadd.xlane.f32.xlu0 %v1210
          %v1212 = vpop.xlane.xlu0 %1211
          %v1213 = vsel %vm850, %v1180, 0.0
          %1214 = vadd.xlane.f32.xlu0 %v1213
          %v1215 = vpop.xlane.xlu0 %1214
          %v1216 = vsel %vm850, %v1182, 0.0
          %1217 = vadd.xlane.f32.xlu0 %v1216
          %v1218 = vpop.xlane.xlu0 %1217
          %v1219 = vsel %vm850, %v1184, 0.0
          %1220 = vadd.xlane.f32.xlu0 %v1219
          %v1221 = vpop.xlane.xlu0 %1220
          %v1222 = vsel %vm850, %v1186, 0.0
          %1223 = vadd.xlane.f32.xlu0 %v1222
          %v1224 = vpop.xlane.xlu0 %1223
          %v1225 = vsel %vm850, %v1188, 0.0
          %1226 = vadd.xlane.f32.xlu0 %v1225
          %v1227 = vpop.xlane.xlu0 %1226
          %v1228 = vsel %vm850, %v1190, 0.0
          %1229 = vadd.xlane.f32.xlu0 %v1228
          %v1230 = vpop.xlane.xlu0 %1229
          %v1231 = vsel %vm850, %v1192, 0.0
          %1232 = vadd.xlane.f32.xlu0 %v1231
          %v1233 = vpop.xlane.xlu0 %1232
          %v1234 = vsel %vm850, %v1194, 0.0
          %1235 = vadd.xlane.f32.xlu0 %v1234
          %v1236 = vpop.xlane.xlu0 %1235
          %v1237 = vsel %vm850, %v1196, 0.0
          %1238 = vadd.xlane.f32.xlu0 %v1237
          %v1239 = vpop.xlane.xlu0 %1238
          %v1240 = vsel %vm850, %v1198, 0.0
          %1241 = vadd.xlane.f32.xlu0 %v1240
          %v1242 = vpop.xlane.xlu0 %1241
          %v1243 = vsel %vm850, %v1200, 0.0
          %1244 = vadd.xlane.f32.xlu0 %v1243
          %v1245 = vpop.xlane.xlu0 %1244
          %v1246 = vsel %vm850, %v1202, 0.0
          %1247 = vadd.xlane.f32.xlu0 %v1246
          %v1248 = vpop.xlane.xlu0 %1247
          %v1249 = vsel %vm850, %v1204, 0.0
          %1250 = vadd.xlane.f32.xlu0 %v1249
          %v1251 = vpop.xlane.xlu0 %1250
          %v1252 = vsel %vm850, %v1206, 0.0
          %1253 = vadd.xlane.f32.xlu0 %v1252
          %v1254 = vpop.xlane.xlu0 %1253
          %v1255 = vlog2.pop %v1209
          %v1256 = vmul.f32 %v1255, 0.6931472
          %v1257 = vlog2.pop %v1212
          %v1258 = vmul.f32 %v1257, 0.6931472
          %v1259 = vlog2.pop %v1215
          %v1260 = vmul.f32 %v1259, 0.6931472
          %v1261 = vlog2.pop %v1218
          %v1262 = vmul.f32 %v1261, 0.6931472
          %v1263 = vlog2.pop %v1221
          %v1264 = vmul.f32 %v1263, 0.6931472
          %v1265 = vlog2.pop %v1224
          %v1266 = vmul.f32 %v1265, 0.6931472
          %v1267 = vlog2.pop %v1227
          %v1268 = vmul.f32 %v1267, 0.6931472
          %v1269 = vlog2.pop %v1230
          %v1270 = vmul.f32 %v1269, 0.6931472
          %v1271 = vlog2.pop %v1233
          %v1272 = vmul.f32 %v1271, 0.6931472
          %v1273 = vlog2.pop %v1236
          %v1274 = vmul.f32 %v1273, 0.6931472
          %v1275 = vlog2.pop %v1239
          %v1276 = vmul.f32 %v1275, 0.6931472
          %v1277 = vlog2.pop %v1242
          %v1278 = vmul.f32 %v1277, 0.6931472
          %v1279 = vlog2.pop %v1245
          %v1280 = vmul.f32 %v1279, 0.6931472
          %v1281 = vlog2.pop %v1248
          %v1282 = vmul.f32 %v1281, 0.6931472
          %v1283 = vlog2.pop %v1251
          %v1284 = vmul.f32 %v1283, 0.6931472
          %v1285 = vlog2.pop %v1254
          %v1286 = vmul.f32 %v1285, 0.6931472
          %v1287 = vsub.f32 %v1159, %v1256
          %v1288 = vsub.f32 %v1160, %v1258
          %v1289 = vsub.f32 %v1161, %v1260
          %v1290 = vsub.f32 %v1162, %v1262
          %v1291 = vsub.f32 %v1163, %v1264
          %v1292 = vsub.f32 %v1164, %v1266
          %v1293 = vsub.f32 %v1165, %v1268
          %v1294 = vsub.f32 %v1166, %v1270
          %v1295 = vsub.f32 %v1167, %v1272
          %v1296 = vsub.f32 %v1168, %v1274
          %v1297 = vsub.f32 %v1169, %v1276
          %v1298 = vsub.f32 %v1170, %v1278
          %v1299 = vsub.f32 %v1171, %v1280
          %v1300 = vsub.f32 %v1172, %v1282
          %v1301 = vsub.f32 %v1173, %v1284
          %v1302 = vsub.f32 %v1174, %v1286
          %1303 = vst.msk [vmem:[%s320] sm:$0xff] %vm850, %v1287
          %1304 = vst.msk [vmem:[%s320 + $0x8] sm:$0xff] %vm850, %v1288
          %1305 = vst.msk [vmem:[%s320 + $0x10] sm:$0xff] %vm850, %v1289
          %1306 = vst.msk [vmem:[%s320 + $0x18] sm:$0xff] %vm850, %v1290
          %1307 = vst.msk [vmem:[%s320 + $0x20] sm:$0xff] %vm850, %v1291
          %1308 = vst.msk [vmem:[%s320 + $0x28] sm:$0xff] %vm850, %v1292
          %1309 = vst.msk [vmem:[%s320 + $0x30] sm:$0xff] %vm850, %v1293
          %1310 = vst.msk [vmem:[%s320 + $0x38] sm:$0xff] %vm850, %v1294
          %1311 = vst.msk [vmem:[%s320 + $0x40] sm:$0xff] %vm850, %v1295
          %1312 = vst.msk [vmem:[%s320 + $0x48] sm:$0xff] %vm850, %v1296
          %1313 = vst.msk [vmem:[%s320 + $0x50] sm:$0xff] %vm850, %v1297
          %1314 = vst.msk [vmem:[%s320 + $0x58] sm:$0xff] %vm850, %v1298
          %1315 = vst.msk [vmem:[%s320 + $0x60] sm:$0xff] %vm850, %v1299
          %1316 = vst.msk [vmem:[%s320 + $0x68] sm:$0xff] %vm850, %v1300
          %1317 = vst.msk [vmem:[%s320 + $0x70] sm:$0xff] %vm850, %v1301
          %1318 = vst.msk [vmem:[%s320 + $0x78] sm:$0xff] %vm850, %v1302
        $region82: #{spgat_forward.7} parent=69 // pred_fallthru
          _
        %s1319 = smul.u32 16, %s19
        %p1320 = scmp.lt.s32.totalorder %s1319, 31
        %s1321 = scalar_select %p1320, %s1319, 31
        %s1322 = smul.addr %s1321, 8
        %s1323 = scalar_lea.vmem %s4, %s1322
        // Predicated region
        $region83: #{spgat_forward.7} parent=69 // pred_check
          %p1324 = pneg %p151
        $region84: #{spgat_forward.7} parent=69 // pred_check_branch
          %1326 = sbr.rel (%p1324) target = $region86
        $region85: #{spgat_forward.7} parent=69 // pred_region
          %s1327 = smul.u32 16, %s19
        $region86: #{spgat_forward.7} parent=69 // pred_fallthru
          _
      $region70: #{spgat_forward.7} parent=5 // pred_fallthru
        _
      %p1328 = scmp.le.s32.totalorder 2, %s10
      // Predicated region
      $region87: #{spgat_forward.7} parent=5 // pred_check
        %p1329 = pneg %p1328
      $region88: #{spgat_forward.7} parent=5 // pred_check_branch
        %1331 = sbr.rel (%p1329) target = $region90
      $region89: #{spgat_forward.7} parent=5 // pred_region
        %s1332 = ssub.s32 %s10, 2
        // Predicated region
        $region91: #{spgat_forward.7} parent=89 // pred_check
          %p1333 = pneg %p157
        $region92: #{spgat_forward.7} parent=89 // pred_check_branch
          %1335 = sbr.rel (%p1333) target = $region94
        $region93: #{spgat_forward.7} parent=89 // pred_region
          %s1336 = smul.u32 16, %s21
          %p1337 = scmp.lt.s32.totalorder %s1336, 31
          %s1338 = scalar_select %p1337, %s1336, 31
          %s1339 = smul.addr %s1338, 8
          %s1340 = scalar_lea.vmem %s4, %s1339
        $region94: #{spgat_forward.7} parent=89 // pred_fallthru
          _
      $region90: #{spgat_forward.7} parent=5 // pred_fallthru
        _
    $region6: #{spgat_forward.7} parent=1 // loop_footer
      %s14 = sadd.s32 1, %s10
    $region7: #{spgat_forward.7} parent=1 // loop_footer_branch
      %9 = sbr.rel target = $region3
    $region8: #{spgat_forward.7} parent=1 // loop_exit
      _

// kernel: spgat_forward.5
$region0: #{spgat_forward.5}
  #allocation0 [shape = 'u32[]', space=smem, size = 0x4, offset = 0x4, fixed_abs, tag = 'smem constant byte address 0x4 - core index']
  #allocation1 [shape = 'u32[72,128]{1,0:T(1,128)}', space=vmem, size = 0x9000, scoped, tag = 'internal scratch']
  #allocation2 [shape = 'f32[128,32]{1,0:T(8,128)}', space=vmem, size = 0x10000, scoped, tag = 'scratch operand']
  #allocation3 [shape = 'f32[128,2]{1,0:T(8,128)}', space=vmem, size = 0x10000, scoped, tag = 'scratch operand']
  %s0 = inlined_call_operand.vmem [shape: f32[256,2], index: 0, kind: input, shape index: {}]
  %s1 = inlined_call_operand.vmem [shape: f32[2,256], index: 1, kind: input, shape index: {}]
  %s2 = inlined_call_operand.vmem [shape: s8[256,256], index: 2, kind: input, shape index: {}]
  %s3 = inlined_call_operand.vmem [shape: f32[256,32], index: 3, kind: input, shape index: {}]
  %s4 = inlined_call_operand.vmem [shape: f32[256,32], index: 4, kind: output, shape index: {}]
  %s5 = sld [smem:[#allocation0]]
  $region95: #{spgat_forward.5} parent=0
    _
  %s7 = ssub.s32 1, %s5
  %s8 = scalar_select 0, %s7, %s5
  $region1: #{spgat_forward.5} parent=0
    #allocation4 [shape = 'u8[32768]{0}', space=vmem, size = 0x8000, scoped, tag = 'input window, operand 2']
    loop: start=0, step=1, limit=6
    $region2: #{spgat_forward.5} parent=1 // loop_pre_header
      _
    $region3: #{spgat_forward.5} parent=1 // loop_header
      %s10 = sphi 0, %s14
      %p11 = scmp.ge.s32.totalorder %s10, 6
      %s17 = sphi 0, %s29
      %s18 = sphi 0, %s25
      %s19 = sphi 0, %s17
      %s20 = sphi 0, %s18
      %s21 = sphi 0, %s19
      %s22 = sphi 0, %s20
      %s32 = sphi 0, %s34
      %s35 = sphi 0, %s32
      %s36 = sphi 0, %s35
      %s52 = sphi 0, %s36
      %s58 = sphi 0, %s60
      %s61 = sphi 0, %s58
      %s62 = sphi 0, %s61
      %s78 = sphi 0, %s62
      %s86 = sphi 0, %s88
      %s89 = sphi 0, %s86
      %s90 = sphi 0, %s89
      %s106 = sphi 0, %s90
      %s112 = sphi 0, %s114
      %s115 = sphi 0, %s112
      %s116 = sphi 0, %s115
      %s132 = sphi 0, %s116
      %s138 = sphi 0, %s140
      %s141 = sphi 0, %s138
      %s142 = sphi 0, %s141
      %s158 = sphi 0, %s142
    $region4: #{spgat_forward.5} parent=1 // loop_header_branch
      %13 = sbr.rel (%p11) target = $region8
    $region5: #{spgat_forward.5} parent=1 // loop_body
      %s15 = ssub.s32 %s10, 1
      %s16 = ssub.s32 %s10, 2
      %s23 = sadd.s32 1, %s18
      %p24 = scmp.ge.s32.totalorder %s23, 2
      %s25 = scalar_select %p24, 0, %s23
      %s26 = sadd.s32 1, %s17
      %s27 = scalar_select %p24, %s26, %s17
      %p28 = scmp.ge.s32.totalorder %s27, 2
      %s29 = scalar_select %p28, 0, %s27
      %s30 = ssub.s32 %s17, %s29
      %p31 = scmp.eq.s32.totalorder %s30, 0
      %s33 = sadd.s32 %s32, 1
      %s34 = scalar_select %p31, %s32, %s33
      %p37 = pneg %p31
      %p38 = scmp.eq.s32.totalorder %s10, 3
      %p39 = por %p37, %p38
      %p40 = scmp.ne.s32.totalorder %s32, %s35
      %p41 = scmp.eq.s32.totalorder %s10, 0
      %p42 = por %p40, %p41
      %p43 = scmp.ne.s32.totalorder %s32, %s35
      %p44 = scmp.eq.s32.totalorder %s15, 3
      %p45 = por %p43, %p44
      %p46 = scmp.ne.s32.totalorder %s35, %s36
      %p47 = scmp.eq.s32.totalorder %s15, 0
      %p48 = por %p46, %p47
      %p49 = scmp.ne.s32.totalorder %s35, %s36
      %p50 = scmp.eq.s32.totalorder %s16, 3
      %p51 = por %p49, %p50
      %p53 = scmp.ne.s32.totalorder %s36, %s52
      %p54 = scmp.eq.s32.totalorder %s16, 0
      %p55 = por %p53, %p54
      %s56 = ssub.s32 %s18, %s25
      %p57 = scmp.eq.s32.totalorder %s56, 0
      %s59 = sadd.s32 %s58, 1
      %s60 = scalar_select %p57, %s58, %s59
      %p63 = pneg %p57
      %p64 = scmp.eq.s32.totalorder %s10, 3
      %p65 = por %p63, %p64
      %p66 = scmp.ne.s32.totalorder %s58, %s61
      %p67 = scmp.eq.s32.totalorder %s10, 0
      %p68 = por %p66, %p67
      %p69 = scmp.ne.s32.totalorder %s58, %s61
      %p70 = scmp.eq.s32.totalorder %s15, 3
      %p71 = por %p69, %p70
      %p72 = scmp.ne.s32.totalorder %s61, %s62
      %p73 = scmp.eq.s32.totalorder %s15, 0
      %p74 = por %p72, %p73
      %p75 = scmp.ne.s32.totalorder %s61, %s62
      %p76 = scmp.eq.s32.totalorder %s16, 3
      %p77 = por %p75, %p76
      %p79 = scmp.ne.s32.totalorder %s62, %s78
      %p80 = scmp.eq.s32.totalorder %s16, 0
      %p81 = por %p79, %p80
      %s82 = ssub.s32 %s17, %s29
      %s83 = ssub.s32 %s18, %s25
      %s84 = sor.u32 %s82, %s83
      %p85 = scmp.eq.s32.totalorder %s84, 0
      %s87 = sadd.s32 %s86, 1
      %s88 = scalar_select %p85, %s86, %s87
      %p91 = pneg %p85
      %p92 = scmp.eq.s32.totalorder %s10, 3
      %p93 = por %p91, %p92
      %p94 = scmp.ne.s32.totalorder %s86, %s89
      %p95 = scmp.eq.s32.totalorder %s10, 0
      %p96 = por %p94, %p95
      %p97 = scmp.ne.s32.totalorder %s86, %s89
      %p98 = scmp.eq.s32.totalorder %s15, 3
      %p99 = por %p97, %p98
      %p100 = scmp.ne.s32.totalorder %s89, %s90
      %p101 = scmp.eq.s32.totalorder %s15, 0
      %p102 = por %p100, %p101
      %p103 = scmp.ne.s32.totalorder %s89, %s90
      %p104 = scmp.eq.s32.totalorder %s16, 3
      %p105 = por %p103, %p104
      %p107 = scmp.ne.s32.totalorder %s90, %s106
      %p108 = scmp.eq.s32.totalorder %s16, 0
      %p109 = por %p107, %p108
      %s110 = ssub.s32 %s18, %s25
      %p111 = scmp.eq.s32.totalorder %s110, 0
      %s113 = sadd.s32 %s112, 1
      %s114 = scalar_select %p111, %s112, %s113
      %p117 = pneg %p111
      %p118 = scmp.eq.s32.totalorder %s10, 3
      %p119 = por %p117, %p118
      %p120 = scmp.ne.s32.totalorder %s112, %s115
      %p121 = scmp.eq.s32.totalorder %s10, 0
      %p122 = por %p120, %p121
      %p123 = scmp.ne.s32.totalorder %s112, %s115
      %p124 = scmp.eq.s32.totalorder %s15, 3
      %p125 = por %p123, %p124
      %p126 = scmp.ne.s32.totalorder %s115, %s116
      %p127 = scmp.eq.s32.totalorder %s15, 0
      %p128 = por %p126, %p127
      %p129 = scmp.ne.s32.totalorder %s115, %s116
      %p130 = scmp.eq.s32.totalorder %s16, 3
      %p131 = por %p129, %p130
      %p133 = scmp.ne.s32.totalorder %s116, %s132
      %p134 = scmp.eq.s32.totalorder %s16, 0
      %p135 = por %p133, %p134
      %s136 = ssub.s32 %s17, %s29
      %p137 = scmp.eq.s32.totalorder %s136, 0
      %s139 = sadd.s32 %s138, 1
      %s140 = scalar_select %p137, %s138, %s139
      %p143 = pneg %p137
      %p144 = scmp.eq.s32.totalorder %s10, 3
      %p145 = por %p143, %p144
      %p146 = scmp.ne.s32.totalorder %s138, %s141
      %p147 = scmp.eq.s32.totalorder %s10, 0
      %p148 = por %p146, %p147
      %p149 = scmp.ne.s32.totalorder %s138, %s141
      %p150 = scmp.eq.s32.totalorder %s15, 3
      %p151 = por %p149, %p150
      %p152 = scmp.ne.s32.totalorder %s141, %s142
      %p153 = scmp.eq.s32.totalorder %s15, 0
      %p154 = por %p152, %p153
      %p155 = scmp.ne.s32.totalorder %s141, %s142
      %p156 = scmp.eq.s32.totalorder %s16, 3
      %p157 = por %p155, %p156
      %p159 = scmp.ne.s32.totalorder %s142, %s158
      %p160 = scmp.eq.s32.totalorder %s16, 0
      %p161 = por %p159, %p160
      %p162 = scmp.le.s32.totalorder 1, %s10
      %p163 = scmp.lt.s32.totalorder %s10, 5
      %p164 = pnand %p162, %p163
      %p165 = pneg %p164
      // Predicated region
      $region9: #{spgat_forward.5} parent=5 // pred_check
        _
      $region10: #{spgat_forward.5} parent=5 // pred_check_branch
        %167 = sbr.rel (%p164) target = $region12
      $region11: #{spgat_forward.5} parent=5 // pred_region
        %s168 = ssub.s32 %s10, 1
      $region12: #{spgat_forward.5} parent=5 // pred_fallthru
        _
      %p169 = scmp.lt.s32.totalorder %s10, 4
      // Predicated region
      $region13: #{spgat_forward.5} parent=5 // pred_check
        %p170 = pneg %p169
      $region14: #{spgat_forward.5} parent=5 // pred_check_branch
        %172 = sbr.rel (%p170) target = $region16
      $region15: #{spgat_forward.5} parent=5 // pred_region
        // Predicated region
        $region17: #{spgat_forward.5} parent=15 // pred_check
          %p173 = pneg %p42
        $region18: #{spgat_forward.5} parent=15 // pred_check_branch
          %175 = sbr.rel (%p173) target = $region20
        $region19: #{spgat_forward.5} parent=15 // pred_region
          %s176 = smul.u32 16, %s17
          %p177 = scmp.lt.s32.totalorder %s176, 31
          %s178 = scalar_select %p177, %s176, 31
          %s179 = smul.addr %s178, 8
          %s180 = scalar_lea.vmem %s0, %s179
          %s181 = smul.u32 16, %s17
        $region20: #{spgat_forward.5} parent=15 // pred_fallthru
          _
        // Predicated region
        $region21: #{spgat_forward.5} parent=15 // pred_check
          %p182 = pneg %p68
        $region22: #{spgat_forward.5} parent=15 // pred_check_branch
          %184 = sbr.rel (%p182) target = $region24
        $region23: #{spgat_forward.5} parent=15 // pred_region
          %p185 = scmp.lt.s32.totalorder %s18, 1
          %s186 = scalar_select %p185, %s18, 1
          %s187 = smul.addr %s186, 2
          %s188 = scalar_lea.vmem %s1, %s187
        $region24: #{spgat_forward.5} parent=15 // pred_fallthru
          _
        // Predicated region
        $region25: #{spgat_forward.5} parent=15 // pred_check
          %p189 = pneg %p96
        $region26: #{spgat_forward.5} parent=15 // pred_check_branch
          %191 = sbr.rel (%p189) target = $region28
        $region27: #{spgat_forward.5} parent=15 // pred_region
          %s192 = sand.u32 %s86, 1
          %s193 = sand.u32 %s86, 1
          %s194 = smul.addr %s193, 32
          %s195 = scalar_lea.vmem [#allocation4], %s194
          %s196 = smul.u32 4, %s17
          %s197 = smul.addr %s196, 2
          %s198 = sadd.s32 %s18, %s197
          %s199 = smul.addr %s198, 8
          %s200 = scalar_lea.vmem %s2, %s199
          // Predicated region
          $region29: #{spgat_forward.5} parent=27 // pred_check
            _
          $region30: #{spgat_forward.5} parent=27 // pred_check_branch
            %202 = sbr.rel (0) target = $region32
          $region31: #{spgat_forward.5} parent=27 // pred_region
            // Predicated region
            $region33: #{spgat_forward.5} parent=31 // pred_check
              _
            $region34: #{spgat_forward.5} parent=31 // pred_check_branch
              %204 = sbr.rel (0) target = $region36
            $region35: #{spgat_forward.5} parent=31 // pred_region
              // Predicated region
              $region48: #{spgat_forward.5} parent=35 // pred_check
                _
              $region49: #{spgat_forward.5} parent=35 // pred_check_branch
                %226 = sbr.rel (0) target = $region51
              $region50: #{spgat_forward.5} parent=35 // pred_region
                loop: start=0, step=1, limit=1
                $region52: #{spgat_forward.5} parent=50 // loop_pre_header
                  _
                $region53: #{spgat_forward.5} parent=50 // loop_header
                  %s228 = sphi 0, %s232
                  %p229 = scmp.ge.s32.totalorder %s228, 1
                  %s233 = sphi %s200, %s200
                  %s234 = sphi %s195, %s195
                $region54: #{spgat_forward.5} parent=50 // loop_header_branch
                  %231 = sbr.rel (%p229) target = $region58
                $region55: #{spgat_forward.5} parent=50 // loop_body
                  %v235 = vld [vmem:[%s233] sm:$0xff]
                  %236 = vst [vmem:[%s234] sm:$0xff] %v235
                  %v237 = vld [vmem:[%s233 + $0x10] sm:$0xff]
                  %238 = vst [vmem:[%s234 + $0x8] sm:$0xff] %v237
                  %v239 = vld [vmem:[%s233 + $0x20] sm:$0xff]
                  %240 = vst [vmem:[%s234 + $0x10] sm:$0xff] %v239
                  %v241 = vld [vmem:[%s233 + $0x30] sm:$0xff]
                  %242 = vst [vmem:[%s234 + $0x18] sm:$0xff] %v241
                $region56: #{spgat_forward.5} parent=50 // loop_footer
                  %s232 = sadd.s32 1, %s228
                $region57: #{spgat_forward.5} parent=50 // loop_footer_branch
                  %227 = sbr.rel target = $region53
                $region58: #{spgat_forward.5} parent=50 // loop_exit
                  _
              $region51: #{spgat_forward.5} parent=35 // pred_fallthru
                _
              // Predicated region
              $region59: #{spgat_forward.5} parent=35 // pred_check
                _
              $region60: #{spgat_forward.5} parent=35 // pred_check_branch
                %244 = sbr.rel target = $region62
              $region61: #{spgat_forward.5} parent=35 // pred_region
                _
              $region62: #{spgat_forward.5} parent=35 // pred_fallthru
                _
            $region36: #{spgat_forward.5} parent=31 // pred_fallthru
              _
            // Predicated region
            $region37: #{spgat_forward.5} parent=31 // pred_check
              _
            $region38: #{spgat_forward.5} parent=31 // pred_check_branch
              %206 = sbr.rel target = $region40
            $region39: #{spgat_forward.5} parent=31 // pred_region
              %s208 = ssub.s32 256, 1
              loop: start=0, step=1, limit=1
              $region41: #{spgat_forward.5} parent=39 // loop_pre_header
                _
              $region42: #{spgat_forward.5} parent=39 // loop_header
                %s210 = sphi 0, %s214
                %p211 = scmp.ge.s32.totalorder %s210, 1
                %s215 = sphi %s200, %s200
                %s216 = sphi %s195, %s195
              $region43: #{spgat_forward.5} parent=39 // loop_header_branch
                %213 = sbr.rel (%p211) target = $region47
              $region44: #{spgat_forward.5} parent=39 // loop_body
                %v217 = vld [vmem:[%s215] sm:%s208]
                %218 = vst [vmem:[%s216] sm:%s208] %v217
                %v219 = vld [vmem:[%s215 + $0x10] sm:%s208]
                %220 = vst [vmem:[%s216 + $0x8] sm:%s208] %v219
                %v221 = vld [vmem:[%s215 + $0x20] sm:%s208]
                %222 = vst [vmem:[%s216 + $0x10] sm:%s208] %v221
                %v223 = vld [vmem:[%s215 + $0x30] sm:%s208]
                %224 = vst [vmem:[%s216 + $0x18] sm:%s208] %v223
              $region45: #{spgat_forward.5} parent=39 // loop_footer
                %s214 = sadd.s32 1, %s210
              $region46: #{spgat_forward.5} parent=39 // loop_footer_branch
                %209 = sbr.rel target = $region42
              $region47: #{spgat_forward.5} parent=39 // loop_exit
                _
            $region40: #{spgat_forward.5} parent=31 // pred_fallthru
              _
          $region32: #{spgat_forward.5} parent=27 // pred_fallthru
            _
          %245 = vnop
        $region28: #{spgat_forward.5} parent=15 // pred_fallthru
          _
        // Predicated region
        $region63: #{spgat_forward.5} parent=15 // pred_check
          %p246 = pneg %p122
        $region64: #{spgat_forward.5} parent=15 // pred_check_branch
          %248 = sbr.rel (%p246) target = $region66
        $region65: #{spgat_forward.5} parent=15 // pred_region
          %s249 = smul.u32 16, %s18
          %p250 = scmp.lt.s32.totalorder %s249, 31
          %s251 = scalar_select %p250, %s249, 31
          %s252 = smul.addr %s251, 8
          %s253 = scalar_lea.vmem %s3, %s252
          %s254 = smul.u32 16, %s18
        $region66: #{spgat_forward.5} parent=15 // pred_fallthru
          _
      $region16: #{spgat_forward.5} parent=5 // pred_fallthru
        _
      %p255 = scmp.le.s32.totalorder 1, %s10
      %p256 = scmp.lt.s32.totalorder %s10, 5
      %p257 = pnand %p255, %p256
      %p258 = pneg %p257
      // Predicated region
      $region67: #{spgat_forward.5} parent=5 // pred_check
        _
      $region68: #{spgat_forward.5} parent=5 // pred_check_branch
        %260 = sbr.rel (%p257) target = $region70
      $region69: #{spgat_forward.5} parent=5 // pred_region
        %s261 = ssub.s32 %s10, 1
        %s262 = sand.u32 %s89, 1
        %s263 = sand.u32 %s89, 1
        %s264 = smul.addr %s263, 32
        %s265 = scalar_lea.vmem [#allocation4], %s264
        // Predicated region
        $region71: #{spgat_forward.5} parent=69 // pred_check
          %p266 = pneg %p102
        $region72: #{spgat_forward.5} parent=69 // pred_check_branch
          %268 = sbr.rel (%p266) target = $region74
        $region73: #{spgat_forward.5} parent=69 // pred_region
          _
        $region74: #{spgat_forward.5} parent=69 // pred_fallthru
          _
        %s269 = smul.u32 16, %s19
        %p270 = scmp.lt.s32.totalorder %s269, 31
        %s271 = scalar_select %p270, %s269, 31
        %s272 = smul.addr %s271, 8
        %s273 = scalar_lea.vmem %s0, %s272
        %p274 = pneg %p48
        %p275 = pneg %p45
        %p276 = scmp.lt.s32.totalorder %s20, 1
        %s277 = scalar_select %p276, %s20, 1
        %s278 = smul.addr %s277, 2
        %s279 = scalar_lea.vmem %s1, %s278
        %p280 = pneg %p74
        %p281 = pneg %p71
        %s282 = sand.u32 %s89, 1
        %s283 = sand.u32 %s89, 1
        %s284 = smul.addr %s283, 32
        %s285 = scalar_lea.vmem [#allocation4], %s284
        %p286 = pneg %p102
        %p287 = pneg %p99
        %s288 = smul.u32 16, %s20
        %p289 = scmp.lt.s32.totalorder %s288, 31
        %s290 = scalar_select %p289, %s288, 31
        %s291 = smul.addr %s290, 8
        %s292 = scalar_lea.vmem %s3, %s291
        %p293 = pneg %p128
        %p294 = pneg %p125
        %p295 = pneg %p154
        %p296 = pneg %p151
        %s297 = smul.u32 16, %s19
        %p298 = scmp.lt.s32.totalorder %s297, 31
        %s299 = scalar_select %p298, %s297, 31
        %s300 = smul.addr %s299, 8
        %s301 = scalar_lea.vmem %s4, %s300
        %s302 = smul.u32 16, %s19
        %p303 = scmp.lt.s32.totalorder %s302, 31
        %s304 = scalar_select %p303, %s302, 31
        %s305 = smul.addr %s304, 8
        %s306 = scalar_lea.vmem %s0, %s305
        %s307 = smul.u32 16, %s19
        %p308 = scmp.lt.s32.totalorder %s20, 1
        %s309 = scalar_select %p308, %s20, 1
        %s310 = smul.addr %s309, 2
        %s311 = scalar_lea.vmem %s1, %s310
        %s312 = smul.u32 4, %s19
        %s313 = smul.u32 16, %s20
        %p314 = scmp.lt.s32.totalorder %s313, 31
        %s315 = scalar_select %p314, %s313, 31
        %s316 = smul.addr %s315, 8
        %s317 = scalar_lea.vmem %s3, %s316
        %s318 = smul.u32 16, %s20
        %s319 = smul.u32 16, %s19
        %p320 = scmp.lt.s32.totalorder %s319, 31
        %s321 = scalar_select %p320, %s319, 31
        %s322 = smul.addr %s321, 8
        %s323 = scalar_lea.vmem %s4, %s322
        %s324 = smul.u32 16, %s19
        %p325 = scmp.eq.s32.totalorder %s20, 0
        // Predicated region
        $region75: #{spgat_forward.5} parent=69 // pred_check
          %p326 = pneg %p325
        $region76: #{spgat_forward.5} parent=69 // pred_check_branch
          %328 = sbr.rel (%p326) target = $region78
        $region77: #{spgat_forward.5} parent=69 // pred_region
          %vm329 = vcmask 261120
          %330 = vst.msk [vmem:[#allocation2] sm:$0xff] %vm329, 0.0
          %331 = vst.msk [vmem:[#allocation2 + $0x8] sm:$0xff] %vm329, 0.0
          %332 = vst.msk [vmem:[#allocation2 + $0x10] sm:$0xff] %vm329, 0.0
          %333 = vst.msk [vmem:[#allocation2 + $0x18] sm:$0xff] %vm329, 0.0
          %334 = vst.msk [vmem:[#allocation2 + $0x20] sm:$0xff] %vm329, 0.0
          %335 = vst.msk [vmem:[#allocation2 + $0x28] sm:$0xff] %vm329, 0.0
          %336 = vst.msk [vmem:[#allocation2 + $0x30] sm:$0xff] %vm329, 0.0
          %337 = vst.msk [vmem:[#allocation2 + $0x38] sm:$0xff] %vm329, 0.0
          %338 = vst.msk [vmem:[#allocation2 + $0x40] sm:$0xff] %vm329, 0.0
          %339 = vst.msk [vmem:[#allocation2 + $0x48] sm:$0xff] %vm329, 0.0
          %340 = vst.msk [vmem:[#allocation2 + $0x50] sm:$0xff] %vm329, 0.0
          %341 = vst.msk [vmem:[#allocation2 + $0x58] sm:$0xff] %vm329, 0.0
          %342 = vst.msk [vmem:[#allocation2 + $0x60] sm:$0xff] %vm329, 0.0
          %343 = vst.msk [vmem:[#allocation2 + $0x68] sm:$0xff] %vm329, 0.0
          %344 = vst.msk [vmem:[#allocation2 + $0x70] sm:$0xff] %vm329, 0.0
          %345 = vst.msk [vmem:[#allocation2 + $0x78] sm:$0xff] %vm329, 0.0
          %vm346 = vcmask 15360
          %347 = vst.msk [vmem:[#allocation3] sm:$0xff] %vm346, 0.0
          %348 = vst.msk [vmem:[#allocation3 + $0x8] sm:$0xff] %vm346, 0.0
          %349 = vst.msk [vmem:[#allocation3 + $0x10] sm:$0xff] %vm346, 0.0
          %350 = vst.msk [vmem:[#allocation3 + $0x18] sm:$0xff] %vm346, 0.0
          %351 = vst.msk [vmem:[#allocation3 + $0x20] sm:$0xff] %vm346, 0.0
          %352 = vst.msk [vmem:[#allocation3 + $0x28] sm:$0xff] %vm346, 0.0
          %353 = vst.msk [vmem:[#allocation3 + $0x30] sm:$0xff] %vm346, 0.0
          %354 = vst.msk [vmem:[#allocation3 + $0x38] sm:$0xff] %vm346, 0.0
          %355 = vst.msk [vmem:[#allocation3 + $0x40] sm:$0xff] %vm346, 0.0
          %356 = vst.msk [vmem:[#allocation3 + $0x48] sm:$0xff] %vm346, 0.0
          %357 = vst.msk [vmem:[#allocation3 + $0x50] sm:$0xff] %vm346, 0.0
          %358 = vst.msk [vmem:[#allocation3 + $0x58] sm:$0xff] %vm346, 0.0
          %359 = vst.msk [vmem:[#allocation3 + $0x60] sm:$0xff] %vm346, 0.0
          %360 = vst.msk [vmem:[#allocation3 + $0x68] sm:$0xff] %vm346, 0.0
          %361 = vst.msk [vmem:[#allocation3 + $0x70] sm:$0xff] %vm346, 0.0
          %362 = vst.msk [vmem:[#allocation3 + $0x78] sm:$0xff] %vm346, 0.0
        $region78: #{spgat_forward.5} parent=69 // pred_fallthru
          _
        %v363 = vld [vmem:[%s265] sm:$0xff]
        %v364 = vld [vmem:[%s265 + $0x8] sm:$0xff]
        %v365 = vld [vmem:[%s265 + $0x10] sm:$0xff]
        %v366 = vld [vmem:[%s265 + $0x18] sm:$0xff]
        %v367 = vunpack.c.0.s8 %v363
        %v368 = vunpack.c.1.s8 %v363
        %v369 = vunpack.c.2.s8 %v363
        %v370 = vunpack.c.3.s8 %v363
        %v371 = vunpack.c.0.s8 %v364
        %v372 = vunpack.c.1.s8 %v364
        %v373 = vunpack.c.2.s8 %v364
        %v374 = vunpack.c.3.s8 %v364
        %v375 = vunpack.c.0.s8 %v365
        %v376 = vunpack.c.1.s8 %v365
        %v377 = vunpack.c.2.s8 %v365
        %v378 = vunpack.c.3.s8 %v365
        %v379 = vunpack.c.0.s8 %v366
        %v380 = vunpack.c.1.s8 %v366
        %v381 = vunpack.c.2.s8 %v366
        %v382 = vunpack.c.3.s8 %v366
        %v383 = vcvt.s32.f32 %v367
        %v384 = vcvt.s32.f32 %v368
        %v385 = vcvt.s32.f32 %v369
        %v386 = vcvt.s32.f32 %v370
        %v387 = vcvt.s32.f32 %v371
        %v388 = vcvt.s32.f32 %v372
        %v389 = vcvt.s32.f32 %v373
        %v390 = vcvt.s32.f32 %v374
        %v391 = vcvt.s32.f32 %v375
        %v392 = vcvt.s32.f32 %v376
        %v393 = vcvt.s32.f32 %v377
        %v394 = vcvt.s32.f32 %v378
        %v395 = vcvt.s32.f32 %v379
        %v396 = vcvt.s32.f32 %v380
        %v397 = vcvt.s32.f32 %v381
        %v398 = vcvt.s32.f32 %v382
        %vm399 = vcmp.gt.f32.partialorder %v383, 0.0
        %vm400 = vcmp.gt.f32.partialorder %v384, 0.0
        %vm401 = vcmp.gt.f32.partialorder %v385, 0.0
        %vm402 = vcmp.gt.f32.partialorder %v386, 0.0
        %vm403 = vcmp.gt.f32.partialorder %v387, 0.0
        %vm404 = vcmp.gt.f32.partialorder %v388, 0.0
        %vm405 = vcmp.gt.f32.partialorder %v389, 0.0
        %vm406 = vcmp.gt.f32.partialorder %v390, 0.0
        %vm407 = vcmp.gt.f32.partialorder %v391, 0.0
        %vm408 = vcmp.gt.f32.partialorder %v392, 0.0
        %vm409 = vcmp.gt.f32.partialorder %v393, 0.0
        %vm410 = vcmp.gt.f32.partialorder %v394, 0.0
        %vm411 = vcmp.gt.f32.partialorder %v395, 0.0
        %vm412 = vcmp.gt.f32.partialorder %v396, 0.0
        %vm413 = vcmp.gt.f32.partialorder %v397, 0.0
        %vm414 = vcmp.gt.f32.partialorder %v398, 0.0
        %v415 = vld [vmem:[%s306] sm:$0xff]
        %v416 = vld [vmem:[%s306 + $0x8] sm:$0xff]
        %v417 = vld [vmem:[%s306 + $0x10] sm:$0xff]
        %v418 = vld [vmem:[%s306 + $0x18] sm:$0xff]
        %v419 = vld [vmem:[%s306 + $0x20] sm:$0xff]
        %v420 = vld [vmem:[%s306 + $0x28] sm:$0xff]
        %v421 = vld [vmem:[%s306 + $0x30] sm:$0xff]
        %v422 = vld [vmem:[%s306 + $0x38] sm:$0xff]
        %v423 = vld [vmem:[%s306 + $0x40] sm:$0xff]
        %v424 = vld [vmem:[%s306 + $0x48] sm:$0xff]
        %v425 = vld [vmem:[%s306 + $0x50] sm:$0xff]
        %v426 = vld [vmem:[%s306 + $0x58] sm:$0xff]
        %v427 = vld [vmem:[%s306 + $0x60] sm:$0xff]
        %v428 = vld [vmem:[%s306 + $0x68] sm:$0xff]
        %v429 = vld [vmem:[%s306 + $0x70] sm:$0xff]
        %v430 = vld [vmem:[%s306 + $0x78] sm:$0xff]
        %v431 = vld [vmem:[%s311] sm:$0x1]
        %433 = vset.pattern.permute.xlu0 0
        %434 = vperm.xlu0 %433, %v415
        %v435 = vpop.permute.xlu0 %434
        %438 = vset.pattern.permute.xlu0 0
        %439 = vperm.xlu0 %438, %v416
        %v440 = vpop.permute.xlu0 %439
        %443 = vset.pattern.permute.xlu0 0
        %444 = vperm.xlu0 %443, %v417
        %v445 = vpop.permute.xlu0 %444
        %448 = vset.pattern.permute.xlu0 0
        %449 = vperm.xlu0 %448, %v418
        %v450 = vpop.permute.xlu0 %449
        %453 = vset.pattern.permute.xlu0 0
        %454 = vperm.xlu0 %453, %v419
        %v455 = vpop.permute.xlu0 %454
        %458 = vset.pattern.permute.xlu0 0
        %459 = vperm.xlu0 %458, %v420
        %v460 = vpop.permute.xlu0 %459
        %463 = vset.pattern.permute.xlu0 0
        %464 = vperm.xlu0 %463, %v421
        %v465 = vpop.permute.xlu0 %464
        %468 = vset.pattern.permute.xlu0 0
        %469 = vperm.xlu0 %468, %v422
        %v470 = vpop.permute.xlu0 %469
        %473 = vset.pattern.permute.xlu0 0
        %474 = vperm.xlu0 %473, %v423
        %v475 = vpop.permute.xlu0 %474
        %478 = vset.pattern.permute.xlu0 0
        %479 = vperm.xlu0 %478, %v424
        %v480 = vpop.permute.xlu0 %479
        %483 = vset.pattern.permute.xlu0 0
        %484 = vperm.xlu0 %483, %v425
        %v485 = vpop.permute.xlu0 %484
        %488 = vset.pattern.permute.xlu0 0
        %489 = vperm.xlu0 %488, %v426
        %v490 = vpop.permute.xlu0 %489
        %493 = vset.pattern.permute.xlu0 0
        %494 = vperm.xlu0 %493, %v427
        %v495 = vpop.permute.xlu0 %494
        %498 = vset.pattern.permute.xlu0 0
        %499 = vperm.xlu0 %498, %v428
        %v500 = vpop.permute.xlu0 %499
        %503 = vset.pattern.permute.xlu0 0
        %504 = vperm.xlu0 %503, %v429
        %v505 = vpop.permute.xlu0 %504
        %508 = vset.pattern.permute.xlu0 0
        %509 = vperm.xlu0 %508, %v430
        %v510 = vpop.permute.xlu0 %509
        %v512 = vperm.slane %v431, 0
        %v513 = vadd.f32 %v435, %v512
        %v514 = vadd.f32 %v440, %v512
        %v515 = vadd.f32 %v445, %v512
        %v516 = vadd.f32 %v450, %v512
        %v517 = vadd.f32 %v455, %v512
        %v518 = vadd.f32 %v460, %v512
        %v519 = vadd.f32 %v465, %v512
        %v520 = vadd.f32 %v470, %v512
        %v521 = vadd.f32 %v475, %v512
        %v522 = vadd.f32 %v480, %v512
        %v523 = vadd.f32 %v485, %v512
        %v524 = vadd.f32 %v490, %v512
        %v525 = vadd.f32 %v495, %v512
        %v526 = vadd.f32 %v500, %v512
        %v527 = vadd.f32 %v505, %v512
        %v528 = vadd.f32 %v510, %v512
        %vm529 = vcmp.gt.f32.partialorder %v513, 0.0
        %vm530 = vcmp.gt.f32.partialorder %v514, 0.0
        %vm531 = vcmp.gt.f32.partialorder %v515, 0.0
        %vm532 = vcmp.gt.f32.partialorder %v516, 0.0
        %vm533 = vcmp.gt.f32.partialorder %v517, 0.0
        %vm534 = vcmp.gt.f32.partialorder %v518, 0.0
        %vm535 = vcmp.gt.f32.partialorder %v519, 0.0
        %vm536 = vcmp.gt.f32.partialorder %v520, 0.0
        %vm537 = vcmp.gt.f32.partialorder %v521, 0.0
        %vm538 = vcmp.gt.f32.partialorder %v522, 0.0
        %vm539 = vcmp.gt.f32.partialorder %v523, 0.0
        %vm540 = vcmp.gt.f32.partialorder %v524, 0.0
        %vm541 = vcmp.gt.f32.partialorder %v525, 0.0
        %vm542 = vcmp.gt.f32.partialorder %v526, 0.0
        %vm543 = vcmp.gt.f32.partialorder %v527, 0.0
        %vm544 = vcmp.gt.f32.partialorder %v528, 0.0
        %v545 = vsub.f32 0.0, %v513
        %v546 = vsub.f32 0.0, %v514
        %v547 = vsub.f32 0.0, %v515
        %v548 = vsub.f32 0.0, %v516
        %v549 = vsub.f32 0.0, %v517
        %v550 = vsub.f32 0.0, %v518
        %v551 = vsub.f32 0.0, %v519
        %v552 = vsub.f32 0.0, %v520
        %v553 = vsub.f32 0.0, %v521
        %v554 = vsub.f32 0.0, %v522
        %v555 = vsub.f32 0.0, %v523
        %v556 = vsub.f32 0.0, %v524
        %v557 = vsub.f32 0.0, %v525
        %v558 = vsub.f32 0.0, %v526
        %v559 = vsub.f32 0.0, %v527
        %v560 = vsub.f32 0.0, %v528
        %v561 = vmul.f32 %v513, -0.2
        %v562 = vmul.f32 %v514, -0.2
        %v563 = vmul.f32 %v515, -0.2
        %v564 = vmul.f32 %v516, -0.2
        %v565 = vmul.f32 %v517, -0.2
        %v566 = vmul.f32 %v518, -0.2
        %v567 = vmul.f32 %v519, -0.2
        %v568 = vmul.f32 %v520, -0.2
        %v569 = vmul.f32 %v521, -0.2
        %v570 = vmul.f32 %v522, -0.2
        %v571 = vmul.f32 %v523, -0.2
        %v572 = vmul.f32 %v524, -0.2
        %v573 = vmul.f32 %v525, -0.2
        %v574 = vmul.f32 %v526, -0.2
        %v575 = vmul.f32 %v527, -0.2
        %v576 = vmul.f32 %v528, -0.2
        %v577 = vsel %vm529, %v545, %v561
        %v578 = vsel %vm530, %v546, %v562
        %v579 = vsel %vm531, %v547, %v563
        %v580 = vsel %vm532, %v548, %v564
        %v581 = vsel %vm533, %v549, %v565
        %v582 = vsel %vm534, %v550, %v566
        %v583 = vsel %vm535, %v551, %v567
        %v584 = vsel %vm536, %v552, %v568
        %v585 = vsel %vm537, %v553, %v569
        %v586 = vsel %vm538, %v554, %v570
        %v587 = vsel %vm539, %v555, %v571
        %v588 = vsel %vm540, %v556, %v572
        %v589 = vsel %vm541, %v557, %v573
        %v590 = vsel %vm542, %v558, %v574
        %v591 = vsel %vm543, %v559, %v575
        %v592 = vsel %vm544, %v560, %v576
        %v593 = vmin.f32 %v577, 60.0
        %v594 = vmin.f32 %v578, 60.0
        %v595 = vmin.f32 %v579, 60.0
        %v596 = vmin.f32 %v580, 60.0
        %v597 = vmin.f32 %v581, 60.0
        %v598 = vmin.f32 %v582, 60.0
        %v599 = vmin.f32 %v583, 60.0
        %v600 = vmin.f32 %v584, 60.0
        %v601 = vmin.f32 %v585, 60.0
        %v602 = vmin.f32 %v586, 60.0
        %v603 = vmin.f32 %v587, 60.0
        %v604 = vmin.f32 %v588, 60.0
        %v605 = vmin.f32 %v589, 60.0
        %v606 = vmin.f32 %v590, 60.0
        %v607 = vmin.f32 %v591, 60.0
        %v608 = vmin.f32 %v592, 60.0
        %v609 = vmul.f32 %v593, 1.442695
        %v610 = vpow.pop %v609
        %v611 = vmul.f32 %v594, 1.442695
        %v612 = vpow.pop %v611
        %v613 = vmul.f32 %v595, 1.442695
        %v614 = vpow.pop %v613
        %v615 = vmul.f32 %v596, 1.442695
        %v616 = vpow.pop %v615
        %v617 = vmul.f32 %v597, 1.442695
        %v618 = vpow.pop %v617
        %v619 = vmul.f32 %v598, 1.442695
        %v620 = vpow.pop %v619
        %v621 = vmul.f32 %v599, 1.442695
        %v622 = vpow.pop %v621
        %v623 = vmul.f32 %v600, 1.442695
        %v624 = vpow.pop %v623
        %v625 = vmul.f32 %v601, 1.442695
        %v626 = vpow.pop %v625
        %v627 = vmul.f32 %v602, 1.442695
        %v628 = vpow.pop %v627
        %v629 = vmul.f32 %v603, 1.442695
        %v630 = vpow.pop %v629
        %v631 = vmul.f32 %v604, 1.442695
        %v632 = vpow.pop %v631
        %v633 = vmul.f32 %v605, 1.442695
        %v634 = vpow.pop %v633
        %v635 = vmul.f32 %v606, 1.442695
        %v636 = vpow.pop %v635
        %v637 = vmul.f32 %v607, 1.442695
        %v638 = vpow.pop %v637
        %v639 = vmul.f32 %v608, 1.442695
        %v640 = vpow.pop %v639
        %v641 = vsel %vm399, %v610, 0.0
        %v642 = vsel %vm400, %v612, 0.0
        %v643 = vsel %vm401, %v614, 0.0
        %v644 = vsel %vm402, %v616, 0.0
        %v645 = vsel %vm403, %v618, 0.0
        %v646 = vsel %vm404, %v620, 0.0
        %v647 = vsel %vm405, %v622, 0.0
        %v648 = vsel %vm406, %v624, 0.0
        %v649 = vsel %vm407, %v626, 0.0
        %v650 = vsel %vm408, %v628, 0.0
        %v651 = vsel %vm409, %v630, 0.0
        %v652 = vsel %vm410, %v632, 0.0
        %v653 = vsel %vm411, %v634, 0.0
        %v654 = vsel %vm412, %v636, 0.0
        %v655 = vsel %vm413, %v638, 0.0
        %v656 = vsel %vm414, %v640, 0.0
        %v657 = vld [vmem:[#allocation3] sm:$0xff]
        %v658 = vld [vmem:[#allocation3 + $0x8] sm:$0xff]
        %v659 = vld [vmem:[#allocation3 + $0x10] sm:$0xff]
        %v660 = vld [vmem:[#allocation3 + $0x18] sm:$0xff]
        %v661 = vld [vmem:[#allocation3 + $0x20] sm:$0xff]
        %v662 = vld [vmem:[#allocation3 + $0x28] sm:$0xff]
        %v663 = vld [vmem:[#allocation3 + $0x30] sm:$0xff]
        %v664 = vld [vmem:[#allocation3 + $0x38] sm:$0xff]
        %v665 = vld [vmem:[#allocation3 + $0x40] sm:$0xff]
        %v666 = vld [vmem:[#allocation3 + $0x48] sm:$0xff]
        %v667 = vld [vmem:[#allocation3 + $0x50] sm:$0xff]
        %v668 = vld [vmem:[#allocation3 + $0x58] sm:$0xff]
        %v669 = vld [vmem:[#allocation3 + $0x60] sm:$0xff]
        %v670 = vld [vmem:[#allocation3 + $0x68] sm:$0xff]
        %v671 = vld [vmem:[#allocation3 + $0x70] sm:$0xff]
        %v672 = vld [vmem:[#allocation3 + $0x78] sm:$0xff]
        %673 = vadd.xlane.f32.xlu0 %v641
        %v674 = vpop.xlane.xlu0 %673
        %675 = vadd.xlane.f32.xlu0 %v642
        %v676 = vpop.xlane.xlu0 %675
        %677 = vadd.xlane.f32.xlu0 %v643
        %v678 = vpop.xlane.xlu0 %677
        %679 = vadd.xlane.f32.xlu0 %v644
        %v680 = vpop.xlane.xlu0 %679
        %681 = vadd.xlane.f32.xlu0 %v645
        %v682 = vpop.xlane.xlu0 %681
        %683 = vadd.xlane.f32.xlu0 %v646
        %v684 = vpop.xlane.xlu0 %683
        %685 = vadd.xlane.f32.xlu0 %v647
        %v686 = vpop.xlane.xlu0 %685
        %687 = vadd.xlane.f32.xlu0 %v648
        %v688 = vpop.xlane.xlu0 %687
        %689 = vadd.xlane.f32.xlu0 %v649
        %v690 = vpop.xlane.xlu0 %689
        %691 = vadd.xlane.f32.xlu0 %v650
        %v692 = vpop.xlane.xlu0 %691
        %693 = vadd.xlane.f32.xlu0 %v651
        %v694 = vpop.xlane.xlu0 %693
        %695 = vadd.xlane.f32.xlu0 %v652
        %v696 = vpop.xlane.xlu0 %695
        %697 = vadd.xlane.f32.xlu0 %v653
        %v698 = vpop.xlane.xlu0 %697
        %699 = vadd.xlane.f32.xlu0 %v654
        %v700 = vpop.xlane.xlu0 %699
        %701 = vadd.xlane.f32.xlu0 %v655
        %v702 = vpop.xlane.xlu0 %701
        %703 = vadd.xlane.f32.xlu0 %v656
        %v704 = vpop.xlane.xlu0 %703
        %v705 = vadd.f32 %v657, %v674
        %v706 = vadd.f32 %v658, %v676
        %v707 = vadd.f32 %v659, %v678
        %v708 = vadd.f32 %v660, %v680
        %v709 = vadd.f32 %v661, %v682
        %v710 = vadd.f32 %v662, %v684
        %v711 = vadd.f32 %v663, %v686
        %v712 = vadd.f32 %v664, %v688
        %v713 = vadd.f32 %v665, %v690
        %v714 = vadd.f32 %v666, %v692
        %v715 = vadd.f32 %v667, %v694
        %v716 = vadd.f32 %v668, %v696
        %v717 = vadd.f32 %v669, %v698
        %v718 = vadd.f32 %v670, %v700
        %v719 = vadd.f32 %v671, %v702
        %v720 = vadd.f32 %v672, %v704
        %vm721 = vcmask 7168
        %722 = vst.msk [vmem:[#allocation3] sm:$0xff] %vm721, %v705
        %723 = vst.msk [vmem:[#allocation3 + $0x8] sm:$0xff] %vm721, %v706
        %724 = vst.msk [vmem:[#allocation3 + $0x10] sm:$0xff] %vm721, %v707
        %725 = vst.msk [vmem:[#allocation3 + $0x18] sm:$0xff] %vm721, %v708
        %726 = vst.msk [vmem:[#allocation3 + $0x20] sm:$0xff] %vm721, %v709
        %727 = vst.msk [vmem:[#allocation3 + $0x28] sm:$0xff] %vm721, %v710
        %728 = vst.msk [vmem:[#allocation3 + $0x30] sm:$0xff] %vm721, %v711
        %729 = vst.msk [vmem:[#allocation3 + $0x38] sm:$0xff] %vm721, %v712
        %730 = vst.msk [vmem:[#allocation3 + $0x40] sm:$0xff] %vm721, %v713
        %731 = vst.msk [vmem:[#allocation3 + $0x48] sm:$0xff] %vm721, %v714
        %732 = vst.msk [vmem:[#allocation3 + $0x50] sm:$0xff] %vm721, %v715
        %733 = vst.msk [vmem:[#allocation3 + $0x58] sm:$0xff] %vm721, %v716
        %734 = vst.msk [vmem:[#allocation3 + $0x60] sm:$0xff] %vm721, %v717
        %735 = vst.msk [vmem:[#allocation3 + $0x68] sm:$0xff] %vm721, %v718
        %736 = vst.msk [vmem:[#allocation3 + $0x70] sm:$0xff] %vm721, %v719
        %737 = vst.msk [vmem:[#allocation3 + $0x78] sm:$0xff] %vm721, %v720
        %v738 = vld [vmem:[#allocation2] sm:$0xff]
        %v739 = vld [vmem:[#allocation2 + $0x8] sm:$0xff]
        %v740 = vld [vmem:[#allocation2 + $0x10] sm:$0xff]
        %v741 = vld [vmem:[#allocation2 + $0x18] sm:$0xff]
        %v742 = vld [vmem:[#allocation2 + $0x20] sm:$0xff]
        %v743 = vld [vmem:[#allocation2 + $0x28] sm:$0xff]
        %v744 = vld [vmem:[#allocation2 + $0x30] sm:$0xff]
        %v745 = vld [vmem:[#allocation2 + $0x38] sm:$0xff]
        %v746 = vld [vmem:[#allocation2 + $0x40] sm:$0xff]
        %v747 = vld [vmem:[#allocation2 + $0x48] sm:$0xff]
        %v748 = vld [vmem:[#allocation2 + $0x50] sm:$0xff]
        %v749 = vld [vmem:[#allocation2 + $0x58] sm:$0xff]
        %v750 = vld [vmem:[#allocation2 + $0x60] sm:$0xff]
        %v751 = vld [vmem:[#allocation2 + $0x68] sm:$0xff]
        %v752 = vld [vmem:[#allocation2 + $0x70] sm:$0xff]
        %v753 = vld [vmem:[#allocation2 + $0x78] sm:$0xff]
        %v754 = vld [vmem:[%s317] sm:$0xff]
        %v755 = vld [vmem:[%s317 + $0x8] sm:$0xff]
        %v756 = vld [vmem:[%s317 + $0x10] sm:$0xff]
        %v757 = vld [vmem:[%s317 + $0x18] sm:$0xff]
        %v758 = vld [vmem:[%s317 + $0x20] sm:$0xff]
        %v759 = vld [vmem:[%s317 + $0x28] sm:$0xff]
        %v760 = vld [vmem:[%s317 + $0x30] sm:$0xff]
        %v761 = vld [vmem:[%s317 + $0x38] sm:$0xff]
        %v762 = vld [vmem:[%s317 + $0x40] sm:$0xff]
        %v763 = vld [vmem:[%s317 + $0x48] sm:$0xff]
        %v764 = vld [vmem:[%s317 + $0x50] sm:$0xff]
        %v765 = vld [vmem:[%s317 + $0x58] sm:$0xff]
        %v766 = vld [vmem:[%s317 + $0x60] sm:$0xff]
        %v767 = vld [vmem:[%s317 + $0x68] sm:$0xff]
        %v768 = vld [vmem:[%s317 + $0x70] sm:$0xff]
        %v769 = vld [vmem:[%s317 + $0x78] sm:$0xff]
        %770 = vmatpush.msra.mxu0 %v769
        %771 = vmatpush.msra.mxu0 %v768
        %772 = vmatpush.msra.mxu0 %v767
        %773 = vmatpush.msra.mxu0 %v766
        %774 = vmatpush.msra.mxu0 %v765
        %775 = vmatpush.msra.mxu0 %v764
        %776 = vmatpush.msra.mxu0 %v763
        %777 = vmatpush.msra.mxu0 %v762
        %778 = vmatpush.msra.mxu0 %v761
        %779 = vmatpush.msra.mxu0 %v760
        %780 = vmatpush.msra.mxu0 %v759
        %781 = vmatpush.msra.mxu0 %v758
        %782 = vmatpush.msra.mxu0 %v757
        %783 = vmatpush.msra.mxu0 %v756
        %784 = vmatpush.msra.mxu0 %v755
        %785 = vmatpush.msra.mxu0 %v754
        %786 = vmatmul.f32.gmra.mxu0 %v641
        %v787 = vpop.f32.mrf.mxu0
        %v788 = vadd.f32 0.0, %v787
        %789 = vmatmul.f32.gmra.mxu0 %v642
        %v790 = vpop.f32.mrf.mxu0
        %v791 = vadd.f32 0.0, %v790
        %792 = vmatmul.f32.gmra.mxu0 %v643
        %v793 = vpop.f32.mrf.mxu0
        %v794 = vadd.f32 0.0, %v793
        %795 = vmatmul.f32.gmra.mxu0 %v644
        %v796 = vpop.f32.mrf.mxu0
        %v797 = vadd.f32 0.0, %v796
        %798 = vmatmul.f32.gmra.mxu0 %v645
        %v799 = vpop.f32.mrf.mxu0
        %v800 = vadd.f32 0.0, %v799
        %801 = vmatmul.f32.gmra.mxu0 %v646
        %v802 = vpop.f32.mrf.mxu0
        %v803 = vadd.f32 0.0, %v802
        %804 = vmatmul.f32.gmra.mxu0 %v647
        %v805 = vpop.f32.mrf.mxu0
        %v806 = vadd.f32 0.0, %v805
        %807 = vmatmul.f32.gmra.mxu0 %v648
        %v808 = vpop.f32.mrf.mxu0
        %v809 = vadd.f32 0.0, %v808
        %810 = vmatmul.f32.gmra.mxu0 %v649
        %v811 = vpop.f32.mrf.mxu0
        %v812 = vadd.f32 0.0, %v811
        %813 = vmatmul.f32.gmra.mxu0 %v650
        %v814 = vpop.f32.mrf.mxu0
        %v815 = vadd.f32 0.0, %v814
        %816 = vmatmul.f32.gmra.mxu0 %v651
        %v817 = vpop.f32.mrf.mxu0
        %v818 = vadd.f32 0.0, %v817
        %819 = vmatmul.f32.gmra.mxu0 %v652
        %v820 = vpop.f32.mrf.mxu0
        %v821 = vadd.f32 0.0, %v820
        %822 = vmatmul.f32.gmra.mxu0 %v653
        %v823 = vpop.f32.mrf.mxu0
        %v824 = vadd.f32 0.0, %v823
        %825 = vmatmul.f32.gmra.mxu0 %v654
        %v826 = vpop.f32.mrf.mxu0
        %v827 = vadd.f32 0.0, %v826
        %828 = vmatmul.f32.gmra.mxu0 %v655
        %v829 = vpop.f32.mrf.mxu0
        %v830 = vadd.f32 0.0, %v829
        %831 = vmatmul.f32.gmra.mxu0 %v656
        %v832 = vpop.f32.mrf.mxu0
        %v833 = vadd.f32 0.0, %v832
        %834 = vdwg.mxu0
        %v835 = vadd.f32 %v738, %v788
        %v836 = vadd.f32 %v739, %v791
        %v837 = vadd.f32 %v740, %v794
        %v838 = vadd.f32 %v741, %v797
        %v839 = vadd.f32 %v742, %v800
        %v840 = vadd.f32 %v743, %v803
        %v841 = vadd.f32 %v744, %v806
        %v842 = vadd.f32 %v745, %v809
        %v843 = vadd.f32 %v746, %v812
        %v844 = vadd.f32 %v747, %v815
        %v845 = vadd.f32 %v748, %v818
        %v846 = vadd.f32 %v749, %v821
        %v847 = vadd.f32 %v750, %v824
        %v848 = vadd.f32 %v751, %v827
        %v849 = vadd.f32 %v752, %v830
        %v850 = vadd.f32 %v753, %v833
        %vm851 = vcmask 130048
        %852 = vst.msk [vmem:[#allocation2] sm:$0xff] %vm851, %v835
        %853 = vst.msk [vmem:[#allocation2 + $0x8] sm:$0xff] %vm851, %v836
        %854 = vst.msk [vmem:[#allocation2 + $0x10] sm:$0xff] %vm851, %v837
        %855 = vst.msk [vmem:[#allocation2 + $0x18] sm:$0xff] %vm851, %v838
        %856 = vst.msk [vmem:[#allocation2 + $0x20] sm:$0xff] %vm851, %v839
        %857 = vst.msk [vmem:[#allocation2 + $0x28] sm:$0xff] %vm851, %v840
        %858 = vst.msk [vmem:[#allocation2 + $0x30] sm:$0xff] %vm851, %v841
        %859 = vst.msk [vmem:[#allocation2 + $0x38] sm:$0xff] %vm851, %v842
        %860 = vst.msk [vmem:[#allocation2 + $0x40] sm:$0xff] %vm851, %v843
        %861 = vst.msk [vmem:[#allocation2 + $0x48] sm:$0xff] %vm851, %v844
        %862 = vst.msk [vmem:[#allocation2 + $0x50] sm:$0xff] %vm851, %v845
        %863 = vst.msk [vmem:[#allocation2 + $0x58] sm:$0xff] %vm851, %v846
        %864 = vst.msk [vmem:[#allocation2 + $0x60] sm:$0xff] %vm851, %v847
        %865 = vst.msk [vmem:[#allocation2 + $0x68] sm:$0xff] %vm851, %v848
        %866 = vst.msk [vmem:[#allocation2 + $0x70] sm:$0xff] %vm851, %v849
        %867 = vst.msk [vmem:[#allocation2 + $0x78] sm:$0xff] %vm851, %v850
        %v868 = vld [vmem:[%s306] sm:$0xff]
        %v869 = vld [vmem:[%s306 + $0x8] sm:$0xff]
        %v870 = vld [vmem:[%s306 + $0x10] sm:$0xff]
        %v871 = vld [vmem:[%s306 + $0x18] sm:$0xff]
        %v872 = vld [vmem:[%s306 + $0x20] sm:$0xff]
        %v873 = vld [vmem:[%s306 + $0x28] sm:$0xff]
        %v874 = vld [vmem:[%s306 + $0x30] sm:$0xff]
        %v875 = vld [vmem:[%s306 + $0x38] sm:$0xff]
        %v876 = vld [vmem:[%s306 + $0x40] sm:$0xff]
        %v877 = vld [vmem:[%s306 + $0x48] sm:$0xff]
        %v878 = vld [vmem:[%s306 + $0x50] sm:$0xff]
        %v879 = vld [vmem:[%s306 + $0x58] sm:$0xff]
        %v880 = vld [vmem:[%s306 + $0x60] sm:$0xff]
        %v881 = vld [vmem:[%s306 + $0x68] sm:$0xff]
        %v882 = vld [vmem:[%s306 + $0x70] sm:$0xff]
        %v883 = vld [vmem:[%s306 + $0x78] sm:$0xff]
        %v884 = vld [vmem:[%s311 + $0x1] sm:$0x1]
        %886 = vset.pattern.permute.xlu0 1
        %887 = vperm.xlu0 %886, %v868
        %v888 = vpop.permute.xlu0 %887
        %891 = vset.pattern.permute.xlu0 1
        %892 = vperm.xlu0 %891, %v869
        %v893 = vpop.permute.xlu0 %892
        %896 = vset.pattern.permute.xlu0 1
        %897 = vperm.xlu0 %896, %v870
        %v898 = vpop.permute.xlu0 %897
        %901 = vset.pattern.permute.xlu0 1
        %902 = vperm.xlu0 %901, %v871
        %v903 = vpop.permute.xlu0 %902
        %906 = vset.pattern.permute.xlu0 1
        %907 = vperm.xlu0 %906, %v872
        %v908 = vpop.permute.xlu0 %907
        %911 = vset.pattern.permute.xlu0 1
        %912 = vperm.xlu0 %911, %v873
        %v913 = vpop.permute.xlu0 %912
        %916 = vset.pattern.permute.xlu0 1
        %917 = vperm.xlu0 %916, %v874
        %v918 = vpop.permute.xlu0 %917
        %921 = vset.pattern.permute.xlu0 1
        %922 = vperm.xlu0 %921, %v875
        %v923 = vpop.permute.xlu0 %922
        %926 = vset.pattern.permute.xlu0 1
        %927 = vperm.xlu0 %926, %v876
        %v928 = vpop.permute.xlu0 %927
        %931 = vset.pattern.permute.xlu0 1
        %932 = vperm.xlu0 %931, %v877
        %v933 = vpop.permute.xlu0 %932
        %936 = vset.pattern.permute.xlu0 1
        %937 = vperm.xlu0 %936, %v878
        %v938 = vpop.permute.xlu0 %937
        %941 = vset.pattern.permute.xlu0 1
        %942 = vperm.xlu0 %941, %v879
        %v943 = vpop.permute.xlu0 %942
        %946 = vset.pattern.permute.xlu0 1
        %947 = vperm.xlu0 %946, %v880
        %v948 = vpop.permute.xlu0 %947
        %951 = vset.pattern.permute.xlu0 1
        %952 = vperm.xlu0 %951, %v881
        %v953 = vpop.permute.xlu0 %952
        %956 = vset.pattern.permute.xlu0 1
        %957 = vperm.xlu0 %956, %v882
        %v958 = vpop.permute.xlu0 %957
        %961 = vset.pattern.permute.xlu0 1
        %962 = vperm.xlu0 %961, %v883
        %v963 = vpop.permute.xlu0 %962
        %v965 = vperm.slane %v884, 0
        %v966 = vadd.f32 %v888, %v965
        %v967 = vadd.f32 %v893, %v965
        %v968 = vadd.f32 %v898, %v965
        %v969 = vadd.f32 %v903, %v965
        %v970 = vadd.f32 %v908, %v965
        %v971 = vadd.f32 %v913, %v965
        %v972 = vadd.f32 %v918, %v965
        %v973 = vadd.f32 %v923, %v965
        %v974 = vadd.f32 %v928, %v965
        %v975 = vadd.f32 %v933, %v965
        %v976 = vadd.f32 %v938, %v965
        %v977 = vadd.f32 %v943, %v965
        %v978 = vadd.f32 %v948, %v965
        %v979 = vadd.f32 %v953, %v965
        %v980 = vadd.f32 %v958, %v965
        %v981 = vadd.f32 %v963, %v965
        %vm982 = vcmp.gt.f32.partialorder %v966, 0.0
        %vm983 = vcmp.gt.f32.partialorder %v967, 0.0
        %vm984 = vcmp.gt.f32.partialorder %v968, 0.0
        %vm985 = vcmp.gt.f32.partialorder %v969, 0.0
        %vm986 = vcmp.gt.f32.partialorder %v970, 0.0
        %vm987 = vcmp.gt.f32.partialorder %v971, 0.0
        %vm988 = vcmp.gt.f32.partialorder %v972, 0.0
        %vm989 = vcmp.gt.f32.partialorder %v973, 0.0
        %vm990 = vcmp.gt.f32.partialorder %v974, 0.0
        %vm991 = vcmp.gt.f32.partialorder %v975, 0.0
        %vm992 = vcmp.gt.f32.partialorder %v976, 0.0
        %vm993 = vcmp.gt.f32.partialorder %v977, 0.0
        %vm994 = vcmp.gt.f32.partialorder %v978, 0.0
        %vm995 = vcmp.gt.f32.partialorder %v979, 0.0
        %vm996 = vcmp.gt.f32.partialorder %v980, 0.0
        %vm997 = vcmp.gt.f32.partialorder %v981, 0.0
        %v998 = vsub.f32 0.0, %v966
        %v999 = vsub.f32 0.0, %v967
        %v1000 = vsub.f32 0.0, %v968
        %v1001 = vsub.f32 0.0, %v969
        %v1002 = vsub.f32 0.0, %v970
        %v1003 = vsub.f32 0.0, %v971
        %v1004 = vsub.f32 0.0, %v972
        %v1005 = vsub.f32 0.0, %v973
        %v1006 = vsub.f32 0.0, %v974
        %v1007 = vsub.f32 0.0, %v975
        %v1008 = vsub.f32 0.0, %v976
        %v1009 = vsub.f32 0.0, %v977
        %v1010 = vsub.f32 0.0, %v978
        %v1011 = vsub.f32 0.0, %v979
        %v1012 = vsub.f32 0.0, %v980
        %v1013 = vsub.f32 0.0, %v981
        %v1014 = vmul.f32 %v966, -0.2
        %v1015 = vmul.f32 %v967, -0.2
        %v1016 = vmul.f32 %v968, -0.2
        %v1017 = vmul.f32 %v969, -0.2
        %v1018 = vmul.f32 %v970, -0.2
        %v1019 = vmul.f32 %v971, -0.2
        %v1020 = vmul.f32 %v972, -0.2
        %v1021 = vmul.f32 %v973, -0.2
        %v1022 = vmul.f32 %v974, -0.2
        %v1023 = vmul.f32 %v975, -0.2
        %v1024 = vmul.f32 %v976, -0.2
        %v1025 = vmul.f32 %v977, -0.2
        %v1026 = vmul.f32 %v978, -0.2
        %v1027 = vmul.f32 %v979, -0.2
        %v1028 = vmul.f32 %v980, -0.2
        %v1029 = vmul.f32 %v981, -0.2
        %v1030 = vsel %vm982, %v998, %v1014
        %v1031 = vsel %vm983, %v999, %v1015
        %v1032 = vsel %vm984, %v1000, %v1016
        %v1033 = vsel %vm985, %v1001, %v1017
        %v1034 = vsel %vm986, %v1002, %v1018
        %v1035 = vsel %vm987, %v1003, %v1019
        %v1036 = vsel %vm988, %v1004, %v1020
        %v1037 = vsel %vm989, %v1005, %v1021
        %v1038 = vsel %vm990, %v1006, %v1022
        %v1039 = vsel %vm991, %v1007, %v1023
        %v1040 = vsel %vm992, %v1008, %v1024
        %v1041 = vsel %vm993, %v1009, %v1025
        %v1042 = vsel %vm994, %v1010, %v1026
        %v1043 = vsel %vm995, %v1011, %v1027
        %v1044 = vsel %vm996, %v1012, %v1028
        %v1045 = vsel %vm997, %v1013, %v1029
        %v1046 = vmin.f32 %v1030, 60.0
        %v1047 = vmin.f32 %v1031, 60.0
        %v1048 = vmin.f32 %v1032, 60.0
        %v1049 = vmin.f32 %v1033, 60.0
        %v1050 = vmin.f32 %v1034, 60.0
        %v1051 = vmin.f32 %v1035, 60.0
        %v1052 = vmin.f32 %v1036, 60.0
        %v1053 = vmin.f32 %v1037, 60.0
        %v1054 = vmin.f32 %v1038, 60.0
        %v1055 = vmin.f32 %v1039, 60.0
        %v1056 = vmin.f32 %v1040, 60.0
        %v1057 = vmin.f32 %v1041, 60.0
        %v1058 = vmin.f32 %v1042, 60.0
        %v1059 = vmin.f32 %v1043, 60.0
        %v1060 = vmin.f32 %v1044, 60.0
        %v1061 = vmin.f32 %v1045, 60.0
        %v1062 = vmul.f32 %v1046, 1.442695
        %v1063 = vpow.pop %v1062
        %v1064 = vmul.f32 %v1047, 1.442695
        %v1065 = vpow.pop %v1064
        %v1066 = vmul.f32 %v1048, 1.442695
        %v1067 = vpow.pop %v1066
        %v1068 = vmul.f32 %v1049, 1.442695
        %v1069 = vpow.pop %v1068
        %v1070 = vmul.f32 %v1050, 1.442695
        %v1071 = vpow.pop %v1070
        %v1072 = vmul.f32 %v1051, 1.442695
        %v1073 = vpow.pop %v1072
        %v1074 = vmul.f32 %v1052, 1.442695
        %v1075 = vpow.pop %v1074
        %v1076 = vmul.f32 %v1053, 1.442695
        %v1077 = vpow.pop %v1076
        %v1078 = vmul.f32 %v1054, 1.442695
        %v1079 = vpow.pop %v1078
        %v1080 = vmul.f32 %v1055, 1.442695
        %v1081 = vpow.pop %v1080
        %v1082 = vmul.f32 %v1056, 1.442695
        %v1083 = vpow.pop %v1082
        %v1084 = vmul.f32 %v1057, 1.442695
        %v1085 = vpow.pop %v1084
        %v1086 = vmul.f32 %v1058, 1.442695
        %v1087 = vpow.pop %v1086
        %v1088 = vmul.f32 %v1059, 1.442695
        %v1089 = vpow.pop %v1088
        %v1090 = vmul.f32 %v1060, 1.442695
        %v1091 = vpow.pop %v1090
        %v1092 = vmul.f32 %v1061, 1.442695
        %v1093 = vpow.pop %v1092
        %v1094 = vsel %vm399, %v1063, 0.0
        %v1095 = vsel %vm400, %v1065, 0.0
        %v1096 = vsel %vm401, %v1067, 0.0
        %v1097 = vsel %vm402, %v1069, 0.0
        %v1098 = vsel %vm403, %v1071, 0.0
        %v1099 = vsel %vm404, %v1073, 0.0
        %v1100 = vsel %vm405, %v1075, 0.0
        %v1101 = vsel %vm406, %v1077, 0.0
        %v1102 = vsel %vm407, %v1079, 0.0
        %v1103 = vsel %vm408, %v1081, 0.0
        %v1104 = vsel %vm409, %v1083, 0.0
        %v1105 = vsel %vm410, %v1085, 0.0
        %v1106 = vsel %vm411, %v1087, 0.0
        %v1107 = vsel %vm412, %v1089, 0.0
        %v1108 = vsel %vm413, %v1091, 0.0
        %v1109 = vsel %vm414, %v1093, 0.0
        %v1110 = vld [vmem:[#allocation3] sm:$0xff]
        %v1111 = vld [vmem:[#allocation3 + $0x8] sm:$0xff]
        %v1112 = vld [vmem:[#allocation3 + $0x10] sm:$0xff]
        %v1113 = vld [vmem:[#allocation3 + $0x18] sm:$0xff]
        %v1114 = vld [vmem:[#allocation3 + $0x20] sm:$0xff]
        %v1115 = vld [vmem:[#allocation3 + $0x28] sm:$0xff]
        %v1116 = vld [vmem:[#allocation3 + $0x30] sm:$0xff]
        %v1117 = vld [vmem:[#allocation3 + $0x38] sm:$0xff]
        %v1118 = vld [vmem:[#allocation3 + $0x40] sm:$0xff]
        %v1119 = vld [vmem:[#allocation3 + $0x48] sm:$0xff]
        %v1120 = vld [vmem:[#allocation3 + $0x50] sm:$0xff]
        %v1121 = vld [vmem:[#allocation3 + $0x58] sm:$0xff]
        %v1122 = vld [vmem:[#allocation3 + $0x60] sm:$0xff]
        %v1123 = vld [vmem:[#allocation3 + $0x68] sm:$0xff]
        %v1124 = vld [vmem:[#allocation3 + $0x70] sm:$0xff]
        %v1125 = vld [vmem:[#allocation3 + $0x78] sm:$0xff]
        %1126 = vadd.xlane.f32.xlu0 %v1094
        %v1127 = vpop.xlane.xlu0 %1126
        %1128 = vadd.xlane.f32.xlu0 %v1095
        %v1129 = vpop.xlane.xlu0 %1128
        %1130 = vadd.xlane.f32.xlu0 %v1096
        %v1131 = vpop.xlane.xlu0 %1130
        %1132 = vadd.xlane.f32.xlu0 %v1097
        %v1133 = vpop.xlane.xlu0 %1132
        %1134 = vadd.xlane.f32.xlu0 %v1098
        %v1135 = vpop.xlane.xlu0 %1134
        %1136 = vadd.xlane.f32.xlu0 %v1099
        %v1137 = vpop.xlane.xlu0 %1136
        %1138 = vadd.xlane.f32.xlu0 %v1100
        %v1139 = vpop.xlane.xlu0 %1138
        %1140 = vadd.xlane.f32.xlu0 %v1101
        %v1141 = vpop.xlane.xlu0 %1140
        %1142 = vadd.xlane.f32.xlu0 %v1102
        %v1143 = vpop.xlane.xlu0 %1142
        %1144 = vadd.xlane.f32.xlu0 %v1103
        %v1145 = vpop.xlane.xlu0 %1144
        %1146 = vadd.xlane.f32.xlu0 %v1104
        %v1147 = vpop.xlane.xlu0 %1146
        %1148 = vadd.xlane.f32.xlu0 %v1105
        %v1149 = vpop.xlane.xlu0 %1148
        %1150 = vadd.xlane.f32.xlu0 %v1106
        %v1151 = vpop.xlane.xlu0 %1150
        %1152 = vadd.xlane.f32.xlu0 %v1107
        %v1153 = vpop.xlane.xlu0 %1152
        %1154 = vadd.xlane.f32.xlu0 %v1108
        %v1155 = vpop.xlane.xlu0 %1154
        %1156 = vadd.xlane.f32.xlu0 %v1109
        %v1157 = vpop.xlane.xlu0 %1156
        %v1158 = vadd.f32 %v1110, %v1127
        %v1159 = vadd.f32 %v1111, %v1129
        %v1160 = vadd.f32 %v1112, %v1131
        %v1161 = vadd.f32 %v1113, %v1133
        %v1162 = vadd.f32 %v1114, %v1135
        %v1163 = vadd.f32 %v1115, %v1137
        %v1164 = vadd.f32 %v1116, %v1139
        %v1165 = vadd.f32 %v1117, %v1141
        %v1166 = vadd.f32 %v1118, %v1143
        %v1167 = vadd.f32 %v1119, %v1145
        %v1168 = vadd.f32 %v1120, %v1147
        %v1169 = vadd.f32 %v1121, %v1149
        %v1170 = vadd.f32 %v1122, %v1151
        %v1171 = vadd.f32 %v1123, %v1153
        %v1172 = vadd.f32 %v1124, %v1155
        %v1173 = vadd.f32 %v1125, %v1157
        %vm1174 = vcmask 15368
        %1175 = vst.msk [vmem:[#allocation3] sm:$0xff] %vm1174, %v1158
        %1176 = vst.msk [vmem:[#allocation3 + $0x8] sm:$0xff] %vm1174, %v1159
        %1177 = vst.msk [vmem:[#allocation3 + $0x10] sm:$0xff] %vm1174, %v1160
        %1178 = vst.msk [vmem:[#allocation3 + $0x18] sm:$0xff] %vm1174, %v1161
        %1179 = vst.msk [vmem:[#allocation3 + $0x20] sm:$0xff] %vm1174, %v1162
        %1180 = vst.msk [vmem:[#allocation3 + $0x28] sm:$0xff] %vm1174, %v1163
        %1181 = vst.msk [vmem:[#allocation3 + $0x30] sm:$0xff] %vm1174, %v1164
        %1182 = vst.msk [vmem:[#allocation3 + $0x38] sm:$0xff] %vm1174, %v1165
        %1183 = vst.msk [vmem:[#allocation3 + $0x40] sm:$0xff] %vm1174, %v1166
        %1184 = vst.msk [vmem:[#allocation3 + $0x48] sm:$0xff] %vm1174, %v1167
        %1185 = vst.msk [vmem:[#allocation3 + $0x50] sm:$0xff] %vm1174, %v1168
        %1186 = vst.msk [vmem:[#allocation3 + $0x58] sm:$0xff] %vm1174, %v1169
        %1187 = vst.msk [vmem:[#allocation3 + $0x60] sm:$0xff] %vm1174, %v1170
        %1188 = vst.msk [vmem:[#allocation3 + $0x68] sm:$0xff] %vm1174, %v1171
        %1189 = vst.msk [vmem:[#allocation3 + $0x70] sm:$0xff] %vm1174, %v1172
        %1190 = vst.msk [vmem:[#allocation3 + $0x78] sm:$0xff] %vm1174, %v1173
        %v1191 = vld [vmem:[#allocation2] sm:$0xff]
        %v1192 = vld [vmem:[#allocation2 + $0x8] sm:$0xff]
        %v1193 = vld [vmem:[#allocation2 + $0x10] sm:$0xff]
        %v1194 = vld [vmem:[#allocation2 + $0x18] sm:$0xff]
        %v1195 = vld [vmem:[#allocation2 + $0x20] sm:$0xff]
        %v1196 = vld [vmem:[#allocation2 + $0x28] sm:$0xff]
        %v1197 = vld [vmem:[#allocation2 + $0x30] sm:$0xff]
        %v1198 = vld [vmem:[#allocation2 + $0x38] sm:$0xff]
        %v1199 = vld [vmem:[#allocation2 + $0x40] sm:$0xff]
        %v1200 = vld [vmem:[#allocation2 + $0x48] sm:$0xff]
        %v1201 = vld [vmem:[#allocation2 + $0x50] sm:$0xff]
        %v1202 = vld [vmem:[#allocation2 + $0x58] sm:$0xff]
        %v1203 = vld [vmem:[#allocation2 + $0x60] sm:$0xff]
        %v1204 = vld [vmem:[#allocation2 + $0x68] sm:$0xff]
        %v1205 = vld [vmem:[#allocation2 + $0x70] sm:$0xff]
        %v1206 = vld [vmem:[#allocation2 + $0x78] sm:$0xff]
        %v1207 = vld [vmem:[%s317] sm:$0xff]
        %v1208 = vld [vmem:[%s317 + $0x8] sm:$0xff]
        %v1209 = vld [vmem:[%s317 + $0x10] sm:$0xff]
        %v1210 = vld [vmem:[%s317 + $0x18] sm:$0xff]
        %v1211 = vld [vmem:[%s317 + $0x20] sm:$0xff]
        %v1212 = vld [vmem:[%s317 + $0x28] sm:$0xff]
        %v1213 = vld [vmem:[%s317 + $0x30] sm:$0xff]
        %v1214 = vld [vmem:[%s317 + $0x38] sm:$0xff]
        %v1215 = vld [vmem:[%s317 + $0x40] sm:$0xff]
        %v1216 = vld [vmem:[%s317 + $0x48] sm:$0xff]
        %v1217 = vld [vmem:[%s317 + $0x50] sm:$0xff]
        %v1218 = vld [vmem:[%s317 + $0x58] sm:$0xff]
        %v1219 = vld [vmem:[%s317 + $0x60] sm:$0xff]
        %v1220 = vld [vmem:[%s317 + $0x68] sm:$0xff]
        %v1221 = vld [vmem:[%s317 + $0x70] sm:$0xff]
        %v1222 = vld [vmem:[%s317 + $0x78] sm:$0xff]
        %1239 = vrot.lane.b32.xlu0 %v1207, 112
        %v1240 = vpop.permute.xlu0 %1239
        %1241 = vrot.lane.b32.xlu0 %v1208, 112
        %v1242 = vpop.permute.xlu0 %1241
        %1243 = vrot.lane.b32.xlu0 %v1209, 112
        %v1244 = vpop.permute.xlu0 %1243
        %1245 = vrot.lane.b32.xlu0 %v1210, 112
        %v1246 = vpop.permute.xlu0 %1245
        %1247 = vrot.lane.b32.xlu0 %v1211, 112
        %v1248 = vpop.permute.xlu0 %1247
        %1249 = vrot.lane.b32.xlu0 %v1212, 112
        %v1250 = vpop.permute.xlu0 %1249
        %1251 = vrot.lane.b32.xlu0 %v1213, 112
        %v1252 = vpop.permute.xlu0 %1251
        %1253 = vrot.lane.b32.xlu0 %v1214, 112
        %v1254 = vpop.permute.xlu0 %1253
        %1255 = vrot.lane.b32.xlu0 %v1215, 112
        %v1256 = vpop.permute.xlu0 %1255
        %1257 = vrot.lane.b32.xlu0 %v1216, 112
        %v1258 = vpop.permute.xlu0 %1257
        %1259 = vrot.lane.b32.xlu0 %v1217, 112
        %v1260 = vpop.permute.xlu0 %1259
        %1261 = vrot.lane.b32.xlu0 %v1218, 112
        %v1262 = vpop.permute.xlu0 %1261
        %1263 = vrot.lane.b32.xlu0 %v1219, 112
        %v1264 = vpop.permute.xlu0 %1263
        %1265 = vrot.lane.b32.xlu0 %v1220, 112
        %v1266 = vpop.permute.xlu0 %1265
        %1267 = vrot.lane.b32.xlu0 %v1221, 112
        %v1268 = vpop.permute.xlu0 %1267
        %1269 = vrot.lane.b32.xlu0 %v1222, 112
        %v1270 = vpop.permute.xlu0 %1269
        %1287 = vmatpush.msra.mxu0 %v1270
        %1288 = vmatpush.msra.mxu0 %v1268
        %1289 = vmatpush.msra.mxu0 %v1266
        %1290 = vmatpush.msra.mxu0 %v1264
        %1291 = vmatpush.msra.mxu0 %v1262
        %1292 = vmatpush.msra.mxu0 %v1260
        %1293 = vmatpush.msra.mxu0 %v1258
        %1294 = vmatpush.msra.mxu0 %v1256
        %1295 = vmatpush.msra.mxu0 %v1254
        %1296 = vmatpush.msra.mxu0 %v1252
        %1297 = vmatpush.msra.mxu0 %v1250
        %1298 = vmatpush.msra.mxu0 %v1248
        %1299 = vmatpush.msra.mxu0 %v1246
        %1300 = vmatpush.msra.mxu0 %v1244
        %1301 = vmatpush.msra.mxu0 %v1242
        %1302 = vmatpush.msra.mxu0 %v1240
        %1303 = vmatmul.f32.gmra.mxu0 %v1094
        %v1304 = vpop.f32.mrf.mxu0
        %v1305 = vadd.f32 0.0, %v1304
        %1306 = vmatmul.f32.gmra.mxu0 %v1095
        %v1307 = vpop.f32.mrf.mxu0
        %v1308 = vadd.f32 0.0, %v1307
        %1309 = vmatmul.f32.gmra.mxu0 %v1096
        %v1310 = vpop.f32.mrf.mxu0
        %v1311 = vadd.f32 0.0, %v1310
        %1312 = vmatmul.f32.gmra.mxu0 %v1097
        %v1313 = vpop.f32.mrf.mxu0
        %v1314 = vadd.f32 0.0, %v1313
        %1315 = vmatmul.f32.gmra.mxu0 %v1098
        %v1316 = vpop.f32.mrf.mxu0
        %v1317 = vadd.f32 0.0, %v1316
        %1318 = vmatmul.f32.gmra.mxu0 %v1099
        %v1319 = vpop.f32.mrf.mxu0
        %v1320 = vadd.f32 0.0, %v1319
        %1321 = vmatmul.f32.gmra.mxu0 %v1100
        %v1322 = vpop.f32.mrf.mxu0
        %v1323 = vadd.f32 0.0, %v1322
        %1324 = vmatmul.f32.gmra.mxu0 %v1101
        %v1325 = vpop.f32.mrf.mxu0
        %v1326 = vadd.f32 0.0, %v1325
        %1327 = vmatmul.f32.gmra.mxu0 %v1102
        %v1328 = vpop.f32.mrf.mxu0
        %v1329 = vadd.f32 0.0, %v1328
        %1330 = vmatmul.f32.gmra.mxu0 %v1103
        %v1331 = vpop.f32.mrf.mxu0
        %v1332 = vadd.f32 0.0, %v1331
        %1333 = vmatmul.f32.gmra.mxu0 %v1104
        %v1334 = vpop.f32.mrf.mxu0
        %v1335 = vadd.f32 0.0, %v1334
        %1336 = vmatmul.f32.gmra.mxu0 %v1105
        %v1337 = vpop.f32.mrf.mxu0
        %v1338 = vadd.f32 0.0, %v1337
        %1339 = vmatmul.f32.gmra.mxu0 %v1106
        %v1340 = vpop.f32.mrf.mxu0
        %v1341 = vadd.f32 0.0, %v1340
        %1342 = vmatmul.f32.gmra.mxu0 %v1107
        %v1343 = vpop.f32.mrf.mxu0
        %v1344 = vadd.f32 0.0, %v1343
        %1345 = vmatmul.f32.gmra.mxu0 %v1108
        %v1346 = vpop.f32.mrf.mxu0
        %v1347 = vadd.f32 0.0, %v1346
        %1348 = vmatmul.f32.gmra.mxu0 %v1109
        %v1349 = vpop.f32.mrf.mxu0
        %v1350 = vadd.f32 0.0, %v1349
        %1351 = vdwg.mxu0
        %1368 = vrot.lane.b32.xlu0 %v1305, 16
        %v1369 = vpop.permute.xlu0 %1368
        %1370 = vrot.lane.b32.xlu0 %v1308, 16
        %v1371 = vpop.permute.xlu0 %1370
        %1372 = vrot.lane.b32.xlu0 %v1311, 16
        %v1373 = vpop.permute.xlu0 %1372
        %1374 = vrot.lane.b32.xlu0 %v1314, 16
        %v1375 = vpop.permute.xlu0 %1374
        %1376 = vrot.lane.b32.xlu0 %v1317, 16
        %v1377 = vpop.permute.xlu0 %1376
        %1378 = vrot.lane.b32.xlu0 %v1320, 16
        %v1379 = vpop.permute.xlu0 %1378
        %1380 = vrot.lane.b32.xlu0 %v1323, 16
        %v1381 = vpop.permute.xlu0 %1380
        %1382 = vrot.lane.b32.xlu0 %v1326, 16
        %v1383 = vpop.permute.xlu0 %1382
        %1384 = vrot.lane.b32.xlu0 %v1329, 16
        %v1385 = vpop.permute.xlu0 %1384
        %1386 = vrot.lane.b32.xlu0 %v1332, 16
        %v1387 = vpop.permute.xlu0 %1386
        %1388 = vrot.lane.b32.xlu0 %v1335, 16
        %v1389 = vpop.permute.xlu0 %1388
        %1390 = vrot.lane.b32.xlu0 %v1338, 16
        %v1391 = vpop.permute.xlu0 %1390
        %1392 = vrot.lane.b32.xlu0 %v1341, 16
        %v1393 = vpop.permute.xlu0 %1392
        %1394 = vrot.lane.b32.xlu0 %v1344, 16
        %v1395 = vpop.permute.xlu0 %1394
        %1396 = vrot.lane.b32.xlu0 %v1347, 16
        %v1397 = vpop.permute.xlu0 %1396
        %1398 = vrot.lane.b32.xlu0 %v1350, 16
        %v1399 = vpop.permute.xlu0 %1398
        %v1416 = vadd.f32 %v1191, %v1369
        %v1417 = vadd.f32 %v1192, %v1371
        %v1418 = vadd.f32 %v1193, %v1373
        %v1419 = vadd.f32 %v1194, %v1375
        %v1420 = vadd.f32 %v1195, %v1377
        %v1421 = vadd.f32 %v1196, %v1379
        %v1422 = vadd.f32 %v1197, %v1381
        %v1423 = vadd.f32 %v1198, %v1383
        %v1424 = vadd.f32 %v1199, %v1385
        %v1425 = vadd.f32 %v1200, %v1387
        %v1426 = vadd.f32 %v1201, %v1389
        %v1427 = vadd.f32 %v1202, %v1391
        %v1428 = vadd.f32 %v1203, %v1393
        %v1429 = vadd.f32 %v1204, %v1395
        %v1430 = vadd.f32 %v1205, %v1397
        %v1431 = vadd.f32 %v1206, %v1399
        %vm1432 = vcmask 261248
        %1433 = vst.msk [vmem:[#allocation2] sm:$0xff] %vm1432, %v1416
        %1434 = vst.msk [vmem:[#allocation2 + $0x8] sm:$0xff] %vm1432, %v1417
        %1435 = vst.msk [vmem:[#allocation2 + $0x10] sm:$0xff] %vm1432, %v1418
        %1436 = vst.msk [vmem:[#allocation2 + $0x18] sm:$0xff] %vm1432, %v1419
        %1437 = vst.msk [vmem:[#allocation2 + $0x20] sm:$0xff] %vm1432, %v1420
        %1438 = vst.msk [vmem:[#allocation2 + $0x28] sm:$0xff] %vm1432, %v1421
        %1439 = vst.msk [vmem:[#allocation2 + $0x30] sm:$0xff] %vm1432, %v1422
        %1440 = vst.msk [vmem:[#allocation2 + $0x38] sm:$0xff] %vm1432, %v1423
        %1441 = vst.msk [vmem:[#allocation2 + $0x40] sm:$0xff] %vm1432, %v1424
        %1442 = vst.msk [vmem:[#allocation2 + $0x48] sm:$0xff] %vm1432, %v1425
        %1443 = vst.msk [vmem:[#allocation2 + $0x50] sm:$0xff] %vm1432, %v1426
        %1444 = vst.msk [vmem:[#allocation2 + $0x58] sm:$0xff] %vm1432, %v1427
        %1445 = vst.msk [vmem:[#allocation2 + $0x60] sm:$0xff] %vm1432, %v1428
        %1446 = vst.msk [vmem:[#allocation2 + $0x68] sm:$0xff] %vm1432, %v1429
        %1447 = vst.msk [vmem:[#allocation2 + $0x70] sm:$0xff] %vm1432, %v1430
        %1448 = vst.msk [vmem:[#allocation2 + $0x78] sm:$0xff] %vm1432, %v1431
        %p1449 = scmp.eq.s32.totalorder %s20, 1
        // Predicated region
        $region79: #{spgat_forward.5} parent=69 // pred_check
          %p1450 = pneg %p1449
        $region80: #{spgat_forward.5} parent=69 // pred_check_branch
          %1452 = sbr.rel (%p1450) target = $region82
        $region81: #{spgat_forward.5} parent=69 // pred_region
          %v1453 = vld [vmem:[#allocation3] sm:$0xff]
          %v1454 = vld [vmem:[#allocation3 + $0x8] sm:$0xff]
          %v1455 = vld [vmem:[#allocation3 + $0x10] sm:$0xff]
          %v1456 = vld [vmem:[#allocation3 + $0x18] sm:$0xff]
          %v1457 = vld [vmem:[#allocation3 + $0x20] sm:$0xff]
          %v1458 = vld [vmem:[#allocation3 + $0x28] sm:$0xff]
          %v1459 = vld [vmem:[#allocation3 + $0x30] sm:$0xff]
          %v1460 = vld [vmem:[#allocation3 + $0x38] sm:$0xff]
          %v1461 = vld [vmem:[#allocation3 + $0x40] sm:$0xff]
          %v1462 = vld [vmem:[#allocation3 + $0x48] sm:$0xff]
          %v1463 = vld [vmem:[#allocation3 + $0x50] sm:$0xff]
          %v1464 = vld [vmem:[#allocation3 + $0x58] sm:$0xff]
          %v1465 = vld [vmem:[#allocation3 + $0x60] sm:$0xff]
          %v1466 = vld [vmem:[#allocation3 + $0x68] sm:$0xff]
          %v1467 = vld [vmem:[#allocation3 + $0x70] sm:$0xff]
          %v1468 = vld [vmem:[#allocation3 + $0x78] sm:$0xff]
          %v1469 = vadd.f32 %v1453, 1e-16
          %v1470 = vadd.f32 %v1454, 1e-16
          %v1471 = vadd.f32 %v1455, 1e-16
          %v1472 = vadd.f32 %v1456, 1e-16
          %v1473 = vadd.f32 %v1457, 1e-16
          %v1474 = vadd.f32 %v1458, 1e-16
          %v1475 = vadd.f32 %v1459, 1e-16
          %v1476 = vadd.f32 %v1460, 1e-16
          %v1477 = vadd.f32 %v1461, 1e-16
          %v1478 = vadd.f32 %v1462, 1e-16
          %v1479 = vadd.f32 %v1463, 1e-16
          %v1480 = vadd.f32 %v1464, 1e-16
          %v1481 = vadd.f32 %v1465, 1e-16
          %v1482 = vadd.f32 %v1466, 1e-16
          %v1483 = vadd.f32 %v1467, 1e-16
          %v1484 = vadd.f32 %v1468, 1e-16
          %v1485 = vrcp.pop %v1469
          %v1486 = vrcp.pop %v1470
          %v1487 = vrcp.pop %v1471
          %v1488 = vrcp.pop %v1472
          %v1489 = vrcp.pop %v1473
          %v1490 = vrcp.pop %v1474
          %v1491 = vrcp.pop %v1475
          %v1492 = vrcp.pop %v1476
          %v1493 = vrcp.pop %v1477
          %v1494 = vrcp.pop %v1478
          %v1495 = vrcp.pop %v1479
          %v1496 = vrcp.pop %v1480
          %v1497 = vrcp.pop %v1481
          %v1498 = vrcp.pop %v1482
          %v1499 = vrcp.pop %v1483
          %v1500 = vrcp.pop %v1484
          %v1501 = vld [vmem:[#allocation2] sm:$0xff]
          %v1502 = vld [vmem:[#allocation2 + $0x8] sm:$0xff]
          %v1503 = vld [vmem:[#allocation2 + $0x10] sm:$0xff]
          %v1504 = vld [vmem:[#allocation2 + $0x18] sm:$0xff]
          %v1505 = vld [vmem:[#allocation2 + $0x20] sm:$0xff]
          %v1506 = vld [vmem:[#allocation2 + $0x28] sm:$0xff]
          %v1507 = vld [vmem:[#allocation2 + $0x30] sm:$0xff]
          %v1508 = vld [vmem:[#allocation2 + $0x38] sm:$0xff]
          %v1509 = vld [vmem:[#allocation2 + $0x40] sm:$0xff]
          %v1510 = vld [vmem:[#allocation2 + $0x48] sm:$0xff]
          %v1511 = vld [vmem:[#allocation2 + $0x50] sm:$0xff]
          %v1512 = vld [vmem:[#allocation2 + $0x58] sm:$0xff]
          %v1513 = vld [vmem:[#allocation2 + $0x60] sm:$0xff]
          %v1514 = vld [vmem:[#allocation2 + $0x68] sm:$0xff]
          %v1515 = vld [vmem:[#allocation2 + $0x70] sm:$0xff]
          %v1516 = vld [vmem:[#allocation2 + $0x78] sm:$0xff]
          %1518 = vset.pattern.permute.xlu0 0
          %1519 = vperm.xlu0 %1518, %v1485
          %v1520 = vpop.permute.xlu0 %1519
          %1523 = vset.pattern.permute.xlu0 0
          %1524 = vperm.xlu0 %1523, %v1486
          %v1525 = vpop.permute.xlu0 %1524
          %1528 = vset.pattern.permute.xlu0 0
          %1529 = vperm.xlu0 %1528, %v1487
          %v1530 = vpop.permute.xlu0 %1529
          %1533 = vset.pattern.permute.xlu0 0
          %1534 = vperm.xlu0 %1533, %v1488
          %v1535 = vpop.permute.xlu0 %1534
          %1538 = vset.pattern.permute.xlu0 0
          %1539 = vperm.xlu0 %1538, %v1489
          %v1540 = vpop.permute.xlu0 %1539
          %1543 = vset.pattern.permute.xlu0 0
          %1544 = vperm.xlu0 %1543, %v1490
          %v1545 = vpop.permute.xlu0 %1544
          %1548 = vset.pattern.permute.xlu0 0
          %1549 = vperm.xlu0 %1548, %v1491
          %v1550 = vpop.permute.xlu0 %1549
          %1553 = vset.pattern.permute.xlu0 0
          %1554 = vperm.xlu0 %1553, %v1492
          %v1555 = vpop.permute.xlu0 %1554
          %1558 = vset.pattern.permute.xlu0 0
          %1559 = vperm.xlu0 %1558, %v1493
          %v1560 = vpop.permute.xlu0 %1559
          %1563 = vset.pattern.permute.xlu0 0
          %1564 = vperm.xlu0 %1563, %v1494
          %v1565 = vpop.permute.xlu0 %1564
          %1568 = vset.pattern.permute.xlu0 0
          %1569 = vperm.xlu0 %1568, %v1495
          %v1570 = vpop.permute.xlu0 %1569
          %1573 = vset.pattern.permute.xlu0 0
          %1574 = vperm.xlu0 %1573, %v1496
          %v1575 = vpop.permute.xlu0 %1574
          %1578 = vset.pattern.permute.xlu0 0
          %1579 = vperm.xlu0 %1578, %v1497
          %v1580 = vpop.permute.xlu0 %1579
          %1583 = vset.pattern.permute.xlu0 0
          %1584 = vperm.xlu0 %1583, %v1498
          %v1585 = vpop.permute.xlu0 %1584
          %1588 = vset.pattern.permute.xlu0 0
          %1589 = vperm.xlu0 %1588, %v1499
          %v1590 = vpop.permute.xlu0 %1589
          %1593 = vset.pattern.permute.xlu0 0
          %1594 = vperm.xlu0 %1593, %v1500
          %v1595 = vpop.permute.xlu0 %1594
          %v1597 = vmul.f32 %v1501, %v1520
          %v1598 = vmul.f32 %v1502, %v1525
          %v1599 = vmul.f32 %v1503, %v1530
          %v1600 = vmul.f32 %v1504, %v1535
          %v1601 = vmul.f32 %v1505, %v1540
          %v1602 = vmul.f32 %v1506, %v1545
          %v1603 = vmul.f32 %v1507, %v1550
          %v1604 = vmul.f32 %v1508, %v1555
          %v1605 = vmul.f32 %v1509, %v1560
          %v1606 = vmul.f32 %v1510, %v1565
          %v1607 = vmul.f32 %v1511, %v1570
          %v1608 = vmul.f32 %v1512, %v1575
          %v1609 = vmul.f32 %v1513, %v1580
          %v1610 = vmul.f32 %v1514, %v1585
          %v1611 = vmul.f32 %v1515, %v1590
          %v1612 = vmul.f32 %v1516, %v1595
          %vm1613 = vcmp.gt.f32.partialorder %v1597, 0.0
          %vm1614 = vcmp.gt.f32.partialorder %v1598, 0.0
          %vm1615 = vcmp.gt.f32.partialorder %v1599, 0.0
          %vm1616 = vcmp.gt.f32.partialorder %v1600, 0.0
          %vm1617 = vcmp.gt.f32.partialorder %v1601, 0.0
          %vm1618 = vcmp.gt.f32.partialorder %v1602, 0.0
          %vm1619 = vcmp.gt.f32.partialorder %v1603, 0.0
          %vm1620 = vcmp.gt.f32.partialorder %v1604, 0.0
          %vm1621 = vcmp.gt.f32.partialorder %v1605, 0.0
          %vm1622 = vcmp.gt.f32.partialorder %v1606, 0.0
          %vm1623 = vcmp.gt.f32.partialorder %v1607, 0.0
          %vm1624 = vcmp.gt.f32.partialorder %v1608, 0.0
          %vm1625 = vcmp.gt.f32.partialorder %v1609, 0.0
          %vm1626 = vcmp.gt.f32.partialorder %v1610, 0.0
          %vm1627 = vcmp.gt.f32.partialorder %v1611, 0.0
          %vm1628 = vcmp.gt.f32.partialorder %v1612, 0.0
          %v1629 = vmul.f32 %v1597, 1.442695
          %v1630 = vpow.pop %v1629
          %v1631 = vmul.f32 %v1598, 1.442695
          %v1632 = vpow.pop %v1631
          %v1633 = vmul.f32 %v1599, 1.442695
          %v1634 = vpow.pop %v1633
          %v1635 = vmul.f32 %v1600, 1.442695
          %v1636 = vpow.pop %v1635
          %v1637 = vmul.f32 %v1601, 1.442695
          %v1638 = vpow.pop %v1637
          %v1639 = vmul.f32 %v1602, 1.442695
          %v1640 = vpow.pop %v1639
          %v1641 = vmul.f32 %v1603, 1.442695
          %v1642 = vpow.pop %v1641
          %v1643 = vmul.f32 %v1604, 1.442695
          %v1644 = vpow.pop %v1643
          %v1645 = vmul.f32 %v1605, 1.442695
          %v1646 = vpow.pop %v1645
          %v1647 = vmul.f32 %v1606, 1.442695
          %v1648 = vpow.pop %v1647
          %v1649 = vmul.f32 %v1607, 1.442695
          %v1650 = vpow.pop %v1649
          %v1651 = vmul.f32 %v1608, 1.442695
          %v1652 = vpow.pop %v1651
          %v1653 = vmul.f32 %v1609, 1.442695
          %v1654 = vpow.pop %v1653
          %v1655 = vmul.f32 %v1610, 1.442695
          %v1656 = vpow.pop %v1655
          %v1657 = vmul.f32 %v1611, 1.442695
          %v1658 = vpow.pop %v1657
          %v1659 = vmul.f32 %v1612, 1.442695
          %v1660 = vpow.pop %v1659
          %v1661 = vsub.f32 %v1630, 1.0
          %v1662 = vsub.f32 %v1632, 1.0
          %v1663 = vsub.f32 %v1634, 1.0
          %v1664 = vsub.f32 %v1636, 1.0
          %v1665 = vsub.f32 %v1638, 1.0
          %v1666 = vsub.f32 %v1640, 1.0
          %v1667 = vsub.f32 %v1642, 1.0
          %v1668 = vsub.f32 %v1644, 1.0
          %v1669 = vsub.f32 %v1646, 1.0
          %v1670 = vsub.f32 %v1648, 1.0
          %v1671 = vsub.f32 %v1650, 1.0
          %v1672 = vsub.f32 %v1652, 1.0
          %v1673 = vsub.f32 %v1654, 1.0
          %v1674 = vsub.f32 %v1656, 1.0
          %v1675 = vsub.f32 %v1658, 1.0
          %v1676 = vsub.f32 %v1660, 1.0
          %v1677 = vsel %vm1613, %v1597, %v1661
          %v1678 = vsel %vm1614, %v1598, %v1662
          %v1679 = vsel %vm1615, %v1599, %v1663
          %v1680 = vsel %vm1616, %v1600, %v1664
          %v1681 = vsel %vm1617, %v1601, %v1665
          %v1682 = vsel %vm1618, %v1602, %v1666
          %v1683 = vsel %vm1619, %v1603, %v1667
          %v1684 = vsel %vm1620, %v1604, %v1668
          %v1685 = vsel %vm1621, %v1605, %v1669
          %v1686 = vsel %vm1622, %v1606, %v1670
          %v1687 = vsel %vm1623, %v1607, %v1671
          %v1688 = vsel %vm1624, %v1608, %v1672
          %v1689 = vsel %vm1625, %v1609, %v1673
          %v1690 = vsel %vm1626, %v1610, %v1674
          %v1691 = vsel %vm1627, %v1611, %v1675
          %v1692 = vsel %vm1628, %v1612, %v1676
          %1693 = vst.msk [vmem:[%s323] sm:$0xff] %vm851, %v1677
          %1694 = vst.msk [vmem:[%s323 + $0x8] sm:$0xff] %vm851, %v1678
          %1695 = vst.msk [vmem:[%s323 + $0x10] sm:$0xff] %vm851, %v1679
          %1696 = vst.msk [vmem:[%s323 + $0x18] sm:$0xff] %vm851, %v1680
          %1697 = vst.msk [vmem:[%s323 + $0x20] sm:$0xff] %vm851, %v1681
          %1698 = vst.msk [vmem:[%s323 + $0x28] sm:$0xff] %vm851, %v1682
          %1699 = vst.msk [vmem:[%s323 + $0x30] sm:$0xff] %vm851, %v1683
          %1700 = vst.msk [vmem:[%s323 + $0x38] sm:$0xff] %vm851, %v1684
          %1701 = vst.msk [vmem:[%s323 + $0x40] sm:$0xff] %vm851, %v1685
          %1702 = vst.msk [vmem:[%s323 + $0x48] sm:$0xff] %vm851, %v1686
          %1703 = vst.msk [vmem:[%s323 + $0x50] sm:$0xff] %vm851, %v1687
          %1704 = vst.msk [vmem:[%s323 + $0x58] sm:$0xff] %vm851, %v1688
          %1705 = vst.msk [vmem:[%s323 + $0x60] sm:$0xff] %vm851, %v1689
          %1706 = vst.msk [vmem:[%s323 + $0x68] sm:$0xff] %vm851, %v1690
          %1707 = vst.msk [vmem:[%s323 + $0x70] sm:$0xff] %vm851, %v1691
          %1708 = vst.msk [vmem:[%s323 + $0x78] sm:$0xff] %vm851, %v1692
          %v1709 = vld [vmem:[#allocation3] sm:$0xff]
          %v1710 = vld [vmem:[#allocation3 + $0x8] sm:$0xff]
          %v1711 = vld [vmem:[#allocation3 + $0x10] sm:$0xff]
          %v1712 = vld [vmem:[#allocation3 + $0x18] sm:$0xff]
          %v1713 = vld [vmem:[#allocation3 + $0x20] sm:$0xff]
          %v1714 = vld [vmem:[#allocation3 + $0x28] sm:$0xff]
          %v1715 = vld [vmem:[#allocation3 + $0x30] sm:$0xff]
          %v1716 = vld [vmem:[#allocation3 + $0x38] sm:$0xff]
          %v1717 = vld [vmem:[#allocation3 + $0x40] sm:$0xff]
          %v1718 = vld [vmem:[#allocation3 + $0x48] sm:$0xff]
          %v1719 = vld [vmem:[#allocation3 + $0x50] sm:$0xff]
          %v1720 = vld [vmem:[#allocation3 + $0x58] sm:$0xff]
          %v1721 = vld [vmem:[#allocation3 + $0x60] sm:$0xff]
          %v1722 = vld [vmem:[#allocation3 + $0x68] sm:$0xff]
          %v1723 = vld [vmem:[#allocation3 + $0x70] sm:$0xff]
          %v1724 = vld [vmem:[#allocation3 + $0x78] sm:$0xff]
          %v1725 = vadd.f32 %v1709, 1e-16
          %v1726 = vadd.f32 %v1710, 1e-16
          %v1727 = vadd.f32 %v1711, 1e-16
          %v1728 = vadd.f32 %v1712, 1e-16
          %v1729 = vadd.f32 %v1713, 1e-16
          %v1730 = vadd.f32 %v1714, 1e-16
          %v1731 = vadd.f32 %v1715, 1e-16
          %v1732 = vadd.f32 %v1716, 1e-16
          %v1733 = vadd.f32 %v1717, 1e-16
          %v1734 = vadd.f32 %v1718, 1e-16
          %v1735 = vadd.f32 %v1719, 1e-16
          %v1736 = vadd.f32 %v1720, 1e-16
          %v1737 = vadd.f32 %v1721, 1e-16
          %v1738 = vadd.f32 %v1722, 1e-16
          %v1739 = vadd.f32 %v1723, 1e-16
          %v1740 = vadd.f32 %v1724, 1e-16
          %v1741 = vrcp.pop %v1725
          %v1742 = vrcp.pop %v1726
          %v1743 = vrcp.pop %v1727
          %v1744 = vrcp.pop %v1728
          %v1745 = vrcp.pop %v1729
          %v1746 = vrcp.pop %v1730
          %v1747 = vrcp.pop %v1731
          %v1748 = vrcp.pop %v1732
          %v1749 = vrcp.pop %v1733
          %v1750 = vrcp.pop %v1734
          %v1751 = vrcp.pop %v1735
          %v1752 = vrcp.pop %v1736
          %v1753 = vrcp.pop %v1737
          %v1754 = vrcp.pop %v1738
          %v1755 = vrcp.pop %v1739
          %v1756 = vrcp.pop %v1740
          %v1757 = vld [vmem:[#allocation2] sm:$0xff]
          %v1758 = vld [vmem:[#allocation2 + $0x8] sm:$0xff]
          %v1759 = vld [vmem:[#allocation2 + $0x10] sm:$0xff]
          %v1760 = vld [vmem:[#allocation2 + $0x18] sm:$0xff]
          %v1761 = vld [vmem:[#allocation2 + $0x20] sm:$0xff]
          %v1762 = vld [vmem:[#allocation2 + $0x28] sm:$0xff]
          %v1763 = vld [vmem:[#allocation2 + $0x30] sm:$0xff]
          %v1764 = vld [vmem:[#allocation2 + $0x38] sm:$0xff]
          %v1765 = vld [vmem:[#allocation2 + $0x40] sm:$0xff]
          %v1766 = vld [vmem:[#allocation2 + $0x48] sm:$0xff]
          %v1767 = vld [vmem:[#allocation2 + $0x50] sm:$0xff]
          %v1768 = vld [vmem:[#allocation2 + $0x58] sm:$0xff]
          %v1769 = vld [vmem:[#allocation2 + $0x60] sm:$0xff]
          %v1770 = vld [vmem:[#allocation2 + $0x68] sm:$0xff]
          %v1771 = vld [vmem:[#allocation2 + $0x70] sm:$0xff]
          %v1772 = vld [vmem:[#allocation2 + $0x78] sm:$0xff]
          %1774 = vset.pattern.permute.xlu0 1
          %1775 = vperm.xlu0 %1774, %v1741
          %v1776 = vpop.permute.xlu0 %1775
          %1779 = vset.pattern.permute.xlu0 1
          %1780 = vperm.xlu0 %1779, %v1742
          %v1781 = vpop.permute.xlu0 %1780
          %1784 = vset.pattern.permute.xlu0 1
          %1785 = vperm.xlu0 %1784, %v1743
          %v1786 = vpop.permute.xlu0 %1785
          %1789 = vset.pattern.permute.xlu0 1
          %1790 = vperm.xlu0 %1789, %v1744
          %v1791 = vpop.permute.xlu0 %1790
          %1794 = vset.pattern.permute.xlu0 1
          %1795 = vperm.xlu0 %1794, %v1745
          %v1796 = vpop.permute.xlu0 %1795
          %1799 = vset.pattern.permute.xlu0 1
          %1800 = vperm.xlu0 %1799, %v1746
          %v1801 = vpop.permute.xlu0 %1800
          %1804 = vset.pattern.permute.xlu0 1
          %1805 = vperm.xlu0 %1804, %v1747
          %v1806 = vpop.permute.xlu0 %1805
          %1809 = vset.pattern.permute.xlu0 1
          %1810 = vperm.xlu0 %1809, %v1748
          %v1811 = vpop.permute.xlu0 %1810
          %1814 = vset.pattern.permute.xlu0 1
          %1815 = vperm.xlu0 %1814, %v1749
          %v1816 = vpop.permute.xlu0 %1815
          %1819 = vset.pattern.permute.xlu0 1
          %1820 = vperm.xlu0 %1819, %v1750
          %v1821 = vpop.permute.xlu0 %1820
          %1824 = vset.pattern.permute.xlu0 1
          %1825 = vperm.xlu0 %1824, %v1751
          %v1826 = vpop.permute.xlu0 %1825
          %1829 = vset.pattern.permute.xlu0 1
          %1830 = vperm.xlu0 %1829, %v1752
          %v1831 = vpop.permute.xlu0 %1830
          %1834 = vset.pattern.permute.xlu0 1
          %1835 = vperm.xlu0 %1834, %v1753
          %v1836 = vpop.permute.xlu0 %1835
          %1839 = vset.pattern.permute.xlu0 1
          %1840 = vperm.xlu0 %1839, %v1754
          %v1841 = vpop.permute.xlu0 %1840
          %1844 = vset.pattern.permute.xlu0 1
          %1845 = vperm.xlu0 %1844, %v1755
          %v1846 = vpop.permute.xlu0 %1845
          %1849 = vset.pattern.permute.xlu0 1
          %1850 = vperm.xlu0 %1849, %v1756
          %v1851 = vpop.permute.xlu0 %1850
          %v1853 = vmul.f32 %v1757, %v1776
          %v1854 = vmul.f32 %v1758, %v1781
          %v1855 = vmul.f32 %v1759, %v1786
          %v1856 = vmul.f32 %v1760, %v1791
          %v1857 = vmul.f32 %v1761, %v1796
          %v1858 = vmul.f32 %v1762, %v1801
          %v1859 = vmul.f32 %v1763, %v1806
          %v1860 = vmul.f32 %v1764, %v1811
          %v1861 = vmul.f32 %v1765, %v1816
          %v1862 = vmul.f32 %v1766, %v1821
          %v1863 = vmul.f32 %v1767, %v1826
          %v1864 = vmul.f32 %v1768, %v1831
          %v1865 = vmul.f32 %v1769, %v1836
          %v1866 = vmul.f32 %v1770, %v1841
          %v1867 = vmul.f32 %v1771, %v1846
          %v1868 = vmul.f32 %v1772, %v1851
          %vm1869 = vcmp.gt.f32.partialorder %v1853, 0.0
          %vm1870 = vcmp.gt.f32.partialorder %v1854, 0.0
          %vm1871 = vcmp.gt.f32.partialorder %v1855, 0.0
          %vm1872 = vcmp.gt.f32.partialorder %v1856, 0.0
          %vm1873 = vcmp.gt.f32.partialorder %v1857, 0.0
          %vm1874 = vcmp.gt.f32.partialorder %v1858, 0.0
          %vm1875 = vcmp.gt.f32.partialorder %v1859, 0.0
          %vm1876 = vcmp.gt.f32.partialorder %v1860, 0.0
          %vm1877 = vcmp.gt.f32.partialorder %v1861, 0.0
          %vm1878 = vcmp.gt.f32.partialorder %v1862, 0.0
          %vm1879 = vcmp.gt.f32.partialorder %v1863, 0.0
          %vm1880 = vcmp.gt.f32.partialorder %v1864, 0.0
          %vm1881 = vcmp.gt.f32.partialorder %v1865, 0.0
          %vm1882 = vcmp.gt.f32.partialorder %v1866, 0.0
          %vm1883 = vcmp.gt.f32.partialorder %v1867, 0.0
          %vm1884 = vcmp.gt.f32.partialorder %v1868, 0.0
          %v1885 = vmul.f32 %v1853, 1.442695
          %v1886 = vpow.pop %v1885
          %v1887 = vmul.f32 %v1854, 1.442695
          %v1888 = vpow.pop %v1887
          %v1889 = vmul.f32 %v1855, 1.442695
          %v1890 = vpow.pop %v1889
          %v1891 = vmul.f32 %v1856, 1.442695
          %v1892 = vpow.pop %v1891
          %v1893 = vmul.f32 %v1857, 1.442695
          %v1894 = vpow.pop %v1893
          %v1895 = vmul.f32 %v1858, 1.442695
          %v1896 = vpow.pop %v1895
          %v1897 = vmul.f32 %v1859, 1.442695
          %v1898 = vpow.pop %v1897
          %v1899 = vmul.f32 %v1860, 1.442695
          %v1900 = vpow.pop %v1899
          %v1901 = vmul.f32 %v1861, 1.442695
          %v1902 = vpow.pop %v1901
          %v1903 = vmul.f32 %v1862, 1.442695
          %v1904 = vpow.pop %v1903
          %v1905 = vmul.f32 %v1863, 1.442695
          %v1906 = vpow.pop %v1905
          %v1907 = vmul.f32 %v1864, 1.442695
          %v1908 = vpow.pop %v1907
          %v1909 = vmul.f32 %v1865, 1.442695
          %v1910 = vpow.pop %v1909
          %v1911 = vmul.f32 %v1866, 1.442695
          %v1912 = vpow.pop %v1911
          %v1913 = vmul.f32 %v1867, 1.442695
          %v1914 = vpow.pop %v1913
          %v1915 = vmul.f32 %v1868, 1.442695
          %v1916 = vpow.pop %v1915
          %v1917 = vsub.f32 %v1886, 1.0
          %v1918 = vsub.f32 %v1888, 1.0
          %v1919 = vsub.f32 %v1890, 1.0
          %v1920 = vsub.f32 %v1892, 1.0
          %v1921 = vsub.f32 %v1894, 1.0
          %v1922 = vsub.f32 %v1896, 1.0
          %v1923 = vsub.f32 %v1898, 1.0
          %v1924 = vsub.f32 %v1900, 1.0
          %v1925 = vsub.f32 %v1902, 1.0
          %v1926 = vsub.f32 %v1904, 1.0
          %v1927 = vsub.f32 %v1906, 1.0
          %v1928 = vsub.f32 %v1908, 1.0
          %v1929 = vsub.f32 %v1910, 1.0
          %v1930 = vsub.f32 %v1912, 1.0
          %v1931 = vsub.f32 %v1914, 1.0
          %v1932 = vsub.f32 %v1916, 1.0
          %v1933 = vsel %vm1869, %v1853, %v1917
          %v1934 = vsel %vm1870, %v1854, %v1918
          %v1935 = vsel %vm1871, %v1855, %v1919
          %v1936 = vsel %vm1872, %v1856, %v1920
          %v1937 = vsel %vm1873, %v1857, %v1921
          %v1938 = vsel %vm1874, %v1858, %v1922
          %v1939 = vsel %vm1875, %v1859, %v1923
          %v1940 = vsel %vm1876, %v1860, %v1924
          %v1941 = vsel %vm1877, %v1861, %v1925
          %v1942 = vsel %vm1878, %v1862, %v1926
          %v1943 = vsel %vm1879, %v1863, %v1927
          %v1944 = vsel %vm1880, %v1864, %v1928
          %v1945 = vsel %vm1881, %v1865, %v1929
          %v1946 = vsel %vm1882, %v1866, %v1930
          %v1947 = vsel %vm1883, %v1867, %v1931
          %v1948 = vsel %vm1884, %v1868, %v1932
          %1949 = vst.msk [vmem:[%s323] sm:$0xff] %vm1432, %v1933
          %1950 = vst.msk [vmem:[%s323 + $0x8] sm:$0xff] %vm1432, %v1934
          %1951 = vst.msk [vmem:[%s323 + $0x10] sm:$0xff] %vm1432, %v1935
          %1952 = vst.msk [vmem:[%s323 + $0x18] sm:$0xff] %vm1432, %v1936
          %1953 = vst.msk [vmem:[%s323 + $0x20] sm:$0xff] %vm1432, %v1937
          %1954 = vst.msk [vmem:[%s323 + $0x28] sm:$0xff] %vm1432, %v1938
          %1955 = vst.msk [vmem:[%s323 + $0x30] sm:$0xff] %vm1432, %v1939
          %1956 = vst.msk [vmem:[%s323 + $0x38] sm:$0xff] %vm1432, %v1940
          %1957 = vst.msk [vmem:[%s323 + $0x40] sm:$0xff] %vm1432, %v1941
          %1958 = vst.msk [vmem:[%s323 + $0x48] sm:$0xff] %vm1432, %v1942
          %1959 = vst.msk [vmem:[%s323 + $0x50] sm:$0xff] %vm1432, %v1943
          %1960 = vst.msk [vmem:[%s323 + $0x58] sm:$0xff] %vm1432, %v1944
          %1961 = vst.msk [vmem:[%s323 + $0x60] sm:$0xff] %vm1432, %v1945
          %1962 = vst.msk [vmem:[%s323 + $0x68] sm:$0xff] %vm1432, %v1946
          %1963 = vst.msk [vmem:[%s323 + $0x70] sm:$0xff] %vm1432, %v1947
          %1964 = vst.msk [vmem:[%s323 + $0x78] sm:$0xff] %vm1432, %v1948
        $region82: #{spgat_forward.5} parent=69 // pred_fallthru
          _
        %s1965 = smul.u32 16, %s19
        %p1966 = scmp.lt.s32.totalorder %s1965, 31
        %s1967 = scalar_select %p1966, %s1965, 31
        %s1968 = smul.addr %s1967, 8
        %s1969 = scalar_lea.vmem %s4, %s1968
        // Predicated region
        $region83: #{spgat_forward.5} parent=69 // pred_check
          %p1970 = pneg %p151
        $region84: #{spgat_forward.5} parent=69 // pred_check_branch
          %1972 = sbr.rel (%p1970) target = $region86
        $region85: #{spgat_forward.5} parent=69 // pred_region
          %s1973 = smul.u32 16, %s19
        $region86: #{spgat_forward.5} parent=69 // pred_fallthru
          _
      $region70: #{spgat_forward.5} parent=5 // pred_fallthru
        _
      %p1974 = scmp.le.s32.totalorder 2, %s10
      // Predicated region
      $region87: #{spgat_forward.5} parent=5 // pred_check
        %p1975 = pneg %p1974
      $region88: #{spgat_forward.5} parent=5 // pred_check_branch
        %1977 = sbr.rel (%p1975) target = $region90
      $region89: #{spgat_forward.5} parent=5 // pred_region
        %s1978 = ssub.s32 %s10, 2
        // Predicated region
        $region91: #{spgat_forward.5} parent=89 // pred_check
          %p1979 = pneg %p157
        $region92: #{spgat_forward.5} parent=89 // pred_check_branch
          %1981 = sbr.rel (%p1979) target = $region94
        $region93: #{spgat_forward.5} parent=89 // pred_region
          %s1982 = smul.u32 16, %s21
          %p1983 = scmp.lt.s32.totalorder %s1982, 31
          %s1984 = scalar_select %p1983, %s1982, 31
          %s1985 = smul.addr %s1984, 8
          %s1986 = scalar_lea.vmem %s4, %s1985
        $region94: #{spgat_forward.5} parent=89 // pred_fallthru
          _
      $region90: #{spgat_forward.5} parent=5 // pred_fallthru
        _
    $region6: #{spgat_forward.5} parent=1 // loop_footer
      %s14 = sadd.s32 1, %s10
    $region7: #{spgat_forward.5} parent=1 // loop_footer_branch
      %9 = sbr.rel target = $region3
    $region8: #{spgat_forward.5} parent=1 // loop_exit
      _

</llo_original>
